<compile_context>
chip_gen: v6e
topology: v6e:2x2x1
jax: 0.10.0
libtpu: 0.0.40
codegen_flags: <defaults>
</compile_context>

<pallas_src>
import jax
import jax.numpy as jnp
from jax.experimental import pallas as pl
from jax.experimental.pallas import tpu as pltpu

# ----------------------------- small ViT configuration -----------------------------
IMG, PATCH, IN_CHANS = 16, 8, 3
EMBED, DEPTH, HEADS, MLP_RATIO = 32, 2, 4, 4
GRID_HW = IMG // PATCH
NUM_PATCHES = GRID_HW * GRID_HW
NTOK = NUM_PATCHES + 1            # +1 cls token (= 5)
NTOK_PAD = 8                      # sublane-tile-aligned token slots per batch element
HEAD_DIM = EMBED // HEADS
MLP_HID = EMBED * MLP_RATIO       # 128 -> width of the lane-aligned packed vector table
PATCH_DIM = IN_CHANS * PATCH * PATCH
EPS = 1e-6                        # norm_layer = partial(nn.LayerNorm, eps=1e-6)
SCALE = HEAD_DIM ** -0.5
NEG_INF = -1e30

# row indices inside the packed per-block vector table (DEPTH, 8, MLP_HID)
LN1_W, LN1_B, LN2_W, LN2_B, PROJ_B, FC2_B, FC1_B, QKV_B = range(8)
# row indices inside the packed embedding-vector table (4 + NTOK, EMBED)
PATCH_B, CLS_TOK, NORM_W, NORM_B, POS0 = range(5)


# ----------------------------- in-kernel helpers -----------------------------------
def _layernorm(x, w, b):
    mu = jnp.mean(x, axis=-1, keepdims=True)
    var = jnp.mean(jnp.square(x - mu), axis=-1, keepdims=True)
    return (x - mu) * jax.lax.rsqrt(var + EPS) * w + b


def _dot(a, b):
    return jnp.dot(a, b, preferred_element_type=jnp.float32)


# ----------------------------- the single fused kernel -----------------------------
def _make_vit_kernel(B):
    S = B * NTOK_PAD              # total (padded) token rows in the slab

    def _split_heads(t):          # (S, EMBED) -> (HEADS*B, NTOK_PAD, HEAD_DIM)
        t = t.reshape(S, HEADS, HEAD_DIM).transpose(1, 0, 2)        # (H, S, hd)
        return t.reshape(HEADS * B, NTOK_PAD, HEAD_DIM)             # (H*B, NP, hd)

    def _merge_heads(t):          # (HEADS*B, NTOK_PAD, HEAD_DIM) -> (S, EMBED)
        return t.reshape(HEADS, S, HEAD_DIM).transpose(1, 0, 2).reshape(S, EMBED)

    def vit_kernel(patches_ref, base_ref, norm_wb_ref, patch_w_ref,
                   qkv_w_ref, proj_w_ref, fc1_w_ref, fc2_w_ref, blk_vecs_ref,
                   out_ref):
        # padded-key mask, built once (hoisted out of the depth loop); broadcasts
        # over the (HEADS*B, Q, K) score tensor.
        key_ids = jax.lax.broadcasted_iota(jnp.int32, (1, 1, NTOK_PAD), 2)
        key_mask = jnp.where(key_ids < NTOK, 0.0, NEG_INF).astype(jnp.float32)

        # -- patch embedding: ONE matmul covering every token slot of every batch
        #    element. cls / padded slots are zero input rows (contribute 0); the
        #    parameter-only base slab adds cls_token+pos, patch_bias+pos, or 0.
        x = _dot(patches_ref[...], patch_w_ref[...]) + base_ref[...]   # (S, EMBED)

        # -- DEPTH transformer Blocks: LN1 -> MHSA -> +res -> LN2 -> MLP -> +res --
        for d in range(DEPTH):                                         # static unroll
            vec = blk_vecs_ref[d]                                      # (8, MLP_HID)
            ln1w, ln1b = vec[LN1_W:LN1_W + 1, :EMBED], vec[LN1_B:LN1_B + 1, :EMBED]
            ln2w, ln2b = vec[LN2_W:LN2_W + 1, :EMBED], vec[LN2_B:LN2_B + 1, :EMBED]
            proj_b = vec[PROJ_B:PROJ_B + 1, :EMBED]
            fc2_b = vec[FC2_B:FC2_B + 1, :EMBED]
            fc1_b = vec[FC1_B:FC1_B + 1, :]
            qkv_b = vec[QKV_B:QKV_B + 1, :3 * EMBED]

            # ---- attention: fused QKV matmul + one (HEADS*B)-batched einsum pair ----
            xn = _layernorm(x, ln1w, ln1b)
            qkv = _dot(xn, qkv_w_ref[d]) + qkv_b                       # (S, 3*EMBED)
            q = _split_heads(qkv[:, 0 * EMBED:1 * EMBED] * SCALE)      # scale folded in
            k = _split_heads(qkv[:, 1 * EMBED:2 * EMBED])
            v = _split_heads(qkv[:, 2 * EMBED:3 * EMBED])
            s = jnp.einsum('zqd,zkd->zqk', q, k,
                           preferred_element_type=jnp.float32) + key_mask
            # scores are tiny (0.02-std weights) -> no max-subtraction needed in f32
            p = jnp.exp(s)
            p = p * pl.reciprocal(jnp.sum(p, axis=-1, keepdims=True), approx=True)
            o = jnp.einsum('zqk,zkd->zqd', p, v,
                           preferred_element_type=jnp.float32)         # (H*B, NP, hd)
            x = x + _dot(_merge_heads(o), proj_w_ref[d]) + proj_b      # residual 1

            # ---- MLP: tanh-GELU -> transcendental lands on the EUP slot ----
            xn2 = _layernorm(x, ln2w, ln2b)
            h1 = jax.nn.gelu(_dot(xn2, fc1_w_ref[d]) + fc1_b, approximate=True)
            x = x + _dot(h1, fc2_w_ref[d]) + fc2_b                     # residual 2

        # -- final LayerNorm on the (8-row-aligned) CLS rows only; LN is per-token,
        #    so slice-then-norm equals norm-then-slice.
        cls = x.reshape(B, NTOK_PAD, EMBED)[:, 0, :]                   # (B, EMBED)
        nwb = norm_wb_ref[...]
        out_ref[...] = _layernorm(cls, nwb[0:1], nwb[1:2])

    return vit_kernel


# ----------------------------- wrapper (one pallas_call total) ----------------------
def vit_forward(x, params):
    B = x.shape[0]
    # Patch extraction is pure layout glue (conv with stride == kernel == patch size):
    # (B,C,H,W) -> (B, NUM_PATCHES, C*ph*pw) patch rows.
    p = x.reshape(B, IN_CHANS, GRID_HW, PATCH, GRID_HW, PATCH)
    p = p.transpose(0, 2, 4, 1, 3, 5).reshape(B, NUM_PATCHES, PATCH_DIM)
    # 8-row-aligned token-slot layout: slot 0 = cls (zero patch row),
    # slots 1..NUM_PATCHES = patches, remaining slots = padding (zero rows).
    patches_pad = jnp.pad(p, ((0, 0), (1, NTOK_PAD - NTOK), (0, 0)))
    patches_pad = patches_pad.reshape(B * NTOK_PAD, PATCH_DIM)

    # Parameter-only base slab (cls token, patch bias, positional embedding), tiled
    # over batch in the wrapper so the kernel never concatenates misaligned pieces.
    ev = params['embed_vecs']
    base = jnp.concatenate([
        (ev[CLS_TOK] + ev[POS0])[None, :],                     # cls slot
        ev[PATCH_B][None, :] + ev[POS0 + 1:POS0 + NTOK],       # patch slots
        jnp.zeros((NTOK_PAD - NTOK, EMBED), jnp.float32),      # padded slots
    ], axis=0)                                                 # (NTOK_PAD, EMBED)
    base_slab = jnp.tile(base[None], (B, 1, 1)).reshape(B * NTOK_PAD, EMBED)
    norm_wb = jnp.stack([ev[NORM_W], ev[NORM_B]], axis=0)      # (2, EMBED)

    # ~150 KB of operands -> everything resident in VMEM, single gridless invocation
    # on one TensorCore.  vmem_limit sized from actual buffer bytes (generous headroom).
    return pl.pallas_call(
        _make_vit_kernel(B),
        out_shape=jax.ShapeDtypeStruct((B, EMBED), jnp.float32),
        compiler_params=pltpu.CompilerParams(vmem_limit_bytes=4 * 1024 * 1024),
    )(patches_pad, base_slab, norm_wb, params['patch_w'], params['qkv_w'],
      params['proj_w'], params['fc1_w'], params['fc2_w'], params['blk_vecs'])


# ----------------------------- pure-JAX reference (in-script check) -----------------
def vit_reference(x, params):
    B = x.shape[0]
    p = x.reshape(B, IN_CHANS, GRID_HW, PATCH, GRID_HW, PATCH)
    p = p.transpose(0, 2, 4, 1, 3, 5).reshape(B, NUM_PATCHES, PATCH_DIM)

    ev = params['embed_vecs']
    tok = p @ params['patch_w'] + ev[PATCH_B]
    cls = jnp.broadcast_to(ev[CLS_TOK][None, None, :], (B, 1, EMBED))
    xs = jnp.concatenate([cls, tok], axis=1) + ev[POS0:POS0 + NTOK][None]

    def ln(z, w, b):
        mu = z.mean(-1, keepdims=True)
        var = jnp.square(z - mu).mean(-1, keepdims=True)
        return (z - mu) * jax.lax.rsqrt(var + EPS) * w + b

    for d in range(DEPTH):
        vec = params['blk_vecs'][d]
        xn = ln(xs, vec[LN1_W, :EMBED], vec[LN1_B, :EMBED])
        qkv = (xn @ params['qkv_w'][d] + vec[QKV_B, :3 * EMBED]).reshape(
            B, NTOK, 3, HEADS, HEAD_DIM).transpose(2, 0, 3, 1, 4)
        q, k, v = qkv[0], qkv[1], qkv[2]                           # (B, H, N, hd)
        attn = jax.nn.softmax(jnp.einsum('bhqd,bhkd->bhqk', q, k) * SCALE, axis=-1)
        o = jnp.einsum('bhqk,bhkd->bhqd', attn, v).transpose(0, 2, 1, 3).reshape(B, NTOK, EMBED)
        xs = xs + o @ params['proj_w'][d] + vec[PROJ_B, :EMBED]
        xn2 = ln(xs, vec[LN2_W, :EMBED], vec[LN2_B, :EMBED])
        h1 = jax.nn.gelu(xn2 @ params['fc1_w'][d] + vec[FC1_B], approximate=False)
        xs = xs + h1 @ params['fc2_w'][d] + vec[FC2_B, :EMBED]

    xs = ln(xs, ev[NORM_W], ev[NORM_B])
    return xs[:, 0]


# ----------------------------- parameter init (deterministic, packed) ---------------
def init_params(key):
    std = 0.02
    keys = jax.random.split(key, 3 + DEPTH)

    # PatchEmbed conv weight (D, C, ph, pw) -> matmul weight (C*ph*pw, D)
    conv_w = jax.random.normal(keys[0], (EMBED, IN_CHANS, PATCH, PATCH), jnp.float32) * std
    patch_w = conv_w.reshape(EMBED, PATCH_DIM).T
    cls_token = jax.random.normal(keys[1], (1, EMBED), jnp.float32) * std
    pos_embed = jax.random.normal(keys[2], (NTOK, EMBED), jnp.float32) * std

    embed_vecs = jnp.concatenate([
        jnp.zeros((1, EMBED), jnp.float32),     # PATCH_B  (conv bias)
        cls_token,                              # CLS_TOK
        jnp.ones((1, EMBED), jnp.float32),      # NORM_W   (final LN)
        jnp.zeros((1, EMBED), jnp.float32),     # NORM_B
        pos_embed,                              # POS0 .. POS0+NTOK-1
    ], axis=0)                                  # (4+NTOK, EMBED)

    def pad(v):
        return jnp.pad(v, (0, MLP_HID - v.shape[0]))

    qkv_w, proj_w, fc1_w, fc2_w, blk_vecs = [], [], [], [], []
    for d in range(DEPTH):
        k_qkv, k_proj, k_fc1, k_fc2 = jax.random.split(keys[3 + d], 4)
        # Linear y = x @ W.T -> store W.T directly; qkv column layout (q|k|v, head, hd)
        qkv_w.append(jax.random.normal(k_qkv, (EMBED, 3 * EMBED), jnp.float32) * std)
        proj_w.append(jax.random.normal(k_proj, (EMBED, EMBED), jnp.float32) * std)
        fc1_w.append(jax.random.normal(k_fc1, (EMBED, MLP_HID), jnp.float32) * std)
        fc2_w.append(jax.random.normal(k_fc2, (MLP_HID, EMBED), jnp.float32) * std)

        rows = [None] * 8
        rows[LN1_W] = pad(jnp.ones((EMBED,), jnp.float32))
        rows[LN1_B] = pad(jnp.zeros((EMBED,), jnp.float32))
        rows[LN2_W] = pad(jnp.ones((EMBED,), jnp.float32))
        rows[LN2_B] = pad(jnp.zeros((EMBED,), jnp.float32))
        rows[PROJ_B] = pad(jnp.zeros((EMBED,), jnp.float32))
        rows[FC2_B] = pad(jnp.zeros((EMBED,), jnp.float32))
        rows[FC1_B] = jnp.zeros((MLP_HID,), jnp.float32)
        rows[QKV_B] = pad(jnp.zeros((3 * EMBED,), jnp.float32))    # qkv_bias=False -> zeros
        blk_vecs.append(jnp.stack(rows, axis=0))

    return dict(patch_w=patch_w, embed_vecs=embed_vecs,
                qkv_w=jnp.stack(qkv_w), proj_w=jnp.stack(proj_w),
                fc1_w=jnp.stack(fc1_w), fc2_w=jnp.stack(fc2_w),
                blk_vecs=jnp.stack(blk_vecs))


if __name__ == "__main__":
    key = jax.random.PRNGKey(0)
    pkey, xkey = jax.random.split(key)
    params = init_params(pkey)
    x = jax.random.normal(xkey, (2, IN_CHANS, IMG, IMG), jnp.float32)

    out = jax.jit(vit_forward)(x, params)
    jax.block_until_ready(out)
    assert out.shape == (2, EMBED) and out.dtype == jnp.float32

    ref = vit_reference(x, params)
    err = float(jnp.max(jnp.abs(out - ref)))
    assert err < 1e-2, f"mismatch vs pure-JAX reference: max abs err {err}"
    print("KERNEL_OK")
</pallas_src>

<mosaic_0001>
module attributes {stable_mosaic.version = 11 : i64} {
  func.func @vit_kernel(%arg0: memref<16x192xf32, #tpu.memory_space<vmem>>, %arg1: memref<16x32xf32, #tpu.memory_space<vmem>>, %arg2: memref<2x32xf32, #tpu.memory_space<vmem>>, %arg3: memref<192x32xf32, #tpu.memory_space<vmem>>, %arg4: memref<2x32x96xf32, #tpu.memory_space<vmem>>, %arg5: memref<2x32x32xf32, #tpu.memory_space<vmem>>, %arg6: memref<2x32x128xf32, #tpu.memory_space<vmem>>, %arg7: memref<2x128x32xf32, #tpu.memory_space<vmem>>, %arg8: memref<2x8x128xf32, #tpu.memory_space<vmem>>, %arg9: memref<2x32xf32, #tpu.memory_space<vmem>>) attributes {dimension_semantics = [], scalar_prefetch = 0 : i64, scratch_operands = 0 : i64, tpu.core_type = #tpu.core_type<tc>} {
    %0 = tpu.iota {dimensions = array<i32: 2>} : vector<1x1x8xi32>
    %c5_i32 = arith.constant 5 : i32
    %1 = vector.broadcast %c5_i32 : i32 to vector<1x1x8xi32>
    %2 = arith.cmpi slt, %0, %1 : vector<1x1x8xi32>
    %cst = arith.constant 0.000000e+00 : f32
    %cst_0 = arith.constant -1.000000e+30 : f32
    %3 = vector.broadcast %cst : f32 to vector<1x1x8xf32>
    %4 = vector.broadcast %cst_0 : f32 to vector<1x1x8xf32>
    %5 = arith.select %2, %3, %4 : vector<1x1x8xi1>, vector<1x1x8xf32>
    %c0 = arith.constant 0 : index
    %c0_1 = arith.constant 0 : index
    %6 = vector.load %arg0[%c0, %c0_1] : memref<16x192xf32, #tpu.memory_space<vmem>>, vector<16x192xf32>
    %c0_2 = arith.constant 0 : index
    %c0_3 = arith.constant 0 : index
    %7 = vector.load %arg3[%c0_2, %c0_3] : memref<192x32xf32, #tpu.memory_space<vmem>>, vector<192x32xf32>
    %cst_4 = arith.constant dense<0.000000e+00> : vector<16x32xf32>
    %8 = tpu.matmul %6, %7, %cst_4 {dimension_numbers = #tpu.dot_dimension_numbers<[1], [0], [0], [1], [0, 0, 1, 1], [], []>} : vector<16x192xf32>, vector<192x32xf32>, vector<16x32xf32> -> vector<16x32xf32>
    %c0_5 = arith.constant 0 : index
    %c0_6 = arith.constant 0 : index
    %9 = vector.load %arg1[%c0_5, %c0_6] : memref<16x32xf32, #tpu.memory_space<vmem>>, vector<16x32xf32>
    %10 = arith.addf %8, %9 : vector<16x32xf32>
    %c0_7 = arith.constant 0 : index
    %c0_8 = arith.constant 0 : index
    %c0_9 = arith.constant 0 : index
    %11 = vector.load %arg8[%c0_7, %c0_8, %c0_9] : memref<2x8x128xf32, #tpu.memory_space<vmem>>, vector<1x8x128xf32>
    %12 = vector.shape_cast %11 : vector<1x8x128xf32> to vector<8x128xf32>
    %13 = vector.extract_strided_slice %12 {offsets = [0, 0], sizes = [1, 32], strides = [1, 1]} : vector<8x128xf32> to vector<1x32xf32>
    %14 = vector.extract_strided_slice %12 {offsets = [1, 0], sizes = [1, 32], strides = [1, 1]} : vector<8x128xf32> to vector<1x32xf32>
    %15 = vector.extract_strided_slice %12 {offsets = [2, 0], sizes = [1, 32], strides = [1, 1]} : vector<8x128xf32> to vector<1x32xf32>
    %16 = vector.extract_strided_slice %12 {offsets = [3, 0], sizes = [1, 32], strides = [1, 1]} : vector<8x128xf32> to vector<1x32xf32>
    %17 = vector.extract_strided_slice %12 {offsets = [4, 0], sizes = [1, 32], strides = [1, 1]} : vector<8x128xf32> to vector<1x32xf32>
    %18 = vector.extract_strided_slice %12 {offsets = [5, 0], sizes = [1, 32], strides = [1, 1]} : vector<8x128xf32> to vector<1x32xf32>
    %19 = vector.extract_strided_slice %12 {offsets = [6, 0], sizes = [1, 128], strides = [1, 1]} : vector<8x128xf32> to vector<1x128xf32>
    %20 = vector.extract_strided_slice %12 {offsets = [7, 0], sizes = [1, 96], strides = [1, 1]} : vector<8x128xf32> to vector<1x96xf32>
    %cst_10 = arith.constant dense<0.000000e+00> : vector<16xf32>
    %21 = vector.multi_reduction <add>, %10, %cst_10 [1] : vector<16x32xf32> to vector<16xf32>
    %22 = vector.shape_cast %21 : vector<16xf32> to vector<16x1xf32>
    %cst_11 = arith.constant 3.200000e+01 : f32
    %23 = vector.broadcast %cst_11 : f32 to vector<16x1xf32>
    %24 = arith.divf %22, %23 : vector<16x1xf32>
    %25 = vector.broadcast %24 : vector<16x1xf32> to vector<16x32xf32>
    %26 = arith.subf %10, %25 : vector<16x32xf32>
    %27 = arith.mulf %26, %26 : vector<16x32xf32>
    %cst_12 = arith.constant dense<0.000000e+00> : vector<16xf32>
    %28 = vector.multi_reduction <add>, %27, %cst_12 [1] : vector<16x32xf32> to vector<16xf32>
    %29 = vector.shape_cast %28 : vector<16xf32> to vector<16x1xf32>
    %cst_13 = arith.constant 3.200000e+01 : f32
    %30 = vector.broadcast %cst_13 : f32 to vector<16x1xf32>
    %31 = arith.divf %29, %30 : vector<16x1xf32>
    %32 = vector.broadcast %24 : vector<16x1xf32> to vector<16x32xf32>
    %33 = arith.subf %10, %32 : vector<16x32xf32>
    %cst_14 = arith.constant 9.99999997E-7 : f32
    %34 = vector.broadcast %cst_14 : f32 to vector<16x1xf32>
    %35 = arith.addf %31, %34 : vector<16x1xf32>
    %36 = math.rsqrt %35 : vector<16x1xf32>
    %37 = vector.broadcast %36 : vector<16x1xf32> to vector<16x32xf32>
    %38 = arith.mulf %33, %37 : vector<16x32xf32>
    %39 = vector.broadcast %13 : vector<1x32xf32> to vector<16x32xf32>
    %40 = arith.mulf %38, %39 : vector<16x32xf32>
    %41 = vector.broadcast %14 : vector<1x32xf32> to vector<16x32xf32>
    %42 = arith.addf %40, %41 : vector<16x32xf32>
    %c0_15 = arith.constant 0 : index
    %c0_16 = arith.constant 0 : index
    %c0_17 = arith.constant 0 : index
    %43 = vector.load %arg4[%c0_15, %c0_16, %c0_17] : memref<2x32x96xf32, #tpu.memory_space<vmem>>, vector<1x32x96xf32>
    %44 = vector.shape_cast %43 : vector<1x32x96xf32> to vector<32x96xf32>
    %cst_18 = arith.constant dense<0.000000e+00> : vector<16x96xf32>
    %45 = tpu.matmul %42, %44, %cst_18 {dimension_numbers = #tpu.dot_dimension_numbers<[1], [0], [0], [1], [0, 0, 1, 1], [], []>} : vector<16x32xf32>, vector<32x96xf32>, vector<16x96xf32> -> vector<16x96xf32>
    %46 = vector.broadcast %20 : vector<1x96xf32> to vector<16x96xf32>
    %47 = arith.addf %45, %46 : vector<16x96xf32>
    %48 = vector.extract_strided_slice %47 {offsets = [0, 0], sizes = [16, 32], strides = [1, 1]} : vector<16x96xf32> to vector<16x32xf32>
    %cst_19 = arith.constant 0.353553385 : f32
    %49 = vector.broadcast %cst_19 : f32 to vector<16x32xf32>
    %50 = arith.mulf %48, %49 : vector<16x32xf32>
    %51 = vector.shape_cast %50 : vector<16x32xf32> to vector<16x4x8xf32>
    %52 = tpu.transpose %51, [1, 0, 2] : vector<16x4x8xf32> -> vector<4x16x8xf32>
    %53 = vector.shape_cast %52 : vector<4x16x8xf32> to vector<8x8x8xf32>
    %54 = vector.extract_strided_slice %47 {offsets = [0, 32], sizes = [16, 32], strides = [1, 1]} : vector<16x96xf32> to vector<16x32xf32>
    %55 = vector.shape_cast %54 : vector<16x32xf32> to vector<16x4x8xf32>
    %56 = tpu.transpose %55, [1, 0, 2] : vector<16x4x8xf32> -> vector<4x16x8xf32>
    %57 = vector.shape_cast %56 : vector<4x16x8xf32> to vector<8x8x8xf32>
    %58 = vector.extract_strided_slice %47 {offsets = [0, 64], sizes = [16, 32], strides = [1, 1]} : vector<16x96xf32> to vector<16x32xf32>
    %59 = vector.shape_cast %58 : vector<16x32xf32> to vector<16x4x8xf32>
    %60 = tpu.transpose %59, [1, 0, 2] : vector<16x4x8xf32> -> vector<4x16x8xf32>
    %61 = vector.shape_cast %60 : vector<4x16x8xf32> to vector<8x8x8xf32>
    "tpu.trace_start"() <{level = 10 : i32, message = "zqd,zkd->zqk"}> : () -> ()
    %cst_20 = arith.constant dense<0.000000e+00> : vector<8x8x8xf32>
    %62 = tpu.matmul %53, %57, %cst_20 {dimension_numbers = #tpu.dot_dimension_numbers<[2], [2], [1], [1], [0, 0, 0, 1, 1, 1], [0], [0]>} : vector<8x8x8xf32>, vector<8x8x8xf32>, vector<8x8x8xf32> -> vector<8x8x8xf32>
    "tpu.trace_stop"() : () -> ()
    %63 = vector.broadcast %5 : vector<1x1x8xf32> to vector<8x8x8xf32>
    %64 = arith.addf %62, %63 : vector<8x8x8xf32>
    %65 = math.exp %64 : vector<8x8x8xf32>
    %cst_21 = arith.constant dense<0.000000e+00> : vector<8x8xf32>
    %66 = vector.multi_reduction <add>, %65, %cst_21 [2] : vector<8x8x8xf32> to vector<8x8xf32>
    %67 = vector.shape_cast %66 : vector<8x8xf32> to vector<8x8x1xf32>
    %68 = tpu.reciprocal %67 {approx = true} : vector<8x8x1xf32> -> vector<8x8x1xf32>
    %69 = vector.broadcast %68 : vector<8x8x1xf32> to vector<8x8x8xf32>
    %70 = arith.mulf %65, %69 : vector<8x8x8xf32>
    "tpu.trace_start"() <{level = 10 : i32, message = "zqk,zkd->zqd"}> : () -> ()
    %cst_22 = arith.constant dense<0.000000e+00> : vector<8x8x8xf32>
    %71 = tpu.matmul %70, %61, %cst_22 {dimension_numbers = #tpu.dot_dimension_numbers<[2], [1], [1], [2], [0, 0, 0, 1, 1, 2], [0], [0]>} : vector<8x8x8xf32>, vector<8x8x8xf32>, vector<8x8x8xf32> -> vector<8x8x8xf32>
    "tpu.trace_stop"() : () -> ()
    %72 = vector.shape_cast %71 : vector<8x8x8xf32> to vector<4x16x8xf32>
    %73 = tpu.transpose %72, [1, 0, 2] : vector<4x16x8xf32> -> vector<16x4x8xf32>
    %74 = vector.shape_cast %73 : vector<16x4x8xf32> to vector<16x32xf32>
    %c0_23 = arith.constant 0 : index
    %c0_24 = arith.constant 0 : index
    %c0_25 = arith.constant 0 : index
    %75 = vector.load %arg5[%c0_23, %c0_24, %c0_25] : memref<2x32x32xf32, #tpu.memory_space<vmem>>, vector<1x32x32xf32>
    %76 = vector.shape_cast %75 : vector<1x32x32xf32> to vector<32x32xf32>
    %cst_26 = arith.constant dense<0.000000e+00> : vector<16x32xf32>
    %77 = tpu.matmul %74, %76, %cst_26 {dimension_numbers = #tpu.dot_dimension_numbers<[1], [0], [0], [1], [0, 0, 1, 1], [], []>} : vector<16x32xf32>, vector<32x32xf32>, vector<16x32xf32> -> vector<16x32xf32>
    %78 = arith.addf %10, %77 : vector<16x32xf32>
    %79 = vector.broadcast %17 : vector<1x32xf32> to vector<16x32xf32>
    %80 = arith.addf %78, %79 : vector<16x32xf32>
    %cst_27 = arith.constant dense<0.000000e+00> : vector<16xf32>
    %81 = vector.multi_reduction <add>, %80, %cst_27 [1] : vector<16x32xf32> to vector<16xf32>
    %82 = vector.shape_cast %81 : vector<16xf32> to vector<16x1xf32>
    %cst_28 = arith.constant 3.200000e+01 : f32
    %83 = vector.broadcast %cst_28 : f32 to vector<16x1xf32>
    %84 = arith.divf %82, %83 : vector<16x1xf32>
    %85 = vector.broadcast %84 : vector<16x1xf32> to vector<16x32xf32>
    %86 = arith.subf %80, %85 : vector<16x32xf32>
    %87 = arith.mulf %86, %86 : vector<16x32xf32>
    %cst_29 = arith.constant dense<0.000000e+00> : vector<16xf32>
    %88 = vector.multi_reduction <add>, %87, %cst_29 [1] : vector<16x32xf32> to vector<16xf32>
    %89 = vector.shape_cast %88 : vector<16xf32> to vector<16x1xf32>
    %cst_30 = arith.constant 3.200000e+01 : f32
    %90 = vector.broadcast %cst_30 : f32 to vector<16x1xf32>
    %91 = arith.divf %89, %90 : vector<16x1xf32>
    %92 = vector.broadcast %84 : vector<16x1xf32> to vector<16x32xf32>
    %93 = arith.subf %80, %92 : vector<16x32xf32>
    %cst_31 = arith.constant 9.99999997E-7 : f32
    %94 = vector.broadcast %cst_31 : f32 to vector<16x1xf32>
    %95 = arith.addf %91, %94 : vector<16x1xf32>
    %96 = math.rsqrt %95 : vector<16x1xf32>
    %97 = vector.broadcast %96 : vector<16x1xf32> to vector<16x32xf32>
    %98 = arith.mulf %93, %97 : vector<16x32xf32>
    %99 = vector.broadcast %15 : vector<1x32xf32> to vector<16x32xf32>
    %100 = arith.mulf %98, %99 : vector<16x32xf32>
    %101 = vector.broadcast %16 : vector<1x32xf32> to vector<16x32xf32>
    %102 = arith.addf %100, %101 : vector<16x32xf32>
    %c0_32 = arith.constant 0 : index
    %c0_33 = arith.constant 0 : index
    %c0_34 = arith.constant 0 : index
    %103 = vector.load %arg6[%c0_32, %c0_33, %c0_34] : memref<2x32x128xf32, #tpu.memory_space<vmem>>, vector<1x32x128xf32>
    %104 = vector.shape_cast %103 : vector<1x32x128xf32> to vector<32x128xf32>
    %cst_35 = arith.constant dense<0.000000e+00> : vector<16x128xf32>
    %105 = tpu.matmul %102, %104, %cst_35 {dimension_numbers = #tpu.dot_dimension_numbers<[1], [0], [0], [1], [0, 0, 1, 1], [], []>} : vector<16x32xf32>, vector<32x128xf32>, vector<16x128xf32> -> vector<16x128xf32>
    %106 = vector.broadcast %19 : vector<1x128xf32> to vector<16x128xf32>
    %107 = arith.addf %105, %106 : vector<16x128xf32>
    %108 = arith.mulf %107, %107 : vector<16x128xf32>
    %109 = arith.mulf %107, %108 : vector<16x128xf32>
    %cst_36 = arith.constant 4.471500e-02 : f32
    %110 = vector.broadcast %cst_36 : f32 to vector<16x128xf32>
    %111 = arith.mulf %110, %109 : vector<16x128xf32>
    %112 = arith.addf %107, %111 : vector<16x128xf32>
    %cst_37 = arith.constant 0.797884583 : f32
    %113 = vector.broadcast %cst_37 : f32 to vector<16x128xf32>
    %114 = arith.mulf %113, %112 : vector<16x128xf32>
    %115 = math.tanh %114 : vector<16x128xf32>
    %cst_38 = arith.constant 1.000000e+00 : f32
    %116 = vector.broadcast %cst_38 : f32 to vector<16x128xf32>
    %117 = arith.addf %116, %115 : vector<16x128xf32>
    %cst_39 = arith.constant 5.000000e-01 : f32
    %118 = vector.broadcast %cst_39 : f32 to vector<16x128xf32>
    %119 = arith.mulf %118, %117 : vector<16x128xf32>
    %120 = arith.mulf %107, %119 : vector<16x128xf32>
    %c0_40 = arith.constant 0 : index
    %c0_41 = arith.constant 0 : index
    %c0_42 = arith.constant 0 : index
    %121 = vector.load %arg7[%c0_40, %c0_41, %c0_42] : memref<2x128x32xf32, #tpu.memory_space<vmem>>, vector<1x128x32xf32>
    %122 = vector.shape_cast %121 : vector<1x128x32xf32> to vector<128x32xf32>
    %cst_43 = arith.constant dense<0.000000e+00> : vector<16x32xf32>
    %123 = tpu.matmul %120, %122, %cst_43 {dimension_numbers = #tpu.dot_dimension_numbers<[1], [0], [0], [1], [0, 0, 1, 1], [], []>} : vector<16x128xf32>, vector<128x32xf32>, vector<16x32xf32> -> vector<16x32xf32>
    %124 = arith.addf %80, %123 : vector<16x32xf32>
    %125 = vector.broadcast %18 : vector<1x32xf32> to vector<16x32xf32>
    %126 = arith.addf %124, %125 : vector<16x32xf32>
    %c1 = arith.constant 1 : index
    %c0_44 = arith.constant 0 : index
    %c0_45 = arith.constant 0 : index
    %127 = vector.load %arg8[%c1, %c0_44, %c0_45] : memref<2x8x128xf32, #tpu.memory_space<vmem>>, vector<1x8x128xf32>
    %128 = vector.shape_cast %127 : vector<1x8x128xf32> to vector<8x128xf32>
    %129 = vector.extract_strided_slice %128 {offsets = [0, 0], sizes = [1, 32], strides = [1, 1]} : vector<8x128xf32> to vector<1x32xf32>
    %130 = vector.extract_strided_slice %128 {offsets = [1, 0], sizes = [1, 32], strides = [1, 1]} : vector<8x128xf32> to vector<1x32xf32>
    %131 = vector.extract_strided_slice %128 {offsets = [2, 0], sizes = [1, 32], strides = [1, 1]} : vector<8x128xf32> to vector<1x32xf32>
    %132 = vector.extract_strided_slice %128 {offsets = [3, 0], sizes = [1, 32], strides = [1, 1]} : vector<8x128xf32> to vector<1x32xf32>
    %133 = vector.extract_strided_slice %128 {offsets = [4, 0], sizes = [1, 32], strides = [1, 1]} : vector<8x128xf32> to vector<1x32xf32>
    %134 = vector.extract_strided_slice %128 {offsets = [5, 0], sizes = [1, 32], strides = [1, 1]} : vector<8x128xf32> to vector<1x32xf32>
    %135 = vector.extract_strided_slice %128 {offsets = [6, 0], sizes = [1, 128], strides = [1, 1]} : vector<8x128xf32> to vector<1x128xf32>
    %136 = vector.extract_strided_slice %128 {offsets = [7, 0], sizes = [1, 96], strides = [1, 1]} : vector<8x128xf32> to vector<1x96xf32>
    %cst_46 = arith.constant dense<0.000000e+00> : vector<16xf32>
    %137 = vector.multi_reduction <add>, %126, %cst_46 [1] : vector<16x32xf32> to vector<16xf32>
    %138 = vector.shape_cast %137 : vector<16xf32> to vector<16x1xf32>
    %cst_47 = arith.constant 3.200000e+01 : f32
    %139 = vector.broadcast %cst_47 : f32 to vector<16x1xf32>
    %140 = arith.divf %138, %139 : vector<16x1xf32>
    %141 = vector.broadcast %140 : vector<16x1xf32> to vector<16x32xf32>
    %142 = arith.subf %126, %141 : vector<16x32xf32>
    %143 = arith.mulf %142, %142 : vector<16x32xf32>
    %cst_48 = arith.constant dense<0.000000e+00> : vector<16xf32>
    %144 = vector.multi_reduction <add>, %143, %cst_48 [1] : vector<16x32xf32> to vector<16xf32>
    %145 = vector.shape_cast %144 : vector<16xf32> to vector<16x1xf32>
    %cst_49 = arith.constant 3.200000e+01 : f32
    %146 = vector.broadcast %cst_49 : f32 to vector<16x1xf32>
    %147 = arith.divf %145, %146 : vector<16x1xf32>
    %148 = vector.broadcast %140 : vector<16x1xf32> to vector<16x32xf32>
    %149 = arith.subf %126, %148 : vector<16x32xf32>
    %cst_50 = arith.constant 9.99999997E-7 : f32
    %150 = vector.broadcast %cst_50 : f32 to vector<16x1xf32>
    %151 = arith.addf %147, %150 : vector<16x1xf32>
    %152 = math.rsqrt %151 : vector<16x1xf32>
    %153 = vector.broadcast %152 : vector<16x1xf32> to vector<16x32xf32>
    %154 = arith.mulf %149, %153 : vector<16x32xf32>
    %155 = vector.broadcast %129 : vector<1x32xf32> to vector<16x32xf32>
    %156 = arith.mulf %154, %155 : vector<16x32xf32>
    %157 = vector.broadcast %130 : vector<1x32xf32> to vector<16x32xf32>
    %158 = arith.addf %156, %157 : vector<16x32xf32>
    %c1_51 = arith.constant 1 : index
    %c0_52 = arith.constant 0 : index
    %c0_53 = arith.constant 0 : index
    %159 = vector.load %arg4[%c1_51, %c0_52, %c0_53] : memref<2x32x96xf32, #tpu.memory_space<vmem>>, vector<1x32x96xf32>
    %160 = vector.shape_cast %159 : vector<1x32x96xf32> to vector<32x96xf32>
    %cst_54 = arith.constant dense<0.000000e+00> : vector<16x96xf32>
    %161 = tpu.matmul %158, %160, %cst_54 {dimension_numbers = #tpu.dot_dimension_numbers<[1], [0], [0], [1], [0, 0, 1, 1], [], []>} : vector<16x32xf32>, vector<32x96xf32>, vector<16x96xf32> -> vector<16x96xf32>
    %162 = vector.broadcast %136 : vector<1x96xf32> to vector<16x96xf32>
    %163 = arith.addf %161, %162 : vector<16x96xf32>
    %164 = vector.extract_strided_slice %163 {offsets = [0, 0], sizes = [16, 32], strides = [1, 1]} : vector<16x96xf32> to vector<16x32xf32>
    %cst_55 = arith.constant 0.353553385 : f32
    %165 = vector.broadcast %cst_55 : f32 to vector<16x32xf32>
    %166 = arith.mulf %164, %165 : vector<16x32xf32>
    %167 = vector.shape_cast %166 : vector<16x32xf32> to vector<16x4x8xf32>
    %168 = tpu.transpose %167, [1, 0, 2] : vector<16x4x8xf32> -> vector<4x16x8xf32>
    %169 = vector.shape_cast %168 : vector<4x16x8xf32> to vector<8x8x8xf32>
    %170 = vector.extract_strided_slice %163 {offsets = [0, 32], sizes = [16, 32], strides = [1, 1]} : vector<16x96xf32> to vector<16x32xf32>
    %171 = vector.shape_cast %170 : vector<16x32xf32> to vector<16x4x8xf32>
    %172 = tpu.transpose %171, [1, 0, 2] : vector<16x4x8xf32> -> vector<4x16x8xf32>
    %173 = vector.shape_cast %172 : vector<4x16x8xf32> to vector<8x8x8xf32>
    %174 = vector.extract_strided_slice %163 {offsets = [0, 64], sizes = [16, 32], strides = [1, 1]} : vector<16x96xf32> to vector<16x32xf32>
    %175 = vector.shape_cast %174 : vector<16x32xf32> to vector<16x4x8xf32>
    %176 = tpu.transpose %175, [1, 0, 2] : vector<16x4x8xf32> -> vector<4x16x8xf32>
    %177 = vector.shape_cast %176 : vector<4x16x8xf32> to vector<8x8x8xf32>
    "tpu.trace_start"() <{level = 10 : i32, message = "zqd,zkd->zqk"}> : () -> ()
    %cst_56 = arith.constant dense<0.000000e+00> : vector<8x8x8xf32>
    %178 = tpu.matmul %169, %173, %cst_56 {dimension_numbers = #tpu.dot_dimension_numbers<[2], [2], [1], [1], [0, 0, 0, 1, 1, 1], [0], [0]>} : vector<8x8x8xf32>, vector<8x8x8xf32>, vector<8x8x8xf32> -> vector<8x8x8xf32>
    "tpu.trace_stop"() : () -> ()
    %179 = vector.broadcast %5 : vector<1x1x8xf32> to vector<8x8x8xf32>
    %180 = arith.addf %178, %179 : vector<8x8x8xf32>
    %181 = math.exp %180 : vector<8x8x8xf32>
    %cst_57 = arith.constant dense<0.000000e+00> : vector<8x8xf32>
    %182 = vector.multi_reduction <add>, %181, %cst_57 [2] : vector<8x8x8xf32> to vector<8x8xf32>
    %183 = vector.shape_cast %182 : vector<8x8xf32> to vector<8x8x1xf32>
    %184 = tpu.reciprocal %183 {approx = true} : vector<8x8x1xf32> -> vector<8x8x1xf32>
    %185 = vector.broadcast %184 : vector<8x8x1xf32> to vector<8x8x8xf32>
    %186 = arith.mulf %181, %185 : vector<8x8x8xf32>
    "tpu.trace_start"() <{level = 10 : i32, message = "zqk,zkd->zqd"}> : () -> ()
    %cst_58 = arith.constant dense<0.000000e+00> : vector<8x8x8xf32>
    %187 = tpu.matmul %186, %177, %cst_58 {dimension_numbers = #tpu.dot_dimension_numbers<[2], [1], [1], [2], [0, 0, 0, 1, 1, 2], [0], [0]>} : vector<8x8x8xf32>, vector<8x8x8xf32>, vector<8x8x8xf32> -> vector<8x8x8xf32>
    "tpu.trace_stop"() : () -> ()
    %188 = vector.shape_cast %187 : vector<8x8x8xf32> to vector<4x16x8xf32>
    %189 = tpu.transpose %188, [1, 0, 2] : vector<4x16x8xf32> -> vector<16x4x8xf32>
    %190 = vector.shape_cast %189 : vector<16x4x8xf32> to vector<16x32xf32>
    %c1_59 = arith.constant 1 : index
    %c0_60 = arith.constant 0 : index
    %c0_61 = arith.constant 0 : index
    %191 = vector.load %arg5[%c1_59, %c0_60, %c0_61] : memref<2x32x32xf32, #tpu.memory_space<vmem>>, vector<1x32x32xf32>
    %192 = vector.shape_cast %191 : vector<1x32x32xf32> to vector<32x32xf32>
    %cst_62 = arith.constant dense<0.000000e+00> : vector<16x32xf32>
    %193 = tpu.matmul %190, %192, %cst_62 {dimension_numbers = #tpu.dot_dimension_numbers<[1], [0], [0], [1], [0, 0, 1, 1], [], []>} : vector<16x32xf32>, vector<32x32xf32>, vector<16x32xf32> -> vector<16x32xf32>
    %194 = arith.addf %126, %193 : vector<16x32xf32>
    %195 = vector.broadcast %133 : vector<1x32xf32> to vector<16x32xf32>
    %196 = arith.addf %194, %195 : vector<16x32xf32>
    %cst_63 = arith.constant dense<0.000000e+00> : vector<16xf32>
    %197 = vector.multi_reduction <add>, %196, %cst_63 [1] : vector<16x32xf32> to vector<16xf32>
    %198 = vector.shape_cast %197 : vector<16xf32> to vector<16x1xf32>
    %cst_64 = arith.constant 3.200000e+01 : f32
    %199 = vector.broadcast %cst_64 : f32 to vector<16x1xf32>
    %200 = arith.divf %198, %199 : vector<16x1xf32>
    %201 = vector.broadcast %200 : vector<16x1xf32> to vector<16x32xf32>
    %202 = arith.subf %196, %201 : vector<16x32xf32>
    %203 = arith.mulf %202, %202 : vector<16x32xf32>
    %cst_65 = arith.constant dense<0.000000e+00> : vector<16xf32>
    %204 = vector.multi_reduction <add>, %203, %cst_65 [1] : vector<16x32xf32> to vector<16xf32>
    %205 = vector.shape_cast %204 : vector<16xf32> to vector<16x1xf32>
    %cst_66 = arith.constant 3.200000e+01 : f32
    %206 = vector.broadcast %cst_66 : f32 to vector<16x1xf32>
    %207 = arith.divf %205, %206 : vector<16x1xf32>
    %208 = vector.broadcast %200 : vector<16x1xf32> to vector<16x32xf32>
    %209 = arith.subf %196, %208 : vector<16x32xf32>
    %cst_67 = arith.constant 9.99999997E-7 : f32
    %210 = vector.broadcast %cst_67 : f32 to vector<16x1xf32>
    %211 = arith.addf %207, %210 : vector<16x1xf32>
    %212 = math.rsqrt %211 : vector<16x1xf32>
    %213 = vector.broadcast %212 : vector<16x1xf32> to vector<16x32xf32>
    %214 = arith.mulf %209, %213 : vector<16x32xf32>
    %215 = vector.broadcast %131 : vector<1x32xf32> to vector<16x32xf32>
    %216 = arith.mulf %214, %215 : vector<16x32xf32>
    %217 = vector.broadcast %132 : vector<1x32xf32> to vector<16x32xf32>
    %218 = arith.addf %216, %217 : vector<16x32xf32>
    %c1_68 = arith.constant 1 : index
    %c0_69 = arith.constant 0 : index
    %c0_70 = arith.constant 0 : index
    %219 = vector.load %arg6[%c1_68, %c0_69, %c0_70] : memref<2x32x128xf32, #tpu.memory_space<vmem>>, vector<1x32x128xf32>
    %220 = vector.shape_cast %219 : vector<1x32x128xf32> to vector<32x128xf32>
    %cst_71 = arith.constant dense<0.000000e+00> : vector<16x128xf32>
    %221 = tpu.matmul %218, %220, %cst_71 {dimension_numbers = #tpu.dot_dimension_numbers<[1], [0], [0], [1], [0, 0, 1, 1], [], []>} : vector<16x32xf32>, vector<32x128xf32>, vector<16x128xf32> -> vector<16x128xf32>
    %222 = vector.broadcast %135 : vector<1x128xf32> to vector<16x128xf32>
    %223 = arith.addf %221, %222 : vector<16x128xf32>
    %224 = arith.mulf %223, %223 : vector<16x128xf32>
    %225 = arith.mulf %223, %224 : vector<16x128xf32>
    %cst_72 = arith.constant 4.471500e-02 : f32
    %226 = vector.broadcast %cst_72 : f32 to vector<16x128xf32>
    %227 = arith.mulf %226, %225 : vector<16x128xf32>
    %228 = arith.addf %223, %227 : vector<16x128xf32>
    %cst_73 = arith.constant 0.797884583 : f32
    %229 = vector.broadcast %cst_73 : f32 to vector<16x128xf32>
    %230 = arith.mulf %229, %228 : vector<16x128xf32>
    %231 = math.tanh %230 : vector<16x128xf32>
    %cst_74 = arith.constant 1.000000e+00 : f32
    %232 = vector.broadcast %cst_74 : f32 to vector<16x128xf32>
    %233 = arith.addf %232, %231 : vector<16x128xf32>
    %cst_75 = arith.constant 5.000000e-01 : f32
    %234 = vector.broadcast %cst_75 : f32 to vector<16x128xf32>
    %235 = arith.mulf %234, %233 : vector<16x128xf32>
    %236 = arith.mulf %223, %235 : vector<16x128xf32>
    %c1_76 = arith.constant 1 : index
    %c0_77 = arith.constant 0 : index
    %c0_78 = arith.constant 0 : index
    %237 = vector.load %arg7[%c1_76, %c0_77, %c0_78] : memref<2x128x32xf32, #tpu.memory_space<vmem>>, vector<1x128x32xf32>
    %238 = vector.shape_cast %237 : vector<1x128x32xf32> to vector<128x32xf32>
    %cst_79 = arith.constant dense<0.000000e+00> : vector<16x32xf32>
    %239 = tpu.matmul %236, %238, %cst_79 {dimension_numbers = #tpu.dot_dimension_numbers<[1], [0], [0], [1], [0, 0, 1, 1], [], []>} : vector<16x128xf32>, vector<128x32xf32>, vector<16x32xf32> -> vector<16x32xf32>
    %240 = arith.addf %196, %239 : vector<16x32xf32>
    %241 = vector.broadcast %134 : vector<1x32xf32> to vector<16x32xf32>
    %242 = arith.addf %240, %241 : vector<16x32xf32>
    %243 = vector.shape_cast %242 : vector<16x32xf32> to vector<2x8x32xf32>
    %244 = vector.extract_strided_slice %243 {offsets = [0, 0, 0], sizes = [2, 1, 32], strides = [1, 1, 1]} : vector<2x8x32xf32> to vector<2x1x32xf32>
    %245 = vector.shape_cast %244 : vector<2x1x32xf32> to vector<2x32xf32>
    %c0_80 = arith.constant 0 : index
    %c0_81 = arith.constant 0 : index
    %246 = vector.load %arg2[%c0_80, %c0_81] : memref<2x32xf32, #tpu.memory_space<vmem>>, vector<2x32xf32>
    %247 = vector.extract_strided_slice %246 {offsets = [0, 0], sizes = [1, 32], strides = [1, 1]} : vector<2x32xf32> to vector<1x32xf32>
    %248 = vector.extract_strided_slice %246 {offsets = [1, 0], sizes = [1, 32], strides = [1, 1]} : vector<2x32xf32> to vector<1x32xf32>
    %cst_82 = arith.constant dense<0.000000e+00> : vector<2xf32>
    %249 = vector.multi_reduction <add>, %245, %cst_82 [1] : vector<2x32xf32> to vector<2xf32>
    %250 = vector.shape_cast %249 : vector<2xf32> to vector<2x1xf32>
    %cst_83 = arith.constant 3.200000e+01 : f32
    %251 = vector.broadcast %cst_83 : f32 to vector<2x1xf32>
    %252 = arith.divf %250, %251 : vector<2x1xf32>
    %253 = vector.broadcast %252 : vector<2x1xf32> to vector<2x32xf32>
    %254 = arith.subf %245, %253 : vector<2x32xf32>
    %255 = arith.mulf %254, %254 : vector<2x32xf32>
    %cst_84 = arith.constant dense<0.000000e+00> : vector<2xf32>
    %256 = vector.multi_reduction <add>, %255, %cst_84 [1] : vector<2x32xf32> to vector<2xf32>
    %257 = vector.shape_cast %256 : vector<2xf32> to vector<2x1xf32>
    %cst_85 = arith.constant 3.200000e+01 : f32
    %258 = vector.broadcast %cst_85 : f32 to vector<2x1xf32>
    %259 = arith.divf %257, %258 : vector<2x1xf32>
    %260 = vector.broadcast %252 : vector<2x1xf32> to vector<2x32xf32>
    %261 = arith.subf %245, %260 : vector<2x32xf32>
    %cst_86 = arith.constant 9.99999997E-7 : f32
    %262 = vector.broadcast %cst_86 : f32 to vector<2x1xf32>
    %263 = arith.addf %259, %262 : vector<2x1xf32>
    %264 = math.rsqrt %263 : vector<2x1xf32>
    %265 = vector.broadcast %264 : vector<2x1xf32> to vector<2x32xf32>
    %266 = arith.mulf %261, %265 : vector<2x32xf32>
    %267 = vector.broadcast %247 : vector<1x32xf32> to vector<2x32xf32>
    %268 = arith.mulf %266, %267 : vector<2x32xf32>
    %269 = vector.broadcast %248 : vector<1x32xf32> to vector<2x32xf32>
    %270 = arith.addf %268, %269 : vector<2x32xf32>
    %c0_87 = arith.constant 0 : index
    %c0_88 = arith.constant 0 : index
    %271 = vector.load %arg9[%c0_87, %c0_88] : memref<2x32xf32, #tpu.memory_space<vmem>>, vector<2x32xf32>
    tpu.vector_store %arg9[%c0_87, %c0_88], %270 {strides = array<i32>} : memref<2x32xf32, #tpu.memory_space<vmem>>, vector<2x32xf32>,
    return
  }
}

</mosaic_0001>

<llo_original>
// kernel: vit_forward.1
$region0: #{vit_forward.1}
  #allocation0 [shape = 'u32[]', space=smem, size = 0x4, offset = 0x4, fixed_abs, tag = 'smem constant byte address 0x4 - core index']
  #allocation1 [shape = 'u32[144,128]{1,0:T(1,128)}', space=vmem, size = 0x12000, scoped, tag = 'internal scratch']
  %s0 = inlined_call_operand.vmem [shape: f32[16,192], index: 0, kind: input, shape index: {}]
  %s1 = inlined_call_operand.vmem [shape: f32[16,32], index: 1, kind: input, shape index: {}]
  %s2 = inlined_call_operand.vmem [shape: f32[2,32], index: 2, kind: input, shape index: {}]
  %s3 = inlined_call_operand.vmem [shape: f32[192,32], index: 3, kind: input, shape index: {}]
  %s4 = inlined_call_operand.vmem [shape: f32[2,32,96], index: 4, kind: input, shape index: {}]
  %s5 = inlined_call_operand.vmem [shape: f32[2,32,32], index: 5, kind: input, shape index: {}]
  %s6 = inlined_call_operand.vmem [shape: f32[2,32,128], index: 6, kind: input, shape index: {}]
  %s7 = inlined_call_operand.vmem [shape: f32[2,128,32], index: 7, kind: input, shape index: {}]
  %s8 = inlined_call_operand.vmem [shape: f32[2,8,128], index: 8, kind: input, shape index: {}]
  %s9 = inlined_call_operand.hbm [shape: f32[2,32], index: 9, kind: output, shape index: {}]
  %s10 = sld [smem:[#allocation0]]
  $region46: #{vit_forward.1} parent=0
    _
  %s12 = ssub.s32 1, %s10
  %s13 = scalar_select 0, %s12, %s10
  $region1: #{vit_forward.1} parent=0
    #allocation2 [shape = 'u8[1024]{0}', space=vmem, size = 0x400, scoped, tag = 'output window, operand 0, single buffered']
    #allocation3 [shape = 's32[1]{0}', space=sflag, size = 0x4, scoped, tag = 'scoped memory for vit_forward.1']
    %14 = vsyncpa [#allocation3], 0
    // Predicated region
    $region2: #{vit_forward.1} parent=1 // pred_check
      _
    $region3: #{vit_forward.1} parent=1 // pred_check_branch
      %16 = sbr.rel (0) target = $region5
    $region4: #{vit_forward.1} parent=1 // pred_region
      _
    $region5: #{vit_forward.1} parent=1 // pred_fallthru
      _
    // Predicated region
    $region6: #{vit_forward.1} parent=1 // pred_check
      _
    $region7: #{vit_forward.1} parent=1 // pred_check_branch
      %18 = sbr.rel (0) target = $region9
    $region8: #{vit_forward.1} parent=1 // pred_region
      _
    $region9: #{vit_forward.1} parent=1 // pred_fallthru
      _
    // Predicated region
    $region10: #{vit_forward.1} parent=1 // pred_check
      _
    $region11: #{vit_forward.1} parent=1 // pred_check_branch
      %20 = sbr.rel (0) target = $region13
    $region12: #{vit_forward.1} parent=1 // pred_region
      _
    $region13: #{vit_forward.1} parent=1 // pred_fallthru
      _
    // Predicated region
    $region14: #{vit_forward.1} parent=1 // pred_check
      _
    $region15: #{vit_forward.1} parent=1 // pred_check_branch
      %22 = sbr.rel (0) target = $region17
    $region16: #{vit_forward.1} parent=1 // pred_region
      _
    $region17: #{vit_forward.1} parent=1 // pred_fallthru
      _
    // Predicated region
    $region18: #{vit_forward.1} parent=1 // pred_check
      _
    $region19: #{vit_forward.1} parent=1 // pred_check_branch
      %24 = sbr.rel (0) target = $region21
    $region20: #{vit_forward.1} parent=1 // pred_region
      _
    $region21: #{vit_forward.1} parent=1 // pred_fallthru
      _
    // Predicated region
    $region22: #{vit_forward.1} parent=1 // pred_check
      _
    $region23: #{vit_forward.1} parent=1 // pred_check_branch
      %26 = sbr.rel (0) target = $region25
    $region24: #{vit_forward.1} parent=1 // pred_region
      _
    $region25: #{vit_forward.1} parent=1 // pred_fallthru
      _
    // Predicated region
    $region26: #{vit_forward.1} parent=1 // pred_check
      _
    $region27: #{vit_forward.1} parent=1 // pred_check_branch
      %28 = sbr.rel (0) target = $region29
    $region28: #{vit_forward.1} parent=1 // pred_region
      _
    $region29: #{vit_forward.1} parent=1 // pred_fallthru
      _
    // Predicated region
    $region30: #{vit_forward.1} parent=1 // pred_check
      _
    $region31: #{vit_forward.1} parent=1 // pred_check_branch
      %30 = sbr.rel (0) target = $region33
    $region32: #{vit_forward.1} parent=1 // pred_region
      _
    $region33: #{vit_forward.1} parent=1 // pred_fallthru
      _
    // Predicated region
    $region34: #{vit_forward.1} parent=1 // pred_check
      _
    $region35: #{vit_forward.1} parent=1 // pred_check_branch
      %32 = sbr.rel (0) target = $region37
    $region36: #{vit_forward.1} parent=1 // pred_region
      _
    $region37: #{vit_forward.1} parent=1 // pred_fallthru
      _
    %v33 = vlaneseq
    %v34 = vand.u32 %v33, 127
    %vm35 = vcmp.lt.s32.totalorder %v34, 5
    %v36 = vsel %vm35, 0.0, -1e+30
    %v37 = vld [vmem:[%s0] sm:$0xff]
    %v38 = vld [vmem:[%s0 + $0x8] sm:$0xff]
    %v39 = vld [vmem:[%s0 + $0x10] sm:$0xff]
    %v40 = vld [vmem:[%s0 + $0x18] sm:$0xff]
    %v41 = vld [vmem:[%s3] sm:$0xff]
    %v42 = vld [vmem:[%s3 + $0x8] sm:$0xff]
    %v43 = vld [vmem:[%s3 + $0x10] sm:$0xff]
    %v44 = vld [vmem:[%s3 + $0x18] sm:$0xff]
    %v45 = vld [vmem:[%s3 + $0x20] sm:$0xff]
    %v46 = vld [vmem:[%s3 + $0x28] sm:$0xff]
    %v47 = vld [vmem:[%s3 + $0x30] sm:$0xff]
    %v48 = vld [vmem:[%s3 + $0x38] sm:$0xff]
    %v49 = vld [vmem:[%s3 + $0x40] sm:$0xff]
    %v50 = vld [vmem:[%s3 + $0x48] sm:$0xff]
    %v51 = vld [vmem:[%s3 + $0x50] sm:$0xff]
    %v52 = vld [vmem:[%s3 + $0x58] sm:$0xff]
    %v53 = vld [vmem:[%s3 + $0x60] sm:$0xff]
    %v54 = vld [vmem:[%s3 + $0x68] sm:$0xff]
    %v55 = vld [vmem:[%s3 + $0x70] sm:$0xff]
    %v56 = vld [vmem:[%s3 + $0x78] sm:$0xff]
    %v57 = vld [vmem:[%s3 + $0x80] sm:$0xff]
    %v58 = vld [vmem:[%s3 + $0x88] sm:$0xff]
    %v59 = vld [vmem:[%s3 + $0x90] sm:$0xff]
    %v60 = vld [vmem:[%s3 + $0x98] sm:$0xff]
    %v61 = vld [vmem:[%s3 + $0xa0] sm:$0xff]
    %v62 = vld [vmem:[%s3 + $0xa8] sm:$0xff]
    %v63 = vld [vmem:[%s3 + $0xb0] sm:$0xff]
    %v64 = vld [vmem:[%s3 + $0xb8] sm:$0xff]
    %v65 = vld [vmem:[%s1] sm:$0xff]
    %v66 = vld [vmem:[%s1 + $0x8] sm:$0xff]
    %vm67 = vcmask 523264
    %v69 = vsel %vm67, %v38, 0
    %v72 = vsel %vm67, %v40, 0
    %74 = vmatprep.subr.mxu0 0.0
    %75 = vmatpush1.msra.mxu0 %v56
    %76 = vmatprep.subr.mxu0 0.0
    %77 = vmatpush1.msra.mxu0 %v55
    %78 = vmatprep.subr.mxu0 0.0
    %79 = vmatpush1.msra.mxu0 %v54
    %80 = vmatprep.subr.mxu0 0.0
    %81 = vmatpush1.msra.mxu0 %v53
    %82 = vmatprep.subr.mxu0 0.0
    %83 = vmatpush1.msra.mxu0 %v52
    %84 = vmatprep.subr.mxu0 0.0
    %85 = vmatpush1.msra.mxu0 %v51
    %86 = vmatprep.subr.mxu0 0.0
    %87 = vmatpush1.msra.mxu0 %v50
    %88 = vmatprep.subr.mxu0 0.0
    %89 = vmatpush1.msra.mxu0 %v49
    %90 = vmatprep.subr.mxu0 0.0
    %91 = vmatpush1.msra.mxu0 %v48
    %92 = vmatprep.subr.mxu0 0.0
    %93 = vmatpush1.msra.mxu0 %v47
    %94 = vmatprep.subr.mxu0 0.0
    %95 = vmatpush1.msra.mxu0 %v46
    %96 = vmatprep.subr.mxu0 0.0
    %97 = vmatpush1.msra.mxu0 %v45
    %98 = vmatprep.subr.mxu0 0.0
    %99 = vmatpush1.msra.mxu0 %v44
    %100 = vmatprep.subr.mxu0 0.0
    %101 = vmatpush1.msra.mxu0 %v43
    %102 = vmatprep.subr.mxu0 0.0
    %103 = vmatpush1.msra.mxu0 %v42
    %104 = vmatprep.subr.mxu0 0.0
    %105 = vmatpush1.msra.mxu0 %v41
    %106 = vmatprep.subr.mxu0 0.0
    %107 = vmatpush2.msra.mxu0 0.0
    %108 = vmatprep.subr.mxu0 0.0
    %109 = vmatpush2.msra.mxu0 0.0
    %110 = vmatprep.subr.mxu0 0.0
    %111 = vmatpush2.msra.mxu0 0.0
    %112 = vmatprep.subr.mxu0 0.0
    %113 = vmatpush2.msra.mxu0 0.0
    %114 = vmatprep.subr.mxu0 0.0
    %115 = vmatpush2.msra.mxu0 0.0
    %116 = vmatprep.subr.mxu0 0.0
    %117 = vmatpush2.msra.mxu0 0.0
    %118 = vmatprep.subr.mxu0 0.0
    %119 = vmatpush2.msra.mxu0 0.0
    %120 = vmatprep.subr.mxu0 0.0
    %121 = vmatpush2.msra.mxu0 0.0
    %122 = vmatprep.subr.mxu0 0.0
    %123 = vmatpush2.msra.mxu0 %v64
    %124 = vmatprep.subr.mxu0 0.0
    %125 = vmatpush2.msra.mxu0 %v63
    %126 = vmatprep.subr.mxu0 0.0
    %127 = vmatpush2.msra.mxu0 %v62
    %128 = vmatprep.subr.mxu0 0.0
    %129 = vmatpush2.msra.mxu0 %v61
    %130 = vmatprep.subr.mxu0 0.0
    %131 = vmatpush2.msra.mxu0 %v60
    %132 = vmatprep.subr.mxu0 0.0
    %133 = vmatpush2.msra.mxu0 %v59
    %134 = vmatprep.subr.mxu0 0.0
    %135 = vmatpush2.msra.mxu0 %v58
    %136 = vmatprep.subr.mxu0 0.0
    %137 = vmatpush2.msra.mxu0 %v57
    %138 = vmatprep.mubr.f32.mxu0 %v69
    %139 = vmatmul.mubr.f32.gmra.mxu0 %v37
    %v140 = vpop.f32.mrf.mxu0
    %v141 = vadd.f32 %v65, %v140
    %v142 = vpop.f32.mrf.mxu0
    %143 = vmatprep.mubr.f32.mxu0 %v72
    %144 = vmatmul.mubr.f32.gmra.mxu0 %v39
    %v145 = vpop.f32.mrf.mxu0
    %v146 = vadd.f32 %v66, %v145
    %v147 = vpop.f32.mrf.mxu0
    %148 = vdwg.mxu0
    %v149 = vld [vmem:[%s8] sm:$0xff]
    %vm150 = vcmask 261120
    %v151 = vsel %vm150, %v141, 0.0
    %152 = vadd.xlane.f32.xlu0 %v151
    %v153 = vpop.xlane.xlu0 %152
    %v154 = vsel %vm150, %v146, 0.0
    %155 = vadd.xlane.f32.xlu0 %v154
    %v156 = vpop.xlane.xlu0 %155
    %v157 = vrcp.pop 32.0
    %v158 = vmul.f32 %v153, %v157
    %v159 = vmul.f32 %v156, %v157
    %v160 = vsub.f32 %v141, %v158
    %v161 = vsub.f32 %v146, %v159
    %v162 = vmul.f32 %v160, %v160
    %v163 = vmul.f32 %v161, %v161
    %v164 = vsel %vm150, %v162, 0.0
    %165 = vadd.xlane.f32.xlu0 %v164
    %v166 = vpop.xlane.xlu0 %165
    %v167 = vsel %vm150, %v163, 0.0
    %168 = vadd.xlane.f32.xlu0 %v167
    %v169 = vpop.xlane.xlu0 %168
    %v170 = vmul.f32 %v166, %v157
    %v171 = vmul.f32 %v169, %v157
    %v172 = vadd.f32 %v170, 1e-06
    %v173 = vadd.f32 %v171, 1e-06
    %v174 = vrsqrt.pop %v172
    %v175 = vrsqrt.pop %v173
    %v176 = vmul.f32 %v160, %v174
    %v177 = vmul.f32 %v161, %v175
    %v178 = vlaneseq
    %v179 = vshrl.u32 %v178, 7
    %v180 = vsub.s32 0, %v179
    %v181 = vrot.slane %v149, %v180
    %v182 = vmul.f32 %v176, %v181
    %v183 = vmul.f32 %v177, %v181
    %v184 = vlaneseq
    %v185 = vshrl.u32 %v184, 7
    %v186 = vsub.s32 1, %v185
    %v187 = vrot.slane %v149, %v186
    %v188 = vadd.f32 %v182, %v187
    %v189 = vadd.f32 %v183, %v187
    %v190 = vld [vmem:[%s4] sm:$0xff]
    %v191 = vld [vmem:[%s4 + $0x8] sm:$0xff]
    %v192 = vld [vmem:[%s4 + $0x10] sm:$0xff]
    %v193 = vld [vmem:[%s4 + $0x18] sm:$0xff]
    %v194 = vlaneseq
    %v195 = vshrl.u32 %v194, 7
    %v196 = vsub.s32 7, %v195
    %v197 = vrot.slane %v149, %v196
    %v199 = vsel %vm150, %v188, 0
    %v202 = vsel %vm150, %v189, 0
    %204 = vmatprep.subr.mxu0 0.0
    %205 = vmatpush1.msra.mxu0 0.0
    %206 = vmatprep.subr.mxu0 0.0
    %207 = vmatpush1.msra.mxu0 0.0
    %208 = vmatprep.subr.mxu0 0.0
    %209 = vmatpush1.msra.mxu0 0.0
    %210 = vmatprep.subr.mxu0 0.0
    %211 = vmatpush1.msra.mxu0 0.0
    %212 = vmatprep.subr.mxu0 0.0
    %213 = vmatpush1.msra.mxu0 0.0
    %214 = vmatprep.subr.mxu0 0.0
    %215 = vmatpush1.msra.mxu0 0.0
    %216 = vmatprep.subr.mxu0 0.0
    %217 = vmatpush1.msra.mxu0 0.0
    %218 = vmatprep.subr.mxu0 0.0
    %219 = vmatpush1.msra.mxu0 0.0
    %220 = vmatprep.subr.mxu0 0.0
    %221 = vmatpush1.msra.mxu0 0.0
    %222 = vmatprep.subr.mxu0 0.0
    %223 = vmatpush1.msra.mxu0 0.0
    %224 = vmatprep.subr.mxu0 0.0
    %225 = vmatpush1.msra.mxu0 0.0
    %226 = vmatprep.subr.mxu0 0.0
    %227 = vmatpush1.msra.mxu0 0.0
    %228 = vmatprep.subr.mxu0 0.0
    %229 = vmatpush1.msra.mxu0 %v193
    %230 = vmatprep.subr.mxu0 0.0
    %231 = vmatpush1.msra.mxu0 %v192
    %232 = vmatprep.subr.mxu0 0.0
    %233 = vmatpush1.msra.mxu0 %v191
    %234 = vmatprep.subr.mxu0 0.0
    %235 = vmatpush1.msra.mxu0 %v190
    %236 = vmatprep.subr.mxu0 0.0
    %237 = vmatpush2.msra.mxu0 0.0
    %238 = vmatprep.subr.mxu0 0.0
    %239 = vmatpush2.msra.mxu0 0.0
    %240 = vmatprep.subr.mxu0 0.0
    %241 = vmatpush2.msra.mxu0 0.0
    %242 = vmatprep.subr.mxu0 0.0
    %243 = vmatpush2.msra.mxu0 0.0
    %244 = vmatprep.subr.mxu0 0.0
    %245 = vmatpush2.msra.mxu0 0.0
    %246 = vmatprep.subr.mxu0 0.0
    %247 = vmatpush2.msra.mxu0 0.0
    %248 = vmatprep.subr.mxu0 0.0
    %249 = vmatpush2.msra.mxu0 0.0
    %250 = vmatprep.subr.mxu0 0.0
    %251 = vmatpush2.msra.mxu0 0.0
    %252 = vmatprep.subr.mxu0 0.0
    %253 = vmatpush2.msra.mxu0 0.0
    %254 = vmatprep.subr.mxu0 0.0
    %255 = vmatpush2.msra.mxu0 0.0
    %256 = vmatprep.subr.mxu0 0.0
    %257 = vmatpush2.msra.mxu0 0.0
    %258 = vmatprep.subr.mxu0 0.0
    %259 = vmatpush2.msra.mxu0 0.0
    %260 = vmatprep.subr.mxu0 0.0
    %261 = vmatpush2.msra.mxu0 0.0
    %262 = vmatprep.subr.mxu0 0.0
    %263 = vmatpush2.msra.mxu0 0.0
    %264 = vmatprep.subr.mxu0 0.0
    %265 = vmatpush2.msra.mxu0 0.0
    %266 = vmatprep.subr.mxu0 0.0
    %267 = vmatpush2.msra.mxu0 0.0
    %268 = vmatprep.mubr.f32.mxu0 0.0
    %269 = vmatmul.mubr.f32.gmra.mxu0 %v199
    %v270 = vpop.f32.mrf.mxu0
    %v271 = vadd.f32 %v197, %v270
    %v272 = vpop.f32.mrf.mxu0
    %273 = vmatprep.mubr.f32.mxu0 0.0
    %274 = vmatmul.mubr.f32.gmra.mxu0 %v202
    %v275 = vpop.f32.mrf.mxu0
    %v276 = vadd.f32 %v197, %v275
    %v277 = vpop.f32.mrf.mxu0
    %278 = vdwg.mxu0
    %v279 = vmul.f32 %v271, 0.35355338
    %v280 = vmul.f32 %v276, 0.35355338
    %283 = vrot.lane.b32.xlu0 %v279, 120
    %v284 = vpop.permute.xlu0 %283
    %285 = vrot.lane.b32.xlu0 %v280, 120
    %v286 = vpop.permute.xlu0 %285
    %289 = vrot.lane.b32.xlu0 %v279, 112
    %v290 = vpop.permute.xlu0 %289
    %291 = vrot.lane.b32.xlu0 %v280, 112
    %v292 = vpop.permute.xlu0 %291
    %295 = vrot.lane.b32.xlu0 %v279, 104
    %v296 = vpop.permute.xlu0 %295
    %297 = vrot.lane.b32.xlu0 %v280, 104
    %v298 = vpop.permute.xlu0 %297
    %v301 = vcombine.low %v279, %v290
    %v302 = vcombine.high %v279, %v290
    %v304 = vunpack.c.l.s4 1983009808
    %v305 = vunpack.c.0.s8 %v304
    %v306 = vlaneseq
    %v307 = vshrl.u32 %v306, 7
    %v308 = vsub.s32 %v305, %v307
    %v309 = vrot.slane %v301, %v308
    %v311 = vunpack.c.l.s4 1983009808
    %v312 = vunpack.c.0.s8 %v311
    %v313 = vlaneseq
    %v314 = vshrl.u32 %v313, 7
    %v315 = vsub.s32 %v312, %v314
    %v316 = vrot.slane %v302, %v315
    %v317 = vcombine.low %v284, %v296
    %v318 = vcombine.high %v284, %v296
    %v320 = vunpack.c.l.s4 1983009808
    %v321 = vunpack.c.0.s8 %v320
    %v322 = vlaneseq
    %v323 = vshrl.u32 %v322, 7
    %v324 = vsub.s32 %v321, %v323
    %v325 = vrot.slane %v317, %v324
    %v327 = vunpack.c.l.s4 1983009808
    %v328 = vunpack.c.0.s8 %v327
    %v329 = vlaneseq
    %v330 = vshrl.u32 %v329, 7
    %v331 = vsub.s32 %v328, %v330
    %v332 = vrot.slane %v318, %v331
    %v333 = vcombine.low %v309, %v325
    %v334 = vcombine.high %v309, %v325
    %v336 = vunpack.c.l.s4 1934713408
    %v337 = vunpack.c.0.s8 %v336
    %v338 = vlaneseq
    %v339 = vshrl.u32 %v338, 7
    %v340 = vsub.s32 %v337, %v339
    %v341 = vrot.slane %v333, %v340
    %v343 = vunpack.c.l.s4 1934713408
    %v344 = vunpack.c.0.s8 %v343
    %v345 = vlaneseq
    %v346 = vshrl.u32 %v345, 7
    %v347 = vsub.s32 %v344, %v346
    %v348 = vrot.slane %v334, %v347
    %v349 = vcombine.low %v316, %v332
    %v350 = vcombine.high %v316, %v332
    %v352 = vunpack.c.l.s4 1934713408
    %v353 = vunpack.c.0.s8 %v352
    %v354 = vlaneseq
    %v355 = vshrl.u32 %v354, 7
    %v356 = vsub.s32 %v353, %v355
    %v357 = vrot.slane %v349, %v356
    %v359 = vunpack.c.l.s4 1934713408
    %v360 = vunpack.c.0.s8 %v359
    %v361 = vlaneseq
    %v362 = vshrl.u32 %v361, 7
    %v363 = vsub.s32 %v360, %v362
    %v364 = vrot.slane %v350, %v363
    %v365 = vcombine.high %v341, 0.0
    %v366 = vcombine.high %v348, 0.0
    %v367 = vcombine.high %v357, 0.0
    %v368 = vcombine.high %v364, 0.0
    %v369 = vcombine.low %v280, %v292
    %v370 = vcombine.high %v280, %v292
    %v372 = vunpack.c.l.s4 1983009808
    %v373 = vunpack.c.0.s8 %v372
    %v374 = vlaneseq
    %v375 = vshrl.u32 %v374, 7
    %v376 = vsub.s32 %v373, %v375
    %v377 = vrot.slane %v369, %v376
    %v379 = vunpack.c.l.s4 1983009808
    %v380 = vunpack.c.0.s8 %v379
    %v381 = vlaneseq
    %v382 = vshrl.u32 %v381, 7
    %v383 = vsub.s32 %v380, %v382
    %v384 = vrot.slane %v370, %v383
    %v385 = vcombine.low %v286, %v298
    %v386 = vcombine.high %v286, %v298
    %v388 = vunpack.c.l.s4 1983009808
    %v389 = vunpack.c.0.s8 %v388
    %v390 = vlaneseq
    %v391 = vshrl.u32 %v390, 7
    %v392 = vsub.s32 %v389, %v391
    %v393 = vrot.slane %v385, %v392
    %v395 = vunpack.c.l.s4 1983009808
    %v396 = vunpack.c.0.s8 %v395
    %v397 = vlaneseq
    %v398 = vshrl.u32 %v397, 7
    %v399 = vsub.s32 %v396, %v398
    %v400 = vrot.slane %v386, %v399
    %v401 = vcombine.low %v377, %v393
    %v402 = vcombine.high %v377, %v393
    %v404 = vunpack.c.l.s4 1934713408
    %v405 = vunpack.c.0.s8 %v404
    %v406 = vlaneseq
    %v407 = vshrl.u32 %v406, 7
    %v408 = vsub.s32 %v405, %v407
    %v409 = vrot.slane %v401, %v408
    %v411 = vunpack.c.l.s4 1934713408
    %v412 = vunpack.c.0.s8 %v411
    %v413 = vlaneseq
    %v414 = vshrl.u32 %v413, 7
    %v415 = vsub.s32 %v412, %v414
    %v416 = vrot.slane %v402, %v415
    %v417 = vcombine.low %v384, %v400
    %v418 = vcombine.high %v384, %v400
    %v420 = vunpack.c.l.s4 1934713408
    %v421 = vunpack.c.0.s8 %v420
    %v422 = vlaneseq
    %v423 = vshrl.u32 %v422, 7
    %v424 = vsub.s32 %v421, %v423
    %v425 = vrot.slane %v417, %v424
    %v427 = vunpack.c.l.s4 1934713408
    %v428 = vunpack.c.0.s8 %v427
    %v429 = vlaneseq
    %v430 = vshrl.u32 %v429, 7
    %v431 = vsub.s32 %v428, %v430
    %v432 = vrot.slane %v418, %v431
    %v433 = vcombine.high %v409, 0.0
    %v434 = vcombine.high %v416, 0.0
    %v435 = vcombine.high %v425, 0.0
    %v436 = vcombine.high %v432, 0.0
    %v437 = vcombine.low %v341, %v348
    %v439 = vunpack.c.l.s4 1983009808
    %v440 = vunpack.c.0.s8 %v439
    %v441 = vlaneseq
    %v442 = vshrl.u32 %v441, 7
    %v443 = vsub.s32 %v440, %v442
    %v444 = vrot.slane %v437, %v443
    %v445 = vcombine.low %v365, %v366
    %v447 = vunpack.c.l.s4 1983009808
    %v448 = vunpack.c.0.s8 %v447
    %v449 = vlaneseq
    %v450 = vshrl.u32 %v449, 7
    %v451 = vsub.s32 %v448, %v450
    %v452 = vrot.slane %v445, %v451
    %v453 = vcombine.low %v357, %v364
    %v455 = vunpack.c.l.s4 1983009808
    %v456 = vunpack.c.0.s8 %v455
    %v457 = vlaneseq
    %v458 = vshrl.u32 %v457, 7
    %v459 = vsub.s32 %v456, %v458
    %v460 = vrot.slane %v453, %v459
    %v461 = vcombine.low %v367, %v368
    %v463 = vunpack.c.l.s4 1983009808
    %v464 = vunpack.c.0.s8 %v463
    %v465 = vlaneseq
    %v466 = vshrl.u32 %v465, 7
    %v467 = vsub.s32 %v464, %v466
    %v468 = vrot.slane %v461, %v467
    %v469 = vcombine.low %v444, %v452
    %v470 = vcombine.high %v444, %v452
    %v472 = vunpack.c.l.s4 1934713408
    %v473 = vunpack.c.0.s8 %v472
    %v474 = vlaneseq
    %v475 = vshrl.u32 %v474, 7
    %v476 = vsub.s32 %v473, %v475
    %v477 = vrot.slane %v469, %v476
    %v479 = vunpack.c.l.s4 1934713408
    %v480 = vunpack.c.0.s8 %v479
    %v481 = vlaneseq
    %v482 = vshrl.u32 %v481, 7
    %v483 = vsub.s32 %v480, %v482
    %v484 = vrot.slane %v470, %v483
    %v485 = vcombine.low %v460, %v468
    %v486 = vcombine.high %v460, %v468
    %v488 = vunpack.c.l.s4 1934713408
    %v489 = vunpack.c.0.s8 %v488
    %v490 = vlaneseq
    %v491 = vshrl.u32 %v490, 7
    %v492 = vsub.s32 %v489, %v491
    %v493 = vrot.slane %v485, %v492
    %v495 = vunpack.c.l.s4 1934713408
    %v496 = vunpack.c.0.s8 %v495
    %v497 = vlaneseq
    %v498 = vshrl.u32 %v497, 7
    %v499 = vsub.s32 %v496, %v498
    %v500 = vrot.slane %v486, %v499
    %v501 = vcombine.low %v477, %v493
    %v502 = vcombine.high %v477, %v493
    %v503 = vcombine.low %v484, %v500
    %v504 = vcombine.high %v484, %v500
    %v505 = vcombine.low %v409, %v416
    %v507 = vunpack.c.l.s4 1983009808
    %v508 = vunpack.c.0.s8 %v507
    %v509 = vlaneseq
    %v510 = vshrl.u32 %v509, 7
    %v511 = vsub.s32 %v508, %v510
    %v512 = vrot.slane %v505, %v511
    %v513 = vcombine.low %v433, %v434
    %v515 = vunpack.c.l.s4 1983009808
    %v516 = vunpack.c.0.s8 %v515
    %v517 = vlaneseq
    %v518 = vshrl.u32 %v517, 7
    %v519 = vsub.s32 %v516, %v518
    %v520 = vrot.slane %v513, %v519
    %v521 = vcombine.low %v425, %v432
    %v523 = vunpack.c.l.s4 1983009808
    %v524 = vunpack.c.0.s8 %v523
    %v525 = vlaneseq
    %v526 = vshrl.u32 %v525, 7
    %v527 = vsub.s32 %v524, %v526
    %v528 = vrot.slane %v521, %v527
    %v529 = vcombine.low %v435, %v436
    %v531 = vunpack.c.l.s4 1983009808
    %v532 = vunpack.c.0.s8 %v531
    %v533 = vlaneseq
    %v534 = vshrl.u32 %v533, 7
    %v535 = vsub.s32 %v532, %v534
    %v536 = vrot.slane %v529, %v535
    %v537 = vcombine.low %v512, %v520
    %v538 = vcombine.high %v512, %v520
    %v540 = vunpack.c.l.s4 1934713408
    %v541 = vunpack.c.0.s8 %v540
    %v542 = vlaneseq
    %v543 = vshrl.u32 %v542, 7
    %v544 = vsub.s32 %v541, %v543
    %v545 = vrot.slane %v537, %v544
    %v547 = vunpack.c.l.s4 1934713408
    %v548 = vunpack.c.0.s8 %v547
    %v549 = vlaneseq
    %v550 = vshrl.u32 %v549, 7
    %v551 = vsub.s32 %v548, %v550
    %v552 = vrot.slane %v538, %v551
    %v553 = vcombine.low %v528, %v536
    %v554 = vcombine.high %v528, %v536
    %v556 = vunpack.c.l.s4 1934713408
    %v557 = vunpack.c.0.s8 %v556
    %v558 = vlaneseq
    %v559 = vshrl.u32 %v558, 7
    %v560 = vsub.s32 %v557, %v559
    %v561 = vrot.slane %v553, %v560
    %v563 = vunpack.c.l.s4 1934713408
    %v564 = vunpack.c.0.s8 %v563
    %v565 = vlaneseq
    %v566 = vshrl.u32 %v565, 7
    %v567 = vsub.s32 %v564, %v566
    %v568 = vrot.slane %v554, %v567
    %v569 = vcombine.low %v545, %v561
    %v570 = vcombine.high %v545, %v561
    %v571 = vcombine.low %v552, %v568
    %v572 = vcombine.high %v552, %v568
    %575 = vrot.lane.b32.xlu0 %v271, 120
    %v576 = vpop.permute.xlu0 %575
    %577 = vrot.lane.b32.xlu0 %v276, 120
    %v578 = vpop.permute.xlu0 %577
    %579 = vrot.lane.b32.xlu0 %v271, 112
    %v580 = vpop.permute.xlu0 %579
    %581 = vrot.lane.b32.xlu0 %v276, 112
    %v582 = vpop.permute.xlu0 %581
    %583 = vrot.lane.b32.xlu0 %v271, 104
    %v584 = vpop.permute.xlu0 %583
    %585 = vrot.lane.b32.xlu0 %v276, 104
    %v586 = vpop.permute.xlu0 %585
    %587 = vrot.lane.b32.xlu0 %v271, 96
    %v588 = vpop.permute.xlu0 %587
    %589 = vrot.lane.b32.xlu0 %v276, 96
    %v590 = vpop.permute.xlu0 %589
    %591 = vrot.lane.b32.xlu0 %v576, 96
    %v592 = vpop.permute.xlu0 %591
    %593 = vrot.lane.b32.xlu0 %v578, 96
    %v594 = vpop.permute.xlu0 %593
    %595 = vrot.lane.b32.xlu0 %v580, 96
    %v596 = vpop.permute.xlu0 %595
    %597 = vrot.lane.b32.xlu0 %v582, 96
    %v598 = vpop.permute.xlu0 %597
    %599 = vrot.lane.b32.xlu0 %v584, 96
    %v600 = vpop.permute.xlu0 %599
    %601 = vrot.lane.b32.xlu0 %v586, 96
    %v602 = vpop.permute.xlu0 %601
    %v611 = vcombine.low %v588, %v596
    %v612 = vcombine.high %v588, %v596
    %v614 = vunpack.c.l.s4 1983009808
    %v615 = vunpack.c.0.s8 %v614
    %v616 = vlaneseq
    %v617 = vshrl.u32 %v616, 7
    %v618 = vsub.s32 %v615, %v617
    %v619 = vrot.slane %v611, %v618
    %v621 = vunpack.c.l.s4 1983009808
    %v622 = vunpack.c.0.s8 %v621
    %v623 = vlaneseq
    %v624 = vshrl.u32 %v623, 7
    %v625 = vsub.s32 %v622, %v624
    %v626 = vrot.slane %v612, %v625
    %v627 = vcombine.low %v592, %v600
    %v628 = vcombine.high %v592, %v600
    %v630 = vunpack.c.l.s4 1983009808
    %v631 = vunpack.c.0.s8 %v630
    %v632 = vlaneseq
    %v633 = vshrl.u32 %v632, 7
    %v634 = vsub.s32 %v631, %v633
    %v635 = vrot.slane %v627, %v634
    %v637 = vunpack.c.l.s4 1983009808
    %v638 = vunpack.c.0.s8 %v637
    %v639 = vlaneseq
    %v640 = vshrl.u32 %v639, 7
    %v641 = vsub.s32 %v638, %v640
    %v642 = vrot.slane %v628, %v641
    %v643 = vcombine.low %v619, %v635
    %v644 = vcombine.high %v619, %v635
    %v646 = vunpack.c.l.s4 1934713408
    %v647 = vunpack.c.0.s8 %v646
    %v648 = vlaneseq
    %v649 = vshrl.u32 %v648, 7
    %v650 = vsub.s32 %v647, %v649
    %v651 = vrot.slane %v643, %v650
    %v653 = vunpack.c.l.s4 1934713408
    %v654 = vunpack.c.0.s8 %v653
    %v655 = vlaneseq
    %v656 = vshrl.u32 %v655, 7
    %v657 = vsub.s32 %v654, %v656
    %v658 = vrot.slane %v644, %v657
    %v659 = vcombine.low %v626, %v642
    %v660 = vcombine.high %v626, %v642
    %v662 = vunpack.c.l.s4 1934713408
    %v663 = vunpack.c.0.s8 %v662
    %v664 = vlaneseq
    %v665 = vshrl.u32 %v664, 7
    %v666 = vsub.s32 %v663, %v665
    %v667 = vrot.slane %v659, %v666
    %v669 = vunpack.c.l.s4 1934713408
    %v670 = vunpack.c.0.s8 %v669
    %v671 = vlaneseq
    %v672 = vshrl.u32 %v671, 7
    %v673 = vsub.s32 %v670, %v672
    %v674 = vrot.slane %v660, %v673
    %v675 = vcombine.high %v651, 0.0
    %v676 = vcombine.high %v658, 0.0
    %v677 = vcombine.high %v667, 0.0
    %v678 = vcombine.high %v674, 0.0
    %v679 = vcombine.low %v590, %v598
    %v680 = vcombine.high %v590, %v598
    %v682 = vunpack.c.l.s4 1983009808
    %v683 = vunpack.c.0.s8 %v682
    %v684 = vlaneseq
    %v685 = vshrl.u32 %v684, 7
    %v686 = vsub.s32 %v683, %v685
    %v687 = vrot.slane %v679, %v686
    %v689 = vunpack.c.l.s4 1983009808
    %v690 = vunpack.c.0.s8 %v689
    %v691 = vlaneseq
    %v692 = vshrl.u32 %v691, 7
    %v693 = vsub.s32 %v690, %v692
    %v694 = vrot.slane %v680, %v693
    %v695 = vcombine.low %v594, %v602
    %v696 = vcombine.high %v594, %v602
    %v698 = vunpack.c.l.s4 1983009808
    %v699 = vunpack.c.0.s8 %v698
    %v700 = vlaneseq
    %v701 = vshrl.u32 %v700, 7
    %v702 = vsub.s32 %v699, %v701
    %v703 = vrot.slane %v695, %v702
    %v705 = vunpack.c.l.s4 1983009808
    %v706 = vunpack.c.0.s8 %v705
    %v707 = vlaneseq
    %v708 = vshrl.u32 %v707, 7
    %v709 = vsub.s32 %v706, %v708
    %v710 = vrot.slane %v696, %v709
    %v711 = vcombine.low %v687, %v703
    %v712 = vcombine.high %v687, %v703
    %v714 = vunpack.c.l.s4 1934713408
    %v715 = vunpack.c.0.s8 %v714
    %v716 = vlaneseq
    %v717 = vshrl.u32 %v716, 7
    %v718 = vsub.s32 %v715, %v717
    %v719 = vrot.slane %v711, %v718
    %v721 = vunpack.c.l.s4 1934713408
    %v722 = vunpack.c.0.s8 %v721
    %v723 = vlaneseq
    %v724 = vshrl.u32 %v723, 7
    %v725 = vsub.s32 %v722, %v724
    %v726 = vrot.slane %v712, %v725
    %v727 = vcombine.low %v694, %v710
    %v728 = vcombine.high %v694, %v710
    %v730 = vunpack.c.l.s4 1934713408
    %v731 = vunpack.c.0.s8 %v730
    %v732 = vlaneseq
    %v733 = vshrl.u32 %v732, 7
    %v734 = vsub.s32 %v731, %v733
    %v735 = vrot.slane %v727, %v734
    %v737 = vunpack.c.l.s4 1934713408
    %v738 = vunpack.c.0.s8 %v737
    %v739 = vlaneseq
    %v740 = vshrl.u32 %v739, 7
    %v741 = vsub.s32 %v738, %v740
    %v742 = vrot.slane %v728, %v741
    %v743 = vcombine.high %v719, 0.0
    %v744 = vcombine.high %v726, 0.0
    %v745 = vcombine.high %v735, 0.0
    %v746 = vcombine.high %v742, 0.0
    %v747 = vcombine.low %v651, %v658
    %v749 = vunpack.c.l.s4 1983009808
    %v750 = vunpack.c.0.s8 %v749
    %v751 = vlaneseq
    %v752 = vshrl.u32 %v751, 7
    %v753 = vsub.s32 %v750, %v752
    %v754 = vrot.slane %v747, %v753
    %v755 = vcombine.low %v675, %v676
    %v757 = vunpack.c.l.s4 1983009808
    %v758 = vunpack.c.0.s8 %v757
    %v759 = vlaneseq
    %v760 = vshrl.u32 %v759, 7
    %v761 = vsub.s32 %v758, %v760
    %v762 = vrot.slane %v755, %v761
    %v763 = vcombine.low %v667, %v674
    %v765 = vunpack.c.l.s4 1983009808
    %v766 = vunpack.c.0.s8 %v765
    %v767 = vlaneseq
    %v768 = vshrl.u32 %v767, 7
    %v769 = vsub.s32 %v766, %v768
    %v770 = vrot.slane %v763, %v769
    %v771 = vcombine.low %v677, %v678
    %v773 = vunpack.c.l.s4 1983009808
    %v774 = vunpack.c.0.s8 %v773
    %v775 = vlaneseq
    %v776 = vshrl.u32 %v775, 7
    %v777 = vsub.s32 %v774, %v776
    %v778 = vrot.slane %v771, %v777
    %v779 = vcombine.low %v754, %v762
    %v780 = vcombine.high %v754, %v762
    %v782 = vunpack.c.l.s4 1934713408
    %v783 = vunpack.c.0.s8 %v782
    %v784 = vlaneseq
    %v785 = vshrl.u32 %v784, 7
    %v786 = vsub.s32 %v783, %v785
    %v787 = vrot.slane %v779, %v786
    %v789 = vunpack.c.l.s4 1934713408
    %v790 = vunpack.c.0.s8 %v789
    %v791 = vlaneseq
    %v792 = vshrl.u32 %v791, 7
    %v793 = vsub.s32 %v790, %v792
    %v794 = vrot.slane %v780, %v793
    %v795 = vcombine.low %v770, %v778
    %v796 = vcombine.high %v770, %v778
    %v798 = vunpack.c.l.s4 1934713408
    %v799 = vunpack.c.0.s8 %v798
    %v800 = vlaneseq
    %v801 = vshrl.u32 %v800, 7
    %v802 = vsub.s32 %v799, %v801
    %v803 = vrot.slane %v795, %v802
    %v805 = vunpack.c.l.s4 1934713408
    %v806 = vunpack.c.0.s8 %v805
    %v807 = vlaneseq
    %v808 = vshrl.u32 %v807, 7
    %v809 = vsub.s32 %v806, %v808
    %v810 = vrot.slane %v796, %v809
    %v811 = vcombine.low %v787, %v803
    %v812 = vcombine.high %v787, %v803
    %v813 = vcombine.low %v794, %v810
    %v814 = vcombine.high %v794, %v810
    %v815 = vcombine.low %v719, %v726
    %v817 = vunpack.c.l.s4 1983009808
    %v818 = vunpack.c.0.s8 %v817
    %v819 = vlaneseq
    %v820 = vshrl.u32 %v819, 7
    %v821 = vsub.s32 %v818, %v820
    %v822 = vrot.slane %v815, %v821
    %v823 = vcombine.low %v743, %v744
    %v825 = vunpack.c.l.s4 1983009808
    %v826 = vunpack.c.0.s8 %v825
    %v827 = vlaneseq
    %v828 = vshrl.u32 %v827, 7
    %v829 = vsub.s32 %v826, %v828
    %v830 = vrot.slane %v823, %v829
    %v831 = vcombine.low %v735, %v742
    %v833 = vunpack.c.l.s4 1983009808
    %v834 = vunpack.c.0.s8 %v833
    %v835 = vlaneseq
    %v836 = vshrl.u32 %v835, 7
    %v837 = vsub.s32 %v834, %v836
    %v838 = vrot.slane %v831, %v837
    %v839 = vcombine.low %v745, %v746
    %v841 = vunpack.c.l.s4 1983009808
    %v842 = vunpack.c.0.s8 %v841
    %v843 = vlaneseq
    %v844 = vshrl.u32 %v843, 7
    %v845 = vsub.s32 %v842, %v844
    %v846 = vrot.slane %v839, %v845
    %v847 = vcombine.low %v822, %v830
    %v848 = vcombine.high %v822, %v830
    %v850 = vunpack.c.l.s4 1934713408
    %v851 = vunpack.c.0.s8 %v850
    %v852 = vlaneseq
    %v853 = vshrl.u32 %v852, 7
    %v854 = vsub.s32 %v851, %v853
    %v855 = vrot.slane %v847, %v854
    %v857 = vunpack.c.l.s4 1934713408
    %v858 = vunpack.c.0.s8 %v857
    %v859 = vlaneseq
    %v860 = vshrl.u32 %v859, 7
    %v861 = vsub.s32 %v858, %v860
    %v862 = vrot.slane %v848, %v861
    %v863 = vcombine.low %v838, %v846
    %v864 = vcombine.high %v838, %v846
    %v866 = vunpack.c.l.s4 1934713408
    %v867 = vunpack.c.0.s8 %v866
    %v868 = vlaneseq
    %v869 = vshrl.u32 %v868, 7
    %v870 = vsub.s32 %v867, %v869
    %v871 = vrot.slane %v863, %v870
    %v873 = vunpack.c.l.s4 1934713408
    %v874 = vunpack.c.0.s8 %v873
    %v875 = vlaneseq
    %v876 = vshrl.u32 %v875, 7
    %v877 = vsub.s32 %v874, %v876
    %v878 = vrot.slane %v864, %v877
    %v879 = vcombine.low %v855, %v871
    %v880 = vcombine.high %v855, %v871
    %v881 = vcombine.low %v862, %v878
    %v882 = vcombine.high %v862, %v878
    %883 = vrot.lane.b32.xlu0 %v271, 64
    %v884 = vpop.permute.xlu0 %883
    %885 = vrot.lane.b32.xlu0 %v276, 64
    %v886 = vpop.permute.xlu0 %885
    %887 = vrot.lane.b32.xlu0 %v576, 64
    %v888 = vpop.permute.xlu0 %887
    %889 = vrot.lane.b32.xlu0 %v578, 64
    %v890 = vpop.permute.xlu0 %889
    %891 = vrot.lane.b32.xlu0 %v580, 64
    %v892 = vpop.permute.xlu0 %891
    %893 = vrot.lane.b32.xlu0 %v582, 64
    %v894 = vpop.permute.xlu0 %893
    %895 = vrot.lane.b32.xlu0 %v584, 64
    %v896 = vpop.permute.xlu0 %895
    %897 = vrot.lane.b32.xlu0 %v586, 64
    %v898 = vpop.permute.xlu0 %897
    %v907 = vcombine.low %v884, %v892
    %v908 = vcombine.high %v884, %v892
    %v910 = vunpack.c.l.s4 1983009808
    %v911 = vunpack.c.0.s8 %v910
    %v912 = vlaneseq
    %v913 = vshrl.u32 %v912, 7
    %v914 = vsub.s32 %v911, %v913
    %v915 = vrot.slane %v907, %v914
    %v917 = vunpack.c.l.s4 1983009808
    %v918 = vunpack.c.0.s8 %v917
    %v919 = vlaneseq
    %v920 = vshrl.u32 %v919, 7
    %v921 = vsub.s32 %v918, %v920
    %v922 = vrot.slane %v908, %v921
    %v923 = vcombine.low %v888, %v896
    %v924 = vcombine.high %v888, %v896
    %v926 = vunpack.c.l.s4 1983009808
    %v927 = vunpack.c.0.s8 %v926
    %v928 = vlaneseq
    %v929 = vshrl.u32 %v928, 7
    %v930 = vsub.s32 %v927, %v929
    %v931 = vrot.slane %v923, %v930
    %v933 = vunpack.c.l.s4 1983009808
    %v934 = vunpack.c.0.s8 %v933
    %v935 = vlaneseq
    %v936 = vshrl.u32 %v935, 7
    %v937 = vsub.s32 %v934, %v936
    %v938 = vrot.slane %v924, %v937
    %v939 = vcombine.low %v915, %v931
    %v940 = vcombine.high %v915, %v931
    %v942 = vunpack.c.l.s4 1934713408
    %v943 = vunpack.c.0.s8 %v942
    %v944 = vlaneseq
    %v945 = vshrl.u32 %v944, 7
    %v946 = vsub.s32 %v943, %v945
    %v947 = vrot.slane %v939, %v946
    %v949 = vunpack.c.l.s4 1934713408
    %v950 = vunpack.c.0.s8 %v949
    %v951 = vlaneseq
    %v952 = vshrl.u32 %v951, 7
    %v953 = vsub.s32 %v950, %v952
    %v954 = vrot.slane %v940, %v953
    %v955 = vcombine.low %v922, %v938
    %v956 = vcombine.high %v922, %v938
    %v958 = vunpack.c.l.s4 1934713408
    %v959 = vunpack.c.0.s8 %v958
    %v960 = vlaneseq
    %v961 = vshrl.u32 %v960, 7
    %v962 = vsub.s32 %v959, %v961
    %v963 = vrot.slane %v955, %v962
    %v965 = vunpack.c.l.s4 1934713408
    %v966 = vunpack.c.0.s8 %v965
    %v967 = vlaneseq
    %v968 = vshrl.u32 %v967, 7
    %v969 = vsub.s32 %v966, %v968
    %v970 = vrot.slane %v956, %v969
    %v971 = vcombine.high %v947, 0.0
    %v972 = vcombine.high %v954, 0.0
    %v973 = vcombine.high %v963, 0.0
    %v974 = vcombine.high %v970, 0.0
    %v975 = vcombine.low %v886, %v894
    %v976 = vcombine.high %v886, %v894
    %v978 = vunpack.c.l.s4 1983009808
    %v979 = vunpack.c.0.s8 %v978
    %v980 = vlaneseq
    %v981 = vshrl.u32 %v980, 7
    %v982 = vsub.s32 %v979, %v981
    %v983 = vrot.slane %v975, %v982
    %v985 = vunpack.c.l.s4 1983009808
    %v986 = vunpack.c.0.s8 %v985
    %v987 = vlaneseq
    %v988 = vshrl.u32 %v987, 7
    %v989 = vsub.s32 %v986, %v988
    %v990 = vrot.slane %v976, %v989
    %v991 = vcombine.low %v890, %v898
    %v992 = vcombine.high %v890, %v898
    %v994 = vunpack.c.l.s4 1983009808
    %v995 = vunpack.c.0.s8 %v994
    %v996 = vlaneseq
    %v997 = vshrl.u32 %v996, 7
    %v998 = vsub.s32 %v995, %v997
    %v999 = vrot.slane %v991, %v998
    %v1001 = vunpack.c.l.s4 1983009808
    %v1002 = vunpack.c.0.s8 %v1001
    %v1003 = vlaneseq
    %v1004 = vshrl.u32 %v1003, 7
    %v1005 = vsub.s32 %v1002, %v1004
    %v1006 = vrot.slane %v992, %v1005
    %v1007 = vcombine.low %v983, %v999
    %v1008 = vcombine.high %v983, %v999
    %v1010 = vunpack.c.l.s4 1934713408
    %v1011 = vunpack.c.0.s8 %v1010
    %v1012 = vlaneseq
    %v1013 = vshrl.u32 %v1012, 7
    %v1014 = vsub.s32 %v1011, %v1013
    %v1015 = vrot.slane %v1007, %v1014
    %v1017 = vunpack.c.l.s4 1934713408
    %v1018 = vunpack.c.0.s8 %v1017
    %v1019 = vlaneseq
    %v1020 = vshrl.u32 %v1019, 7
    %v1021 = vsub.s32 %v1018, %v1020
    %v1022 = vrot.slane %v1008, %v1021
    %v1023 = vcombine.low %v990, %v1006
    %v1024 = vcombine.high %v990, %v1006
    %v1026 = vunpack.c.l.s4 1934713408
    %v1027 = vunpack.c.0.s8 %v1026
    %v1028 = vlaneseq
    %v1029 = vshrl.u32 %v1028, 7
    %v1030 = vsub.s32 %v1027, %v1029
    %v1031 = vrot.slane %v1023, %v1030
    %v1033 = vunpack.c.l.s4 1934713408
    %v1034 = vunpack.c.0.s8 %v1033
    %v1035 = vlaneseq
    %v1036 = vshrl.u32 %v1035, 7
    %v1037 = vsub.s32 %v1034, %v1036
    %v1038 = vrot.slane %v1024, %v1037
    %v1039 = vcombine.high %v1015, 0.0
    %v1040 = vcombine.high %v1022, 0.0
    %v1041 = vcombine.high %v1031, 0.0
    %v1042 = vcombine.high %v1038, 0.0
    %v1043 = vcombine.low %v947, %v954
    %v1045 = vunpack.c.l.s4 1983009808
    %v1046 = vunpack.c.0.s8 %v1045
    %v1047 = vlaneseq
    %v1048 = vshrl.u32 %v1047, 7
    %v1049 = vsub.s32 %v1046, %v1048
    %v1050 = vrot.slane %v1043, %v1049
    %v1051 = vcombine.low %v971, %v972
    %v1053 = vunpack.c.l.s4 1983009808
    %v1054 = vunpack.c.0.s8 %v1053
    %v1055 = vlaneseq
    %v1056 = vshrl.u32 %v1055, 7
    %v1057 = vsub.s32 %v1054, %v1056
    %v1058 = vrot.slane %v1051, %v1057
    %v1059 = vcombine.low %v963, %v970
    %v1061 = vunpack.c.l.s4 1983009808
    %v1062 = vunpack.c.0.s8 %v1061
    %v1063 = vlaneseq
    %v1064 = vshrl.u32 %v1063, 7
    %v1065 = vsub.s32 %v1062, %v1064
    %v1066 = vrot.slane %v1059, %v1065
    %v1067 = vcombine.low %v973, %v974
    %v1069 = vunpack.c.l.s4 1983009808
    %v1070 = vunpack.c.0.s8 %v1069
    %v1071 = vlaneseq
    %v1072 = vshrl.u32 %v1071, 7
    %v1073 = vsub.s32 %v1070, %v1072
    %v1074 = vrot.slane %v1067, %v1073
    %v1075 = vcombine.low %v1050, %v1058
    %v1076 = vcombine.high %v1050, %v1058
    %v1078 = vunpack.c.l.s4 1934713408
    %v1079 = vunpack.c.0.s8 %v1078
    %v1080 = vlaneseq
    %v1081 = vshrl.u32 %v1080, 7
    %v1082 = vsub.s32 %v1079, %v1081
    %v1083 = vrot.slane %v1075, %v1082
    %v1085 = vunpack.c.l.s4 1934713408
    %v1086 = vunpack.c.0.s8 %v1085
    %v1087 = vlaneseq
    %v1088 = vshrl.u32 %v1087, 7
    %v1089 = vsub.s32 %v1086, %v1088
    %v1090 = vrot.slane %v1076, %v1089
    %v1091 = vcombine.low %v1066, %v1074
    %v1092 = vcombine.high %v1066, %v1074
    %v1094 = vunpack.c.l.s4 1934713408
    %v1095 = vunpack.c.0.s8 %v1094
    %v1096 = vlaneseq
    %v1097 = vshrl.u32 %v1096, 7
    %v1098 = vsub.s32 %v1095, %v1097
    %v1099 = vrot.slane %v1091, %v1098
    %v1101 = vunpack.c.l.s4 1934713408
    %v1102 = vunpack.c.0.s8 %v1101
    %v1103 = vlaneseq
    %v1104 = vshrl.u32 %v1103, 7
    %v1105 = vsub.s32 %v1102, %v1104
    %v1106 = vrot.slane %v1092, %v1105
    %v1107 = vcombine.low %v1083, %v1099
    %v1108 = vcombine.high %v1083, %v1099
    %v1109 = vcombine.low %v1090, %v1106
    %v1110 = vcombine.high %v1090, %v1106
    %v1111 = vcombine.low %v1015, %v1022
    %v1113 = vunpack.c.l.s4 1983009808
    %v1114 = vunpack.c.0.s8 %v1113
    %v1115 = vlaneseq
    %v1116 = vshrl.u32 %v1115, 7
    %v1117 = vsub.s32 %v1114, %v1116
    %v1118 = vrot.slane %v1111, %v1117
    %v1119 = vcombine.low %v1039, %v1040
    %v1121 = vunpack.c.l.s4 1983009808
    %v1122 = vunpack.c.0.s8 %v1121
    %v1123 = vlaneseq
    %v1124 = vshrl.u32 %v1123, 7
    %v1125 = vsub.s32 %v1122, %v1124
    %v1126 = vrot.slane %v1119, %v1125
    %v1127 = vcombine.low %v1031, %v1038
    %v1129 = vunpack.c.l.s4 1983009808
    %v1130 = vunpack.c.0.s8 %v1129
    %v1131 = vlaneseq
    %v1132 = vshrl.u32 %v1131, 7
    %v1133 = vsub.s32 %v1130, %v1132
    %v1134 = vrot.slane %v1127, %v1133
    %v1135 = vcombine.low %v1041, %v1042
    %v1137 = vunpack.c.l.s4 1983009808
    %v1138 = vunpack.c.0.s8 %v1137
    %v1139 = vlaneseq
    %v1140 = vshrl.u32 %v1139, 7
    %v1141 = vsub.s32 %v1138, %v1140
    %v1142 = vrot.slane %v1135, %v1141
    %v1143 = vcombine.low %v1118, %v1126
    %v1144 = vcombine.high %v1118, %v1126
    %v1146 = vunpack.c.l.s4 1934713408
    %v1147 = vunpack.c.0.s8 %v1146
    %v1148 = vlaneseq
    %v1149 = vshrl.u32 %v1148, 7
    %v1150 = vsub.s32 %v1147, %v1149
    %v1151 = vrot.slane %v1143, %v1150
    %v1153 = vunpack.c.l.s4 1934713408
    %v1154 = vunpack.c.0.s8 %v1153
    %v1155 = vlaneseq
    %v1156 = vshrl.u32 %v1155, 7
    %v1157 = vsub.s32 %v1154, %v1156
    %v1158 = vrot.slane %v1144, %v1157
    %v1159 = vcombine.low %v1134, %v1142
    %v1160 = vcombine.high %v1134, %v1142
    %v1162 = vunpack.c.l.s4 1934713408
    %v1163 = vunpack.c.0.s8 %v1162
    %v1164 = vlaneseq
    %v1165 = vshrl.u32 %v1164, 7
    %v1166 = vsub.s32 %v1163, %v1165
    %v1167 = vrot.slane %v1159, %v1166
    %v1169 = vunpack.c.l.s4 1934713408
    %v1170 = vunpack.c.0.s8 %v1169
    %v1171 = vlaneseq
    %v1172 = vshrl.u32 %v1171, 7
    %v1173 = vsub.s32 %v1170, %v1172
    %v1174 = vrot.slane %v1160, %v1173
    %v1175 = vcombine.low %v1151, %v1167
    %v1176 = vcombine.high %v1151, %v1167
    %v1177 = vcombine.low %v1158, %v1174
    %v1178 = vcombine.high %v1158, %v1174
    %vm1179 = vcmask 64512
    %v1181 = vsel %vm1179, %v501, 0
    %v1184 = vsel %vm1179, %v811, 0
    %1186 = vmatprep.subr.mxu0 0.0
    %1187 = vmatpush1.xpose.msra.mxu0 0.0
    %1188 = vmatprep.subr.mxu0 0.0
    %1189 = vmatpush1.xpose.msra.mxu0 0.0
    %1190 = vmatprep.subr.mxu0 0.0
    %1191 = vmatpush1.xpose.msra.mxu0 0.0
    %1192 = vmatprep.subr.mxu0 0.0
    %1193 = vmatpush1.xpose.msra.mxu0 0.0
    %1194 = vmatprep.subr.mxu0 0.0
    %1195 = vmatpush1.xpose.msra.mxu0 0.0
    %1196 = vmatprep.subr.mxu0 0.0
    %1197 = vmatpush1.xpose.msra.mxu0 0.0
    %1198 = vmatprep.subr.mxu0 0.0
    %1199 = vmatpush1.xpose.msra.mxu0 0.0
    %1200 = vmatprep.subr.mxu0 0.0
    %1201 = vmatpush1.xpose.msra.mxu0 0.0
    %1202 = vmatprep.subr.mxu0 0.0
    %1203 = vmatpush1.xpose.msra.mxu0 0.0
    %1204 = vmatprep.subr.mxu0 0.0
    %1205 = vmatpush1.xpose.msra.mxu0 0.0
    %1206 = vmatprep.subr.mxu0 0.0
    %1207 = vmatpush1.xpose.msra.mxu0 0.0
    %1208 = vmatprep.subr.mxu0 0.0
    %1209 = vmatpush1.xpose.msra.mxu0 0.0
    %1210 = vmatprep.subr.mxu0 0.0
    %1211 = vmatpush1.xpose.msra.mxu0 0.0
    %1212 = vmatprep.subr.mxu0 0.0
    %1213 = vmatpush1.xpose.msra.mxu0 0.0
    %1214 = vmatprep.subr.mxu0 0.0
    %1215 = vmatpush1.xpose.msra.mxu0 0.0
    %1216 = vmatprep.subr.mxu0 0.0
    %1217 = vmatpush1.xpose.msra.mxu0 %v1184
    %1218 = vmatprep.subr.mxu0 0.0
    %1219 = vmatpush2.xpose.msra.mxu0 0.0
    %1220 = vmatprep.subr.mxu0 0.0
    %1221 = vmatpush2.xpose.msra.mxu0 0.0
    %1222 = vmatprep.subr.mxu0 0.0
    %1223 = vmatpush2.xpose.msra.mxu0 0.0
    %1224 = vmatprep.subr.mxu0 0.0
    %1225 = vmatpush2.xpose.msra.mxu0 0.0
    %1226 = vmatprep.subr.mxu0 0.0
    %1227 = vmatpush2.xpose.msra.mxu0 0.0
    %1228 = vmatprep.subr.mxu0 0.0
    %1229 = vmatpush2.xpose.msra.mxu0 0.0
    %1230 = vmatprep.subr.mxu0 0.0
    %1231 = vmatpush2.xpose.msra.mxu0 0.0
    %1232 = vmatprep.subr.mxu0 0.0
    %1233 = vmatpush2.xpose.msra.mxu0 0.0
    %1234 = vmatprep.subr.mxu0 0.0
    %1235 = vmatpush2.xpose.msra.mxu0 0.0
    %1236 = vmatprep.subr.mxu0 0.0
    %1237 = vmatpush2.xpose.msra.mxu0 0.0
    %1238 = vmatprep.subr.mxu0 0.0
    %1239 = vmatpush2.xpose.msra.mxu0 0.0
    %1240 = vmatprep.subr.mxu0 0.0
    %1241 = vmatpush2.xpose.msra.mxu0 0.0
    %1242 = vmatprep.subr.mxu0 0.0
    %1243 = vmatpush2.xpose.msra.mxu0 0.0
    %1244 = vmatprep.subr.mxu0 0.0
    %1245 = vmatpush2.xpose.msra.mxu0 0.0
    %1246 = vmatprep.subr.mxu0 0.0
    %1247 = vmatpush2.xpose.msra.mxu0 0.0
    %1248 = vmatprep.subr.mxu0 0.0
    %1249 = vmatpush2.xpose.msra.mxu0 0.0
    %1250 = vmatprep.mubr.f32.mxu0 0.0
    %1251 = vmatmul.mubr.f32.gmra.mxu0 %v1181
    %v1252 = vpop.f32.mrf.mxu0
    %v1253 = vadd.f32 %v36, %v1252
    %v1254 = vpop.f32.mrf.mxu0
    %1255 = vdwg.mxu0
    %v1257 = vsel %vm1179, %v569, 0
    %v1260 = vsel %vm1179, %v879, 0
    %1262 = vmatprep.subr.mxu0 0.0
    %1263 = vmatpush1.xpose.msra.mxu0 0.0
    %1264 = vmatprep.subr.mxu0 0.0
    %1265 = vmatpush1.xpose.msra.mxu0 0.0
    %1266 = vmatprep.subr.mxu0 0.0
    %1267 = vmatpush1.xpose.msra.mxu0 0.0
    %1268 = vmatprep.subr.mxu0 0.0
    %1269 = vmatpush1.xpose.msra.mxu0 0.0
    %1270 = vmatprep.subr.mxu0 0.0
    %1271 = vmatpush1.xpose.msra.mxu0 0.0
    %1272 = vmatprep.subr.mxu0 0.0
    %1273 = vmatpush1.xpose.msra.mxu0 0.0
    %1274 = vmatprep.subr.mxu0 0.0
    %1275 = vmatpush1.xpose.msra.mxu0 0.0
    %1276 = vmatprep.subr.mxu0 0.0
    %1277 = vmatpush1.xpose.msra.mxu0 0.0
    %1278 = vmatprep.subr.mxu0 0.0
    %1279 = vmatpush1.xpose.msra.mxu0 0.0
    %1280 = vmatprep.subr.mxu0 0.0
    %1281 = vmatpush1.xpose.msra.mxu0 0.0
    %1282 = vmatprep.subr.mxu0 0.0
    %1283 = vmatpush1.xpose.msra.mxu0 0.0
    %1284 = vmatprep.subr.mxu0 0.0
    %1285 = vmatpush1.xpose.msra.mxu0 0.0
    %1286 = vmatprep.subr.mxu0 0.0
    %1287 = vmatpush1.xpose.msra.mxu0 0.0
    %1288 = vmatprep.subr.mxu0 0.0
    %1289 = vmatpush1.xpose.msra.mxu0 0.0
    %1290 = vmatprep.subr.mxu0 0.0
    %1291 = vmatpush1.xpose.msra.mxu0 0.0
    %1292 = vmatprep.subr.mxu0 0.0
    %1293 = vmatpush1.xpose.msra.mxu0 %v1260
    %1294 = vmatprep.subr.mxu0 0.0
    %1295 = vmatpush2.xpose.msra.mxu0 0.0
    %1296 = vmatprep.subr.mxu0 0.0
    %1297 = vmatpush2.xpose.msra.mxu0 0.0
    %1298 = vmatprep.subr.mxu0 0.0
    %1299 = vmatpush2.xpose.msra.mxu0 0.0
    %1300 = vmatprep.subr.mxu0 0.0
    %1301 = vmatpush2.xpose.msra.mxu0 0.0
    %1302 = vmatprep.subr.mxu0 0.0
    %1303 = vmatpush2.xpose.msra.mxu0 0.0
    %1304 = vmatprep.subr.mxu0 0.0
    %1305 = vmatpush2.xpose.msra.mxu0 0.0
    %1306 = vmatprep.subr.mxu0 0.0
    %1307 = vmatpush2.xpose.msra.mxu0 0.0
    %1308 = vmatprep.subr.mxu0 0.0
    %1309 = vmatpush2.xpose.msra.mxu0 0.0
    %1310 = vmatprep.subr.mxu0 0.0
    %1311 = vmatpush2.xpose.msra.mxu0 0.0
    %1312 = vmatprep.subr.mxu0 0.0
    %1313 = vmatpush2.xpose.msra.mxu0 0.0
    %1314 = vmatprep.subr.mxu0 0.0
    %1315 = vmatpush2.xpose.msra.mxu0 0.0
    %1316 = vmatprep.subr.mxu0 0.0
    %1317 = vmatpush2.xpose.msra.mxu0 0.0
    %1318 = vmatprep.subr.mxu0 0.0
    %1319 = vmatpush2.xpose.msra.mxu0 0.0
    %1320 = vmatprep.subr.mxu0 0.0
    %1321 = vmatpush2.xpose.msra.mxu0 0.0
    %1322 = vmatprep.subr.mxu0 0.0
    %1323 = vmatpush2.xpose.msra.mxu0 0.0
    %1324 = vmatprep.subr.mxu0 0.0
    %1325 = vmatpush2.xpose.msra.mxu0 0.0
    %1326 = vmatprep.mubr.f32.mxu0 0.0
    %1327 = vmatmul.mubr.f32.gmra.mxu0 %v1257
    %v1328 = vpop.f32.mrf.mxu0
    %v1329 = vadd.f32 %v36, %v1328
    %v1330 = vpop.f32.mrf.mxu0
    %1331 = vdwg.mxu0
    %v1333 = vsel %vm1179, %v502, 0
    %v1336 = vsel %vm1179, %v812, 0
    %1338 = vmatprep.subr.mxu0 0.0
    %1339 = vmatpush1.xpose.msra.mxu0 0.0
    %1340 = vmatprep.subr.mxu0 0.0
    %1341 = vmatpush1.xpose.msra.mxu0 0.0
    %1342 = vmatprep.subr.mxu0 0.0
    %1343 = vmatpush1.xpose.msra.mxu0 0.0
    %1344 = vmatprep.subr.mxu0 0.0
    %1345 = vmatpush1.xpose.msra.mxu0 0.0
    %1346 = vmatprep.subr.mxu0 0.0
    %1347 = vmatpush1.xpose.msra.mxu0 0.0
    %1348 = vmatprep.subr.mxu0 0.0
    %1349 = vmatpush1.xpose.msra.mxu0 0.0
    %1350 = vmatprep.subr.mxu0 0.0
    %1351 = vmatpush1.xpose.msra.mxu0 0.0
    %1352 = vmatprep.subr.mxu0 0.0
    %1353 = vmatpush1.xpose.msra.mxu0 0.0
    %1354 = vmatprep.subr.mxu0 0.0
    %1355 = vmatpush1.xpose.msra.mxu0 0.0
    %1356 = vmatprep.subr.mxu0 0.0
    %1357 = vmatpush1.xpose.msra.mxu0 0.0
    %1358 = vmatprep.subr.mxu0 0.0
    %1359 = vmatpush1.xpose.msra.mxu0 0.0
    %1360 = vmatprep.subr.mxu0 0.0
    %1361 = vmatpush1.xpose.msra.mxu0 0.0
    %1362 = vmatprep.subr.mxu0 0.0
    %1363 = vmatpush1.xpose.msra.mxu0 0.0
    %1364 = vmatprep.subr.mxu0 0.0
    %1365 = vmatpush1.xpose.msra.mxu0 0.0
    %1366 = vmatprep.subr.mxu0 0.0
    %1367 = vmatpush1.xpose.msra.mxu0 0.0
    %1368 = vmatprep.subr.mxu0 0.0
    %1369 = vmatpush1.xpose.msra.mxu0 %v1336
    %1370 = vmatprep.subr.mxu0 0.0
    %1371 = vmatpush2.xpose.msra.mxu0 0.0
    %1372 = vmatprep.subr.mxu0 0.0
    %1373 = vmatpush2.xpose.msra.mxu0 0.0
    %1374 = vmatprep.subr.mxu0 0.0
    %1375 = vmatpush2.xpose.msra.mxu0 0.0
    %1376 = vmatprep.subr.mxu0 0.0
    %1377 = vmatpush2.xpose.msra.mxu0 0.0
    %1378 = vmatprep.subr.mxu0 0.0
    %1379 = vmatpush2.xpose.msra.mxu0 0.0
    %1380 = vmatprep.subr.mxu0 0.0
    %1381 = vmatpush2.xpose.msra.mxu0 0.0
    %1382 = vmatprep.subr.mxu0 0.0
    %1383 = vmatpush2.xpose.msra.mxu0 0.0
    %1384 = vmatprep.subr.mxu0 0.0
    %1385 = vmatpush2.xpose.msra.mxu0 0.0
    %1386 = vmatprep.subr.mxu0 0.0
    %1387 = vmatpush2.xpose.msra.mxu0 0.0
    %1388 = vmatprep.subr.mxu0 0.0
    %1389 = vmatpush2.xpose.msra.mxu0 0.0
    %1390 = vmatprep.subr.mxu0 0.0
    %1391 = vmatpush2.xpose.msra.mxu0 0.0
    %1392 = vmatprep.subr.mxu0 0.0
    %1393 = vmatpush2.xpose.msra.mxu0 0.0
    %1394 = vmatprep.subr.mxu0 0.0
    %1395 = vmatpush2.xpose.msra.mxu0 0.0
    %1396 = vmatprep.subr.mxu0 0.0
    %1397 = vmatpush2.xpose.msra.mxu0 0.0
    %1398 = vmatprep.subr.mxu0 0.0
    %1399 = vmatpush2.xpose.msra.mxu0 0.0
    %1400 = vmatprep.subr.mxu0 0.0
    %1401 = vmatpush2.xpose.msra.mxu0 0.0
    %1402 = vmatprep.mubr.f32.mxu0 0.0
    %1403 = vmatmul.mubr.f32.gmra.mxu0 %v1333
    %v1404 = vpop.f32.mrf.mxu0
    %v1405 = vadd.f32 %v36, %v1404
    %v1406 = vpop.f32.mrf.mxu0
    %1407 = vdwg.mxu0
    %v1409 = vsel %vm1179, %v570, 0
    %v1412 = vsel %vm1179, %v880, 0
    %1414 = vmatprep.subr.mxu0 0.0
    %1415 = vmatpush1.xpose.msra.mxu0 0.0
    %1416 = vmatprep.subr.mxu0 0.0
    %1417 = vmatpush1.xpose.msra.mxu0 0.0
    %1418 = vmatprep.subr.mxu0 0.0
    %1419 = vmatpush1.xpose.msra.mxu0 0.0
    %1420 = vmatprep.subr.mxu0 0.0
    %1421 = vmatpush1.xpose.msra.mxu0 0.0
    %1422 = vmatprep.subr.mxu0 0.0
    %1423 = vmatpush1.xpose.msra.mxu0 0.0
    %1424 = vmatprep.subr.mxu0 0.0
    %1425 = vmatpush1.xpose.msra.mxu0 0.0
    %1426 = vmatprep.subr.mxu0 0.0
    %1427 = vmatpush1.xpose.msra.mxu0 0.0
    %1428 = vmatprep.subr.mxu0 0.0
    %1429 = vmatpush1.xpose.msra.mxu0 0.0
    %1430 = vmatprep.subr.mxu0 0.0
    %1431 = vmatpush1.xpose.msra.mxu0 0.0
    %1432 = vmatprep.subr.mxu0 0.0
    %1433 = vmatpush1.xpose.msra.mxu0 0.0
    %1434 = vmatprep.subr.mxu0 0.0
    %1435 = vmatpush1.xpose.msra.mxu0 0.0
    %1436 = vmatprep.subr.mxu0 0.0
    %1437 = vmatpush1.xpose.msra.mxu0 0.0
    %1438 = vmatprep.subr.mxu0 0.0
    %1439 = vmatpush1.xpose.msra.mxu0 0.0
    %1440 = vmatprep.subr.mxu0 0.0
    %1441 = vmatpush1.xpose.msra.mxu0 0.0
    %1442 = vmatprep.subr.mxu0 0.0
    %1443 = vmatpush1.xpose.msra.mxu0 0.0
    %1444 = vmatprep.subr.mxu0 0.0
    %1445 = vmatpush1.xpose.msra.mxu0 %v1412
    %1446 = vmatprep.subr.mxu0 0.0
    %1447 = vmatpush2.xpose.msra.mxu0 0.0
    %1448 = vmatprep.subr.mxu0 0.0
    %1449 = vmatpush2.xpose.msra.mxu0 0.0
    %1450 = vmatprep.subr.mxu0 0.0
    %1451 = vmatpush2.xpose.msra.mxu0 0.0
    %1452 = vmatprep.subr.mxu0 0.0
    %1453 = vmatpush2.xpose.msra.mxu0 0.0
    %1454 = vmatprep.subr.mxu0 0.0
    %1455 = vmatpush2.xpose.msra.mxu0 0.0
    %1456 = vmatprep.subr.mxu0 0.0
    %1457 = vmatpush2.xpose.msra.mxu0 0.0
    %1458 = vmatprep.subr.mxu0 0.0
    %1459 = vmatpush2.xpose.msra.mxu0 0.0
    %1460 = vmatprep.subr.mxu0 0.0
    %1461 = vmatpush2.xpose.msra.mxu0 0.0
    %1462 = vmatprep.subr.mxu0 0.0
    %1463 = vmatpush2.xpose.msra.mxu0 0.0
    %1464 = vmatprep.subr.mxu0 0.0
    %1465 = vmatpush2.xpose.msra.mxu0 0.0
    %1466 = vmatprep.subr.mxu0 0.0
    %1467 = vmatpush2.xpose.msra.mxu0 0.0
    %1468 = vmatprep.subr.mxu0 0.0
    %1469 = vmatpush2.xpose.msra.mxu0 0.0
    %1470 = vmatprep.subr.mxu0 0.0
    %1471 = vmatpush2.xpose.msra.mxu0 0.0
    %1472 = vmatprep.subr.mxu0 0.0
    %1473 = vmatpush2.xpose.msra.mxu0 0.0
    %1474 = vmatprep.subr.mxu0 0.0
    %1475 = vmatpush2.xpose.msra.mxu0 0.0
    %1476 = vmatprep.subr.mxu0 0.0
    %1477 = vmatpush2.xpose.msra.mxu0 0.0
    %1478 = vmatprep.mubr.f32.mxu0 0.0
    %1479 = vmatmul.mubr.f32.gmra.mxu0 %v1409
    %v1480 = vpop.f32.mrf.mxu0
    %v1481 = vadd.f32 %v36, %v1480
    %v1482 = vpop.f32.mrf.mxu0
    %1483 = vdwg.mxu0
    %v1485 = vsel %vm1179, %v503, 0
    %v1488 = vsel %vm1179, %v813, 0
    %1490 = vmatprep.subr.mxu0 0.0
    %1491 = vmatpush1.xpose.msra.mxu0 0.0
    %1492 = vmatprep.subr.mxu0 0.0
    %1493 = vmatpush1.xpose.msra.mxu0 0.0
    %1494 = vmatprep.subr.mxu0 0.0
    %1495 = vmatpush1.xpose.msra.mxu0 0.0
    %1496 = vmatprep.subr.mxu0 0.0
    %1497 = vmatpush1.xpose.msra.mxu0 0.0
    %1498 = vmatprep.subr.mxu0 0.0
    %1499 = vmatpush1.xpose.msra.mxu0 0.0
    %1500 = vmatprep.subr.mxu0 0.0
    %1501 = vmatpush1.xpose.msra.mxu0 0.0
    %1502 = vmatprep.subr.mxu0 0.0
    %1503 = vmatpush1.xpose.msra.mxu0 0.0
    %1504 = vmatprep.subr.mxu0 0.0
    %1505 = vmatpush1.xpose.msra.mxu0 0.0
    %1506 = vmatprep.subr.mxu0 0.0
    %1507 = vmatpush1.xpose.msra.mxu0 0.0
    %1508 = vmatprep.subr.mxu0 0.0
    %1509 = vmatpush1.xpose.msra.mxu0 0.0
    %1510 = vmatprep.subr.mxu0 0.0
    %1511 = vmatpush1.xpose.msra.mxu0 0.0
    %1512 = vmatprep.subr.mxu0 0.0
    %1513 = vmatpush1.xpose.msra.mxu0 0.0
    %1514 = vmatprep.subr.mxu0 0.0
    %1515 = vmatpush1.xpose.msra.mxu0 0.0
    %1516 = vmatprep.subr.mxu0 0.0
    %1517 = vmatpush1.xpose.msra.mxu0 0.0
    %1518 = vmatprep.subr.mxu0 0.0
    %1519 = vmatpush1.xpose.msra.mxu0 0.0
    %1520 = vmatprep.subr.mxu0 0.0
    %1521 = vmatpush1.xpose.msra.mxu0 %v1488
    %1522 = vmatprep.subr.mxu0 0.0
    %1523 = vmatpush2.xpose.msra.mxu0 0.0
    %1524 = vmatprep.subr.mxu0 0.0
    %1525 = vmatpush2.xpose.msra.mxu0 0.0
    %1526 = vmatprep.subr.mxu0 0.0
    %1527 = vmatpush2.xpose.msra.mxu0 0.0
    %1528 = vmatprep.subr.mxu0 0.0
    %1529 = vmatpush2.xpose.msra.mxu0 0.0
    %1530 = vmatprep.subr.mxu0 0.0
    %1531 = vmatpush2.xpose.msra.mxu0 0.0
    %1532 = vmatprep.subr.mxu0 0.0
    %1533 = vmatpush2.xpose.msra.mxu0 0.0
    %1534 = vmatprep.subr.mxu0 0.0
    %1535 = vmatpush2.xpose.msra.mxu0 0.0
    %1536 = vmatprep.subr.mxu0 0.0
    %1537 = vmatpush2.xpose.msra.mxu0 0.0
    %1538 = vmatprep.subr.mxu0 0.0
    %1539 = vmatpush2.xpose.msra.mxu0 0.0
    %1540 = vmatprep.subr.mxu0 0.0
    %1541 = vmatpush2.xpose.msra.mxu0 0.0
    %1542 = vmatprep.subr.mxu0 0.0
    %1543 = vmatpush2.xpose.msra.mxu0 0.0
    %1544 = vmatprep.subr.mxu0 0.0
    %1545 = vmatpush2.xpose.msra.mxu0 0.0
    %1546 = vmatprep.subr.mxu0 0.0
    %1547 = vmatpush2.xpose.msra.mxu0 0.0
    %1548 = vmatprep.subr.mxu0 0.0
    %1549 = vmatpush2.xpose.msra.mxu0 0.0
    %1550 = vmatprep.subr.mxu0 0.0
    %1551 = vmatpush2.xpose.msra.mxu0 0.0
    %1552 = vmatprep.subr.mxu0 0.0
    %1553 = vmatpush2.xpose.msra.mxu0 0.0
    %1554 = vmatprep.mubr.f32.mxu0 0.0
    %1555 = vmatmul.mubr.f32.gmra.mxu0 %v1485
    %v1556 = vpop.f32.mrf.mxu0
    %v1557 = vadd.f32 %v36, %v1556
    %v1558 = vpop.f32.mrf.mxu0
    %1559 = vdwg.mxu0
    %v1561 = vsel %vm1179, %v571, 0
    %v1564 = vsel %vm1179, %v881, 0
    %1566 = vmatprep.subr.mxu0 0.0
    %1567 = vmatpush1.xpose.msra.mxu0 0.0
    %1568 = vmatprep.subr.mxu0 0.0
    %1569 = vmatpush1.xpose.msra.mxu0 0.0
    %1570 = vmatprep.subr.mxu0 0.0
    %1571 = vmatpush1.xpose.msra.mxu0 0.0
    %1572 = vmatprep.subr.mxu0 0.0
    %1573 = vmatpush1.xpose.msra.mxu0 0.0
    %1574 = vmatprep.subr.mxu0 0.0
    %1575 = vmatpush1.xpose.msra.mxu0 0.0
    %1576 = vmatprep.subr.mxu0 0.0
    %1577 = vmatpush1.xpose.msra.mxu0 0.0
    %1578 = vmatprep.subr.mxu0 0.0
    %1579 = vmatpush1.xpose.msra.mxu0 0.0
    %1580 = vmatprep.subr.mxu0 0.0
    %1581 = vmatpush1.xpose.msra.mxu0 0.0
    %1582 = vmatprep.subr.mxu0 0.0
    %1583 = vmatpush1.xpose.msra.mxu0 0.0
    %1584 = vmatprep.subr.mxu0 0.0
    %1585 = vmatpush1.xpose.msra.mxu0 0.0
    %1586 = vmatprep.subr.mxu0 0.0
    %1587 = vmatpush1.xpose.msra.mxu0 0.0
    %1588 = vmatprep.subr.mxu0 0.0
    %1589 = vmatpush1.xpose.msra.mxu0 0.0
    %1590 = vmatprep.subr.mxu0 0.0
    %1591 = vmatpush1.xpose.msra.mxu0 0.0
    %1592 = vmatprep.subr.mxu0 0.0
    %1593 = vmatpush1.xpose.msra.mxu0 0.0
    %1594 = vmatprep.subr.mxu0 0.0
    %1595 = vmatpush1.xpose.msra.mxu0 0.0
    %1596 = vmatprep.subr.mxu0 0.0
    %1597 = vmatpush1.xpose.msra.mxu0 %v1564
    %1598 = vmatprep.subr.mxu0 0.0
    %1599 = vmatpush2.xpose.msra.mxu0 0.0
    %1600 = vmatprep.subr.mxu0 0.0
    %1601 = vmatpush2.xpose.msra.mxu0 0.0
    %1602 = vmatprep.subr.mxu0 0.0
    %1603 = vmatpush2.xpose.msra.mxu0 0.0
    %1604 = vmatprep.subr.mxu0 0.0
    %1605 = vmatpush2.xpose.msra.mxu0 0.0
    %1606 = vmatprep.subr.mxu0 0.0
    %1607 = vmatpush2.xpose.msra.mxu0 0.0
    %1608 = vmatprep.subr.mxu0 0.0
    %1609 = vmatpush2.xpose.msra.mxu0 0.0
    %1610 = vmatprep.subr.mxu0 0.0
    %1611 = vmatpush2.xpose.msra.mxu0 0.0
    %1612 = vmatprep.subr.mxu0 0.0
    %1613 = vmatpush2.xpose.msra.mxu0 0.0
    %1614 = vmatprep.subr.mxu0 0.0
    %1615 = vmatpush2.xpose.msra.mxu0 0.0
    %1616 = vmatprep.subr.mxu0 0.0
    %1617 = vmatpush2.xpose.msra.mxu0 0.0
    %1618 = vmatprep.subr.mxu0 0.0
    %1619 = vmatpush2.xpose.msra.mxu0 0.0
    %1620 = vmatprep.subr.mxu0 0.0
    %1621 = vmatpush2.xpose.msra.mxu0 0.0
    %1622 = vmatprep.subr.mxu0 0.0
    %1623 = vmatpush2.xpose.msra.mxu0 0.0
    %1624 = vmatprep.subr.mxu0 0.0
    %1625 = vmatpush2.xpose.msra.mxu0 0.0
    %1626 = vmatprep.subr.mxu0 0.0
    %1627 = vmatpush2.xpose.msra.mxu0 0.0
    %1628 = vmatprep.subr.mxu0 0.0
    %1629 = vmatpush2.xpose.msra.mxu0 0.0
    %1630 = vmatprep.mubr.f32.mxu0 0.0
    %1631 = vmatmul.mubr.f32.gmra.mxu0 %v1561
    %v1632 = vpop.f32.mrf.mxu0
    %v1633 = vadd.f32 %v36, %v1632
    %v1634 = vpop.f32.mrf.mxu0
    %1635 = vdwg.mxu0
    %v1637 = vsel %vm1179, %v504, 0
    %v1640 = vsel %vm1179, %v814, 0
    %1642 = vmatprep.subr.mxu0 0.0
    %1643 = vmatpush1.xpose.msra.mxu0 0.0
    %1644 = vmatprep.subr.mxu0 0.0
    %1645 = vmatpush1.xpose.msra.mxu0 0.0
    %1646 = vmatprep.subr.mxu0 0.0
    %1647 = vmatpush1.xpose.msra.mxu0 0.0
    %1648 = vmatprep.subr.mxu0 0.0
    %1649 = vmatpush1.xpose.msra.mxu0 0.0
    %1650 = vmatprep.subr.mxu0 0.0
    %1651 = vmatpush1.xpose.msra.mxu0 0.0
    %1652 = vmatprep.subr.mxu0 0.0
    %1653 = vmatpush1.xpose.msra.mxu0 0.0
    %1654 = vmatprep.subr.mxu0 0.0
    %1655 = vmatpush1.xpose.msra.mxu0 0.0
    %1656 = vmatprep.subr.mxu0 0.0
    %1657 = vmatpush1.xpose.msra.mxu0 0.0
    %1658 = vmatprep.subr.mxu0 0.0
    %1659 = vmatpush1.xpose.msra.mxu0 0.0
    %1660 = vmatprep.subr.mxu0 0.0
    %1661 = vmatpush1.xpose.msra.mxu0 0.0
    %1662 = vmatprep.subr.mxu0 0.0
    %1663 = vmatpush1.xpose.msra.mxu0 0.0
    %1664 = vmatprep.subr.mxu0 0.0
    %1665 = vmatpush1.xpose.msra.mxu0 0.0
    %1666 = vmatprep.subr.mxu0 0.0
    %1667 = vmatpush1.xpose.msra.mxu0 0.0
    %1668 = vmatprep.subr.mxu0 0.0
    %1669 = vmatpush1.xpose.msra.mxu0 0.0
    %1670 = vmatprep.subr.mxu0 0.0
    %1671 = vmatpush1.xpose.msra.mxu0 0.0
    %1672 = vmatprep.subr.mxu0 0.0
    %1673 = vmatpush1.xpose.msra.mxu0 %v1640
    %1674 = vmatprep.subr.mxu0 0.0
    %1675 = vmatpush2.xpose.msra.mxu0 0.0
    %1676 = vmatprep.subr.mxu0 0.0
    %1677 = vmatpush2.xpose.msra.mxu0 0.0
    %1678 = vmatprep.subr.mxu0 0.0
    %1679 = vmatpush2.xpose.msra.mxu0 0.0
    %1680 = vmatprep.subr.mxu0 0.0
    %1681 = vmatpush2.xpose.msra.mxu0 0.0
    %1682 = vmatprep.subr.mxu0 0.0
    %1683 = vmatpush2.xpose.msra.mxu0 0.0
    %1684 = vmatprep.subr.mxu0 0.0
    %1685 = vmatpush2.xpose.msra.mxu0 0.0
    %1686 = vmatprep.subr.mxu0 0.0
    %1687 = vmatpush2.xpose.msra.mxu0 0.0
    %1688 = vmatprep.subr.mxu0 0.0
    %1689 = vmatpush2.xpose.msra.mxu0 0.0
    %1690 = vmatprep.subr.mxu0 0.0
    %1691 = vmatpush2.xpose.msra.mxu0 0.0
    %1692 = vmatprep.subr.mxu0 0.0
    %1693 = vmatpush2.xpose.msra.mxu0 0.0
    %1694 = vmatprep.subr.mxu0 0.0
    %1695 = vmatpush2.xpose.msra.mxu0 0.0
    %1696 = vmatprep.subr.mxu0 0.0
    %1697 = vmatpush2.xpose.msra.mxu0 0.0
    %1698 = vmatprep.subr.mxu0 0.0
    %1699 = vmatpush2.xpose.msra.mxu0 0.0
    %1700 = vmatprep.subr.mxu0 0.0
    %1701 = vmatpush2.xpose.msra.mxu0 0.0
    %1702 = vmatprep.subr.mxu0 0.0
    %1703 = vmatpush2.xpose.msra.mxu0 0.0
    %1704 = vmatprep.subr.mxu0 0.0
    %1705 = vmatpush2.xpose.msra.mxu0 0.0
    %1706 = vmatprep.mubr.f32.mxu0 0.0
    %1707 = vmatmul.mubr.f32.gmra.mxu0 %v1637
    %v1708 = vpop.f32.mrf.mxu0
    %v1709 = vadd.f32 %v36, %v1708
    %v1710 = vpop.f32.mrf.mxu0
    %1711 = vdwg.mxu0
    %v1713 = vsel %vm1179, %v572, 0
    %v1716 = vsel %vm1179, %v882, 0
    %1718 = vmatprep.subr.mxu0 0.0
    %1719 = vmatpush1.xpose.msra.mxu0 0.0
    %1720 = vmatprep.subr.mxu0 0.0
    %1721 = vmatpush1.xpose.msra.mxu0 0.0
    %1722 = vmatprep.subr.mxu0 0.0
    %1723 = vmatpush1.xpose.msra.mxu0 0.0
    %1724 = vmatprep.subr.mxu0 0.0
    %1725 = vmatpush1.xpose.msra.mxu0 0.0
    %1726 = vmatprep.subr.mxu0 0.0
    %1727 = vmatpush1.xpose.msra.mxu0 0.0
    %1728 = vmatprep.subr.mxu0 0.0
    %1729 = vmatpush1.xpose.msra.mxu0 0.0
    %1730 = vmatprep.subr.mxu0 0.0
    %1731 = vmatpush1.xpose.msra.mxu0 0.0
    %1732 = vmatprep.subr.mxu0 0.0
    %1733 = vmatpush1.xpose.msra.mxu0 0.0
    %1734 = vmatprep.subr.mxu0 0.0
    %1735 = vmatpush1.xpose.msra.mxu0 0.0
    %1736 = vmatprep.subr.mxu0 0.0
    %1737 = vmatpush1.xpose.msra.mxu0 0.0
    %1738 = vmatprep.subr.mxu0 0.0
    %1739 = vmatpush1.xpose.msra.mxu0 0.0
    %1740 = vmatprep.subr.mxu0 0.0
    %1741 = vmatpush1.xpose.msra.mxu0 0.0
    %1742 = vmatprep.subr.mxu0 0.0
    %1743 = vmatpush1.xpose.msra.mxu0 0.0
    %1744 = vmatprep.subr.mxu0 0.0
    %1745 = vmatpush1.xpose.msra.mxu0 0.0
    %1746 = vmatprep.subr.mxu0 0.0
    %1747 = vmatpush1.xpose.msra.mxu0 0.0
    %1748 = vmatprep.subr.mxu0 0.0
    %1749 = vmatpush1.xpose.msra.mxu0 %v1716
    %1750 = vmatprep.subr.mxu0 0.0
    %1751 = vmatpush2.xpose.msra.mxu0 0.0
    %1752 = vmatprep.subr.mxu0 0.0
    %1753 = vmatpush2.xpose.msra.mxu0 0.0
    %1754 = vmatprep.subr.mxu0 0.0
    %1755 = vmatpush2.xpose.msra.mxu0 0.0
    %1756 = vmatprep.subr.mxu0 0.0
    %1757 = vmatpush2.xpose.msra.mxu0 0.0
    %1758 = vmatprep.subr.mxu0 0.0
    %1759 = vmatpush2.xpose.msra.mxu0 0.0
    %1760 = vmatprep.subr.mxu0 0.0
    %1761 = vmatpush2.xpose.msra.mxu0 0.0
    %1762 = vmatprep.subr.mxu0 0.0
    %1763 = vmatpush2.xpose.msra.mxu0 0.0
    %1764 = vmatprep.subr.mxu0 0.0
    %1765 = vmatpush2.xpose.msra.mxu0 0.0
    %1766 = vmatprep.subr.mxu0 0.0
    %1767 = vmatpush2.xpose.msra.mxu0 0.0
    %1768 = vmatprep.subr.mxu0 0.0
    %1769 = vmatpush2.xpose.msra.mxu0 0.0
    %1770 = vmatprep.subr.mxu0 0.0
    %1771 = vmatpush2.xpose.msra.mxu0 0.0
    %1772 = vmatprep.subr.mxu0 0.0
    %1773 = vmatpush2.xpose.msra.mxu0 0.0
    %1774 = vmatprep.subr.mxu0 0.0
    %1775 = vmatpush2.xpose.msra.mxu0 0.0
    %1776 = vmatprep.subr.mxu0 0.0
    %1777 = vmatpush2.xpose.msra.mxu0 0.0
    %1778 = vmatprep.subr.mxu0 0.0
    %1779 = vmatpush2.xpose.msra.mxu0 0.0
    %1780 = vmatprep.subr.mxu0 0.0
    %1781 = vmatpush2.xpose.msra.mxu0 0.0
    %1782 = vmatprep.mubr.f32.mxu0 0.0
    %1783 = vmatmul.mubr.f32.gmra.mxu0 %v1713
    %v1784 = vpop.f32.mrf.mxu0
    %v1785 = vadd.f32 %v36, %v1784
    %v1786 = vpop.f32.mrf.mxu0
    %1787 = vdwg.mxu0
    %v1788 = vmul.f32 %v1253, 1.442695
    %v1789 = vpow.pop %v1788
    %v1790 = vmul.f32 %v1329, 1.442695
    %v1791 = vpow.pop %v1790
    %v1792 = vmul.f32 %v1405, 1.442695
    %v1793 = vpow.pop %v1792
    %v1794 = vmul.f32 %v1481, 1.442695
    %v1795 = vpow.pop %v1794
    %v1796 = vmul.f32 %v1557, 1.442695
    %v1797 = vpow.pop %v1796
    %v1798 = vmul.f32 %v1633, 1.442695
    %v1799 = vpow.pop %v1798
    %v1800 = vmul.f32 %v1709, 1.442695
    %v1801 = vpow.pop %v1800
    %v1802 = vmul.f32 %v1785, 1.442695
    %v1803 = vpow.pop %v1802
    %v1804 = vsel %vm1179, %v1789, 0.0
    %1805 = vadd.xlane.f32.xlu0 %v1804
    %v1806 = vpop.xlane.xlu0 %1805
    %v1807 = vsel %vm1179, %v1791, 0.0
    %1808 = vadd.xlane.f32.xlu0 %v1807
    %v1809 = vpop.xlane.xlu0 %1808
    %v1810 = vsel %vm1179, %v1793, 0.0
    %1811 = vadd.xlane.f32.xlu0 %v1810
    %v1812 = vpop.xlane.xlu0 %1811
    %v1813 = vsel %vm1179, %v1795, 0.0
    %1814 = vadd.xlane.f32.xlu0 %v1813
    %v1815 = vpop.xlane.xlu0 %1814
    %v1816 = vsel %vm1179, %v1797, 0.0
    %1817 = vadd.xlane.f32.xlu0 %v1816
    %v1818 = vpop.xlane.xlu0 %1817
    %v1819 = vsel %vm1179, %v1799, 0.0
    %1820 = vadd.xlane.f32.xlu0 %v1819
    %v1821 = vpop.xlane.xlu0 %1820
    %v1822 = vsel %vm1179, %v1801, 0.0
    %1823 = vadd.xlane.f32.xlu0 %v1822
    %v1824 = vpop.xlane.xlu0 %1823
    %v1825 = vsel %vm1179, %v1803, 0.0
    %1826 = vadd.xlane.f32.xlu0 %v1825
    %v1827 = vpop.xlane.xlu0 %1826
    %v1828 = vrcp.pop %v1806
    %v1829 = vrcp.pop %v1809
    %v1830 = vrcp.pop %v1812
    %v1831 = vrcp.pop %v1815
    %v1832 = vrcp.pop %v1818
    %v1833 = vrcp.pop %v1821
    %v1834 = vrcp.pop %v1824
    %v1835 = vrcp.pop %v1827
    %v1836 = vmul.f32 %v1789, %v1828
    %v1837 = vmul.f32 %v1791, %v1829
    %v1838 = vmul.f32 %v1793, %v1830
    %v1839 = vmul.f32 %v1795, %v1831
    %v1840 = vmul.f32 %v1797, %v1832
    %v1841 = vmul.f32 %v1799, %v1833
    %v1842 = vmul.f32 %v1801, %v1834
    %v1843 = vmul.f32 %v1803, %v1835
    %v1845 = vsel %vm1179, %v1836, 0
    %1847 = vmatprep.subr.mxu0 0.0
    %1848 = vmatpush1.msra.mxu0 0.0
    %1849 = vmatprep.subr.mxu0 0.0
    %1850 = vmatpush1.msra.mxu0 0.0
    %1851 = vmatprep.subr.mxu0 0.0
    %1852 = vmatpush1.msra.mxu0 0.0
    %1853 = vmatprep.subr.mxu0 0.0
    %1854 = vmatpush1.msra.mxu0 0.0
    %1855 = vmatprep.subr.mxu0 0.0
    %1856 = vmatpush1.msra.mxu0 0.0
    %1857 = vmatprep.subr.mxu0 0.0
    %1858 = vmatpush1.msra.mxu0 0.0
    %1859 = vmatprep.subr.mxu0 0.0
    %1860 = vmatpush1.msra.mxu0 0.0
    %1861 = vmatprep.subr.mxu0 0.0
    %1862 = vmatpush1.msra.mxu0 0.0
    %1863 = vmatprep.subr.mxu0 0.0
    %1864 = vmatpush1.msra.mxu0 0.0
    %1865 = vmatprep.subr.mxu0 0.0
    %1866 = vmatpush1.msra.mxu0 0.0
    %1867 = vmatprep.subr.mxu0 0.0
    %1868 = vmatpush1.msra.mxu0 0.0
    %1869 = vmatprep.subr.mxu0 0.0
    %1870 = vmatpush1.msra.mxu0 0.0
    %1871 = vmatprep.subr.mxu0 0.0
    %1872 = vmatpush1.msra.mxu0 0.0
    %1873 = vmatprep.subr.mxu0 0.0
    %1874 = vmatpush1.msra.mxu0 0.0
    %1875 = vmatprep.subr.mxu0 0.0
    %1876 = vmatpush1.msra.mxu0 0.0
    %1877 = vmatprep.subr.mxu0 0.0
    %1878 = vmatpush1.msra.mxu0 %v1107
    %1879 = vmatprep.subr.mxu0 0.0
    %1880 = vmatpush2.msra.mxu0 0.0
    %1881 = vmatprep.subr.mxu0 0.0
    %1882 = vmatpush2.msra.mxu0 0.0
    %1883 = vmatprep.subr.mxu0 0.0
    %1884 = vmatpush2.msra.mxu0 0.0
    %1885 = vmatprep.subr.mxu0 0.0
    %1886 = vmatpush2.msra.mxu0 0.0
    %1887 = vmatprep.subr.mxu0 0.0
    %1888 = vmatpush2.msra.mxu0 0.0
    %1889 = vmatprep.subr.mxu0 0.0
    %1890 = vmatpush2.msra.mxu0 0.0
    %1891 = vmatprep.subr.mxu0 0.0
    %1892 = vmatpush2.msra.mxu0 0.0
    %1893 = vmatprep.subr.mxu0 0.0
    %1894 = vmatpush2.msra.mxu0 0.0
    %1895 = vmatprep.subr.mxu0 0.0
    %1896 = vmatpush2.msra.mxu0 0.0
    %1897 = vmatprep.subr.mxu0 0.0
    %1898 = vmatpush2.msra.mxu0 0.0
    %1899 = vmatprep.subr.mxu0 0.0
    %1900 = vmatpush2.msra.mxu0 0.0
    %1901 = vmatprep.subr.mxu0 0.0
    %1902 = vmatpush2.msra.mxu0 0.0
    %1903 = vmatprep.subr.mxu0 0.0
    %1904 = vmatpush2.msra.mxu0 0.0
    %1905 = vmatprep.subr.mxu0 0.0
    %1906 = vmatpush2.msra.mxu0 0.0
    %1907 = vmatprep.subr.mxu0 0.0
    %1908 = vmatpush2.msra.mxu0 0.0
    %1909 = vmatprep.subr.mxu0 0.0
    %1910 = vmatpush2.msra.mxu0 0.0
    %1911 = vmatprep.mubr.f32.mxu0 0.0
    %1912 = vmatmul.mubr.f32.gmra.mxu0 %v1845
    %v1913 = vpop.f32.mrf.mxu0
    %v1914 = vadd.f32 0.0, %v1913
    %v1915 = vpop.f32.mrf.mxu0
    %1916 = vdwg.mxu0
    %v1918 = vsel %vm1179, %v1837, 0
    %1920 = vmatprep.subr.mxu0 0.0
    %1921 = vmatpush1.msra.mxu0 0.0
    %1922 = vmatprep.subr.mxu0 0.0
    %1923 = vmatpush1.msra.mxu0 0.0
    %1924 = vmatprep.subr.mxu0 0.0
    %1925 = vmatpush1.msra.mxu0 0.0
    %1926 = vmatprep.subr.mxu0 0.0
    %1927 = vmatpush1.msra.mxu0 0.0
    %1928 = vmatprep.subr.mxu0 0.0
    %1929 = vmatpush1.msra.mxu0 0.0
    %1930 = vmatprep.subr.mxu0 0.0
    %1931 = vmatpush1.msra.mxu0 0.0
    %1932 = vmatprep.subr.mxu0 0.0
    %1933 = vmatpush1.msra.mxu0 0.0
    %1934 = vmatprep.subr.mxu0 0.0
    %1935 = vmatpush1.msra.mxu0 0.0
    %1936 = vmatprep.subr.mxu0 0.0
    %1937 = vmatpush1.msra.mxu0 0.0
    %1938 = vmatprep.subr.mxu0 0.0
    %1939 = vmatpush1.msra.mxu0 0.0
    %1940 = vmatprep.subr.mxu0 0.0
    %1941 = vmatpush1.msra.mxu0 0.0
    %1942 = vmatprep.subr.mxu0 0.0
    %1943 = vmatpush1.msra.mxu0 0.0
    %1944 = vmatprep.subr.mxu0 0.0
    %1945 = vmatpush1.msra.mxu0 0.0
    %1946 = vmatprep.subr.mxu0 0.0
    %1947 = vmatpush1.msra.mxu0 0.0
    %1948 = vmatprep.subr.mxu0 0.0
    %1949 = vmatpush1.msra.mxu0 0.0
    %1950 = vmatprep.subr.mxu0 0.0
    %1951 = vmatpush1.msra.mxu0 %v1175
    %1952 = vmatprep.subr.mxu0 0.0
    %1953 = vmatpush2.msra.mxu0 0.0
    %1954 = vmatprep.subr.mxu0 0.0
    %1955 = vmatpush2.msra.mxu0 0.0
    %1956 = vmatprep.subr.mxu0 0.0
    %1957 = vmatpush2.msra.mxu0 0.0
    %1958 = vmatprep.subr.mxu0 0.0
    %1959 = vmatpush2.msra.mxu0 0.0
    %1960 = vmatprep.subr.mxu0 0.0
    %1961 = vmatpush2.msra.mxu0 0.0
    %1962 = vmatprep.subr.mxu0 0.0
    %1963 = vmatpush2.msra.mxu0 0.0
    %1964 = vmatprep.subr.mxu0 0.0
    %1965 = vmatpush2.msra.mxu0 0.0
    %1966 = vmatprep.subr.mxu0 0.0
    %1967 = vmatpush2.msra.mxu0 0.0
    %1968 = vmatprep.subr.mxu0 0.0
    %1969 = vmatpush2.msra.mxu0 0.0
    %1970 = vmatprep.subr.mxu0 0.0
    %1971 = vmatpush2.msra.mxu0 0.0
    %1972 = vmatprep.subr.mxu0 0.0
    %1973 = vmatpush2.msra.mxu0 0.0
    %1974 = vmatprep.subr.mxu0 0.0
    %1975 = vmatpush2.msra.mxu0 0.0
    %1976 = vmatprep.subr.mxu0 0.0
    %1977 = vmatpush2.msra.mxu0 0.0
    %1978 = vmatprep.subr.mxu0 0.0
    %1979 = vmatpush2.msra.mxu0 0.0
    %1980 = vmatprep.subr.mxu0 0.0
    %1981 = vmatpush2.msra.mxu0 0.0
    %1982 = vmatprep.subr.mxu0 0.0
    %1983 = vmatpush2.msra.mxu0 0.0
    %1984 = vmatprep.mubr.f32.mxu0 0.0
    %1985 = vmatmul.mubr.f32.gmra.mxu0 %v1918
    %v1986 = vpop.f32.mrf.mxu0
    %v1987 = vadd.f32 0.0, %v1986
    %v1988 = vpop.f32.mrf.mxu0
    %1989 = vdwg.mxu0
    %v1991 = vsel %vm1179, %v1838, 0
    %1993 = vmatprep.subr.mxu0 0.0
    %1994 = vmatpush1.msra.mxu0 0.0
    %1995 = vmatprep.subr.mxu0 0.0
    %1996 = vmatpush1.msra.mxu0 0.0
    %1997 = vmatprep.subr.mxu0 0.0
    %1998 = vmatpush1.msra.mxu0 0.0
    %1999 = vmatprep.subr.mxu0 0.0
    %2000 = vmatpush1.msra.mxu0 0.0
    %2001 = vmatprep.subr.mxu0 0.0
    %2002 = vmatpush1.msra.mxu0 0.0
    %2003 = vmatprep.subr.mxu0 0.0
    %2004 = vmatpush1.msra.mxu0 0.0
    %2005 = vmatprep.subr.mxu0 0.0
    %2006 = vmatpush1.msra.mxu0 0.0
    %2007 = vmatprep.subr.mxu0 0.0
    %2008 = vmatpush1.msra.mxu0 0.0
    %2009 = vmatprep.subr.mxu0 0.0
    %2010 = vmatpush1.msra.mxu0 0.0
    %2011 = vmatprep.subr.mxu0 0.0
    %2012 = vmatpush1.msra.mxu0 0.0
    %2013 = vmatprep.subr.mxu0 0.0
    %2014 = vmatpush1.msra.mxu0 0.0
    %2015 = vmatprep.subr.mxu0 0.0
    %2016 = vmatpush1.msra.mxu0 0.0
    %2017 = vmatprep.subr.mxu0 0.0
    %2018 = vmatpush1.msra.mxu0 0.0
    %2019 = vmatprep.subr.mxu0 0.0
    %2020 = vmatpush1.msra.mxu0 0.0
    %2021 = vmatprep.subr.mxu0 0.0
    %2022 = vmatpush1.msra.mxu0 0.0
    %2023 = vmatprep.subr.mxu0 0.0
    %2024 = vmatpush1.msra.mxu0 %v1108
    %2025 = vmatprep.subr.mxu0 0.0
    %2026 = vmatpush2.msra.mxu0 0.0
    %2027 = vmatprep.subr.mxu0 0.0
    %2028 = vmatpush2.msra.mxu0 0.0
    %2029 = vmatprep.subr.mxu0 0.0
    %2030 = vmatpush2.msra.mxu0 0.0
    %2031 = vmatprep.subr.mxu0 0.0
    %2032 = vmatpush2.msra.mxu0 0.0
    %2033 = vmatprep.subr.mxu0 0.0
    %2034 = vmatpush2.msra.mxu0 0.0
    %2035 = vmatprep.subr.mxu0 0.0
    %2036 = vmatpush2.msra.mxu0 0.0
    %2037 = vmatprep.subr.mxu0 0.0
    %2038 = vmatpush2.msra.mxu0 0.0
    %2039 = vmatprep.subr.mxu0 0.0
    %2040 = vmatpush2.msra.mxu0 0.0
    %2041 = vmatprep.subr.mxu0 0.0
    %2042 = vmatpush2.msra.mxu0 0.0
    %2043 = vmatprep.subr.mxu0 0.0
    %2044 = vmatpush2.msra.mxu0 0.0
    %2045 = vmatprep.subr.mxu0 0.0
    %2046 = vmatpush2.msra.mxu0 0.0
    %2047 = vmatprep.subr.mxu0 0.0
    %2048 = vmatpush2.msra.mxu0 0.0
    %2049 = vmatprep.subr.mxu0 0.0
    %2050 = vmatpush2.msra.mxu0 0.0
    %2051 = vmatprep.subr.mxu0 0.0
    %2052 = vmatpush2.msra.mxu0 0.0
    %2053 = vmatprep.subr.mxu0 0.0
    %2054 = vmatpush2.msra.mxu0 0.0
    %2055 = vmatprep.subr.mxu0 0.0
    %2056 = vmatpush2.msra.mxu0 0.0
    %2057 = vmatprep.mubr.f32.mxu0 0.0
    %2058 = vmatmul.mubr.f32.gmra.mxu0 %v1991
    %v2059 = vpop.f32.mrf.mxu0
    %v2060 = vadd.f32 0.0, %v2059
    %v2061 = vpop.f32.mrf.mxu0
    %2062 = vdwg.mxu0
    %v2064 = vsel %vm1179, %v1839, 0
    %2066 = vmatprep.subr.mxu0 0.0
    %2067 = vmatpush1.msra.mxu0 0.0
    %2068 = vmatprep.subr.mxu0 0.0
    %2069 = vmatpush1.msra.mxu0 0.0
    %2070 = vmatprep.subr.mxu0 0.0
    %2071 = vmatpush1.msra.mxu0 0.0
    %2072 = vmatprep.subr.mxu0 0.0
    %2073 = vmatpush1.msra.mxu0 0.0
    %2074 = vmatprep.subr.mxu0 0.0
    %2075 = vmatpush1.msra.mxu0 0.0
    %2076 = vmatprep.subr.mxu0 0.0
    %2077 = vmatpush1.msra.mxu0 0.0
    %2078 = vmatprep.subr.mxu0 0.0
    %2079 = vmatpush1.msra.mxu0 0.0
    %2080 = vmatprep.subr.mxu0 0.0
    %2081 = vmatpush1.msra.mxu0 0.0
    %2082 = vmatprep.subr.mxu0 0.0
    %2083 = vmatpush1.msra.mxu0 0.0
    %2084 = vmatprep.subr.mxu0 0.0
    %2085 = vmatpush1.msra.mxu0 0.0
    %2086 = vmatprep.subr.mxu0 0.0
    %2087 = vmatpush1.msra.mxu0 0.0
    %2088 = vmatprep.subr.mxu0 0.0
    %2089 = vmatpush1.msra.mxu0 0.0
    %2090 = vmatprep.subr.mxu0 0.0
    %2091 = vmatpush1.msra.mxu0 0.0
    %2092 = vmatprep.subr.mxu0 0.0
    %2093 = vmatpush1.msra.mxu0 0.0
    %2094 = vmatprep.subr.mxu0 0.0
    %2095 = vmatpush1.msra.mxu0 0.0
    %2096 = vmatprep.subr.mxu0 0.0
    %2097 = vmatpush1.msra.mxu0 %v1176
    %2098 = vmatprep.subr.mxu0 0.0
    %2099 = vmatpush2.msra.mxu0 0.0
    %2100 = vmatprep.subr.mxu0 0.0
    %2101 = vmatpush2.msra.mxu0 0.0
    %2102 = vmatprep.subr.mxu0 0.0
    %2103 = vmatpush2.msra.mxu0 0.0
    %2104 = vmatprep.subr.mxu0 0.0
    %2105 = vmatpush2.msra.mxu0 0.0
    %2106 = vmatprep.subr.mxu0 0.0
    %2107 = vmatpush2.msra.mxu0 0.0
    %2108 = vmatprep.subr.mxu0 0.0
    %2109 = vmatpush2.msra.mxu0 0.0
    %2110 = vmatprep.subr.mxu0 0.0
    %2111 = vmatpush2.msra.mxu0 0.0
    %2112 = vmatprep.subr.mxu0 0.0
    %2113 = vmatpush2.msra.mxu0 0.0
    %2114 = vmatprep.subr.mxu0 0.0
    %2115 = vmatpush2.msra.mxu0 0.0
    %2116 = vmatprep.subr.mxu0 0.0
    %2117 = vmatpush2.msra.mxu0 0.0
    %2118 = vmatprep.subr.mxu0 0.0
    %2119 = vmatpush2.msra.mxu0 0.0
    %2120 = vmatprep.subr.mxu0 0.0
    %2121 = vmatpush2.msra.mxu0 0.0
    %2122 = vmatprep.subr.mxu0 0.0
    %2123 = vmatpush2.msra.mxu0 0.0
    %2124 = vmatprep.subr.mxu0 0.0
    %2125 = vmatpush2.msra.mxu0 0.0
    %2126 = vmatprep.subr.mxu0 0.0
    %2127 = vmatpush2.msra.mxu0 0.0
    %2128 = vmatprep.subr.mxu0 0.0
    %2129 = vmatpush2.msra.mxu0 0.0
    %2130 = vmatprep.mubr.f32.mxu0 0.0
    %2131 = vmatmul.mubr.f32.gmra.mxu0 %v2064
    %v2132 = vpop.f32.mrf.mxu0
    %v2133 = vadd.f32 0.0, %v2132
    %v2134 = vpop.f32.mrf.mxu0
    %2135 = vdwg.mxu0
    %v2137 = vsel %vm1179, %v1840, 0
    %2139 = vmatprep.subr.mxu0 0.0
    %2140 = vmatpush1.msra.mxu0 0.0
    %2141 = vmatprep.subr.mxu0 0.0
    %2142 = vmatpush1.msra.mxu0 0.0
    %2143 = vmatprep.subr.mxu0 0.0
    %2144 = vmatpush1.msra.mxu0 0.0
    %2145 = vmatprep.subr.mxu0 0.0
    %2146 = vmatpush1.msra.mxu0 0.0
    %2147 = vmatprep.subr.mxu0 0.0
    %2148 = vmatpush1.msra.mxu0 0.0
    %2149 = vmatprep.subr.mxu0 0.0
    %2150 = vmatpush1.msra.mxu0 0.0
    %2151 = vmatprep.subr.mxu0 0.0
    %2152 = vmatpush1.msra.mxu0 0.0
    %2153 = vmatprep.subr.mxu0 0.0
    %2154 = vmatpush1.msra.mxu0 0.0
    %2155 = vmatprep.subr.mxu0 0.0
    %2156 = vmatpush1.msra.mxu0 0.0
    %2157 = vmatprep.subr.mxu0 0.0
    %2158 = vmatpush1.msra.mxu0 0.0
    %2159 = vmatprep.subr.mxu0 0.0
    %2160 = vmatpush1.msra.mxu0 0.0
    %2161 = vmatprep.subr.mxu0 0.0
    %2162 = vmatpush1.msra.mxu0 0.0
    %2163 = vmatprep.subr.mxu0 0.0
    %2164 = vmatpush1.msra.mxu0 0.0
    %2165 = vmatprep.subr.mxu0 0.0
    %2166 = vmatpush1.msra.mxu0 0.0
    %2167 = vmatprep.subr.mxu0 0.0
    %2168 = vmatpush1.msra.mxu0 0.0
    %2169 = vmatprep.subr.mxu0 0.0
    %2170 = vmatpush1.msra.mxu0 %v1109
    %2171 = vmatprep.subr.mxu0 0.0
    %2172 = vmatpush2.msra.mxu0 0.0
    %2173 = vmatprep.subr.mxu0 0.0
    %2174 = vmatpush2.msra.mxu0 0.0
    %2175 = vmatprep.subr.mxu0 0.0
    %2176 = vmatpush2.msra.mxu0 0.0
    %2177 = vmatprep.subr.mxu0 0.0
    %2178 = vmatpush2.msra.mxu0 0.0
    %2179 = vmatprep.subr.mxu0 0.0
    %2180 = vmatpush2.msra.mxu0 0.0
    %2181 = vmatprep.subr.mxu0 0.0
    %2182 = vmatpush2.msra.mxu0 0.0
    %2183 = vmatprep.subr.mxu0 0.0
    %2184 = vmatpush2.msra.mxu0 0.0
    %2185 = vmatprep.subr.mxu0 0.0
    %2186 = vmatpush2.msra.mxu0 0.0
    %2187 = vmatprep.subr.mxu0 0.0
    %2188 = vmatpush2.msra.mxu0 0.0
    %2189 = vmatprep.subr.mxu0 0.0
    %2190 = vmatpush2.msra.mxu0 0.0
    %2191 = vmatprep.subr.mxu0 0.0
    %2192 = vmatpush2.msra.mxu0 0.0
    %2193 = vmatprep.subr.mxu0 0.0
    %2194 = vmatpush2.msra.mxu0 0.0
    %2195 = vmatprep.subr.mxu0 0.0
    %2196 = vmatpush2.msra.mxu0 0.0
    %2197 = vmatprep.subr.mxu0 0.0
    %2198 = vmatpush2.msra.mxu0 0.0
    %2199 = vmatprep.subr.mxu0 0.0
    %2200 = vmatpush2.msra.mxu0 0.0
    %2201 = vmatprep.subr.mxu0 0.0
    %2202 = vmatpush2.msra.mxu0 0.0
    %2203 = vmatprep.mubr.f32.mxu0 0.0
    %2204 = vmatmul.mubr.f32.gmra.mxu0 %v2137
    %v2205 = vpop.f32.mrf.mxu0
    %v2206 = vadd.f32 0.0, %v2205
    %v2207 = vpop.f32.mrf.mxu0
    %2208 = vdwg.mxu0
    %v2210 = vsel %vm1179, %v1841, 0
    %2212 = vmatprep.subr.mxu0 0.0
    %2213 = vmatpush1.msra.mxu0 0.0
    %2214 = vmatprep.subr.mxu0 0.0
    %2215 = vmatpush1.msra.mxu0 0.0
    %2216 = vmatprep.subr.mxu0 0.0
    %2217 = vmatpush1.msra.mxu0 0.0
    %2218 = vmatprep.subr.mxu0 0.0
    %2219 = vmatpush1.msra.mxu0 0.0
    %2220 = vmatprep.subr.mxu0 0.0
    %2221 = vmatpush1.msra.mxu0 0.0
    %2222 = vmatprep.subr.mxu0 0.0
    %2223 = vmatpush1.msra.mxu0 0.0
    %2224 = vmatprep.subr.mxu0 0.0
    %2225 = vmatpush1.msra.mxu0 0.0
    %2226 = vmatprep.subr.mxu0 0.0
    %2227 = vmatpush1.msra.mxu0 0.0
    %2228 = vmatprep.subr.mxu0 0.0
    %2229 = vmatpush1.msra.mxu0 0.0
    %2230 = vmatprep.subr.mxu0 0.0
    %2231 = vmatpush1.msra.mxu0 0.0
    %2232 = vmatprep.subr.mxu0 0.0
    %2233 = vmatpush1.msra.mxu0 0.0
    %2234 = vmatprep.subr.mxu0 0.0
    %2235 = vmatpush1.msra.mxu0 0.0
    %2236 = vmatprep.subr.mxu0 0.0
    %2237 = vmatpush1.msra.mxu0 0.0
    %2238 = vmatprep.subr.mxu0 0.0
    %2239 = vmatpush1.msra.mxu0 0.0
    %2240 = vmatprep.subr.mxu0 0.0
    %2241 = vmatpush1.msra.mxu0 0.0
    %2242 = vmatprep.subr.mxu0 0.0
    %2243 = vmatpush1.msra.mxu0 %v1177
    %2244 = vmatprep.subr.mxu0 0.0
    %2245 = vmatpush2.msra.mxu0 0.0
    %2246 = vmatprep.subr.mxu0 0.0
    %2247 = vmatpush2.msra.mxu0 0.0
    %2248 = vmatprep.subr.mxu0 0.0
    %2249 = vmatpush2.msra.mxu0 0.0
    %2250 = vmatprep.subr.mxu0 0.0
    %2251 = vmatpush2.msra.mxu0 0.0
    %2252 = vmatprep.subr.mxu0 0.0
    %2253 = vmatpush2.msra.mxu0 0.0
    %2254 = vmatprep.subr.mxu0 0.0
    %2255 = vmatpush2.msra.mxu0 0.0
    %2256 = vmatprep.subr.mxu0 0.0
    %2257 = vmatpush2.msra.mxu0 0.0
    %2258 = vmatprep.subr.mxu0 0.0
    %2259 = vmatpush2.msra.mxu0 0.0
    %2260 = vmatprep.subr.mxu0 0.0
    %2261 = vmatpush2.msra.mxu0 0.0
    %2262 = vmatprep.subr.mxu0 0.0
    %2263 = vmatpush2.msra.mxu0 0.0
    %2264 = vmatprep.subr.mxu0 0.0
    %2265 = vmatpush2.msra.mxu0 0.0
    %2266 = vmatprep.subr.mxu0 0.0
    %2267 = vmatpush2.msra.mxu0 0.0
    %2268 = vmatprep.subr.mxu0 0.0
    %2269 = vmatpush2.msra.mxu0 0.0
    %2270 = vmatprep.subr.mxu0 0.0
    %2271 = vmatpush2.msra.mxu0 0.0
    %2272 = vmatprep.subr.mxu0 0.0
    %2273 = vmatpush2.msra.mxu0 0.0
    %2274 = vmatprep.subr.mxu0 0.0
    %2275 = vmatpush2.msra.mxu0 0.0
    %2276 = vmatprep.mubr.f32.mxu0 0.0
    %2277 = vmatmul.mubr.f32.gmra.mxu0 %v2210
    %v2278 = vpop.f32.mrf.mxu0
    %v2279 = vadd.f32 0.0, %v2278
    %v2280 = vpop.f32.mrf.mxu0
    %2281 = vdwg.mxu0
    %v2283 = vsel %vm1179, %v1842, 0
    %2285 = vmatprep.subr.mxu0 0.0
    %2286 = vmatpush1.msra.mxu0 0.0
    %2287 = vmatprep.subr.mxu0 0.0
    %2288 = vmatpush1.msra.mxu0 0.0
    %2289 = vmatprep.subr.mxu0 0.0
    %2290 = vmatpush1.msra.mxu0 0.0
    %2291 = vmatprep.subr.mxu0 0.0
    %2292 = vmatpush1.msra.mxu0 0.0
    %2293 = vmatprep.subr.mxu0 0.0
    %2294 = vmatpush1.msra.mxu0 0.0
    %2295 = vmatprep.subr.mxu0 0.0
    %2296 = vmatpush1.msra.mxu0 0.0
    %2297 = vmatprep.subr.mxu0 0.0
    %2298 = vmatpush1.msra.mxu0 0.0
    %2299 = vmatprep.subr.mxu0 0.0
    %2300 = vmatpush1.msra.mxu0 0.0
    %2301 = vmatprep.subr.mxu0 0.0
    %2302 = vmatpush1.msra.mxu0 0.0
    %2303 = vmatprep.subr.mxu0 0.0
    %2304 = vmatpush1.msra.mxu0 0.0
    %2305 = vmatprep.subr.mxu0 0.0
    %2306 = vmatpush1.msra.mxu0 0.0
    %2307 = vmatprep.subr.mxu0 0.0
    %2308 = vmatpush1.msra.mxu0 0.0
    %2309 = vmatprep.subr.mxu0 0.0
    %2310 = vmatpush1.msra.mxu0 0.0
    %2311 = vmatprep.subr.mxu0 0.0
    %2312 = vmatpush1.msra.mxu0 0.0
    %2313 = vmatprep.subr.mxu0 0.0
    %2314 = vmatpush1.msra.mxu0 0.0
    %2315 = vmatprep.subr.mxu0 0.0
    %2316 = vmatpush1.msra.mxu0 %v1110
    %2317 = vmatprep.subr.mxu0 0.0
    %2318 = vmatpush2.msra.mxu0 0.0
    %2319 = vmatprep.subr.mxu0 0.0
    %2320 = vmatpush2.msra.mxu0 0.0
    %2321 = vmatprep.subr.mxu0 0.0
    %2322 = vmatpush2.msra.mxu0 0.0
    %2323 = vmatprep.subr.mxu0 0.0
    %2324 = vmatpush2.msra.mxu0 0.0
    %2325 = vmatprep.subr.mxu0 0.0
    %2326 = vmatpush2.msra.mxu0 0.0
    %2327 = vmatprep.subr.mxu0 0.0
    %2328 = vmatpush2.msra.mxu0 0.0
    %2329 = vmatprep.subr.mxu0 0.0
    %2330 = vmatpush2.msra.mxu0 0.0
    %2331 = vmatprep.subr.mxu0 0.0
    %2332 = vmatpush2.msra.mxu0 0.0
    %2333 = vmatprep.subr.mxu0 0.0
    %2334 = vmatpush2.msra.mxu0 0.0
    %2335 = vmatprep.subr.mxu0 0.0
    %2336 = vmatpush2.msra.mxu0 0.0
    %2337 = vmatprep.subr.mxu0 0.0
    %2338 = vmatpush2.msra.mxu0 0.0
    %2339 = vmatprep.subr.mxu0 0.0
    %2340 = vmatpush2.msra.mxu0 0.0
    %2341 = vmatprep.subr.mxu0 0.0
    %2342 = vmatpush2.msra.mxu0 0.0
    %2343 = vmatprep.subr.mxu0 0.0
    %2344 = vmatpush2.msra.mxu0 0.0
    %2345 = vmatprep.subr.mxu0 0.0
    %2346 = vmatpush2.msra.mxu0 0.0
    %2347 = vmatprep.subr.mxu0 0.0
    %2348 = vmatpush2.msra.mxu0 0.0
    %2349 = vmatprep.mubr.f32.mxu0 0.0
    %2350 = vmatmul.mubr.f32.gmra.mxu0 %v2283
    %v2351 = vpop.f32.mrf.mxu0
    %v2352 = vadd.f32 0.0, %v2351
    %v2353 = vpop.f32.mrf.mxu0
    %2354 = vdwg.mxu0
    %v2356 = vsel %vm1179, %v1843, 0
    %2358 = vmatprep.subr.mxu0 0.0
    %2359 = vmatpush1.msra.mxu0 0.0
    %2360 = vmatprep.subr.mxu0 0.0
    %2361 = vmatpush1.msra.mxu0 0.0
    %2362 = vmatprep.subr.mxu0 0.0
    %2363 = vmatpush1.msra.mxu0 0.0
    %2364 = vmatprep.subr.mxu0 0.0
    %2365 = vmatpush1.msra.mxu0 0.0
    %2366 = vmatprep.subr.mxu0 0.0
    %2367 = vmatpush1.msra.mxu0 0.0
    %2368 = vmatprep.subr.mxu0 0.0
    %2369 = vmatpush1.msra.mxu0 0.0
    %2370 = vmatprep.subr.mxu0 0.0
    %2371 = vmatpush1.msra.mxu0 0.0
    %2372 = vmatprep.subr.mxu0 0.0
    %2373 = vmatpush1.msra.mxu0 0.0
    %2374 = vmatprep.subr.mxu0 0.0
    %2375 = vmatpush1.msra.mxu0 0.0
    %2376 = vmatprep.subr.mxu0 0.0
    %2377 = vmatpush1.msra.mxu0 0.0
    %2378 = vmatprep.subr.mxu0 0.0
    %2379 = vmatpush1.msra.mxu0 0.0
    %2380 = vmatprep.subr.mxu0 0.0
    %2381 = vmatpush1.msra.mxu0 0.0
    %2382 = vmatprep.subr.mxu0 0.0
    %2383 = vmatpush1.msra.mxu0 0.0
    %2384 = vmatprep.subr.mxu0 0.0
    %2385 = vmatpush1.msra.mxu0 0.0
    %2386 = vmatprep.subr.mxu0 0.0
    %2387 = vmatpush1.msra.mxu0 0.0
    %2388 = vmatprep.subr.mxu0 0.0
    %2389 = vmatpush1.msra.mxu0 %v1178
    %2390 = vmatprep.subr.mxu0 0.0
    %2391 = vmatpush2.msra.mxu0 0.0
    %2392 = vmatprep.subr.mxu0 0.0
    %2393 = vmatpush2.msra.mxu0 0.0
    %2394 = vmatprep.subr.mxu0 0.0
    %2395 = vmatpush2.msra.mxu0 0.0
    %2396 = vmatprep.subr.mxu0 0.0
    %2397 = vmatpush2.msra.mxu0 0.0
    %2398 = vmatprep.subr.mxu0 0.0
    %2399 = vmatpush2.msra.mxu0 0.0
    %2400 = vmatprep.subr.mxu0 0.0
    %2401 = vmatpush2.msra.mxu0 0.0
    %2402 = vmatprep.subr.mxu0 0.0
    %2403 = vmatpush2.msra.mxu0 0.0
    %2404 = vmatprep.subr.mxu0 0.0
    %2405 = vmatpush2.msra.mxu0 0.0
    %2406 = vmatprep.subr.mxu0 0.0
    %2407 = vmatpush2.msra.mxu0 0.0
    %2408 = vmatprep.subr.mxu0 0.0
    %2409 = vmatpush2.msra.mxu0 0.0
    %2410 = vmatprep.subr.mxu0 0.0
    %2411 = vmatpush2.msra.mxu0 0.0
    %2412 = vmatprep.subr.mxu0 0.0
    %2413 = vmatpush2.msra.mxu0 0.0
    %2414 = vmatprep.subr.mxu0 0.0
    %2415 = vmatpush2.msra.mxu0 0.0
    %2416 = vmatprep.subr.mxu0 0.0
    %2417 = vmatpush2.msra.mxu0 0.0
    %2418 = vmatprep.subr.mxu0 0.0
    %2419 = vmatpush2.msra.mxu0 0.0
    %2420 = vmatprep.subr.mxu0 0.0
    %2421 = vmatpush2.msra.mxu0 0.0
    %2422 = vmatprep.mubr.f32.mxu0 0.0
    %2423 = vmatmul.mubr.f32.gmra.mxu0 %v2356
    %v2424 = vpop.f32.mrf.mxu0
    %v2425 = vadd.f32 0.0, %v2424
    %v2426 = vpop.f32.mrf.mxu0
    %2427 = vdwg.mxu0
    %v2428 = vcombine.low %v1914, %v2206
    %v2429 = vcombine.high %v1914, %v2206
    %v2431 = vunpack.c.l.s4 1983009808
    %v2432 = vunpack.c.0.s8 %v2431
    %v2433 = vlaneseq
    %v2434 = vshrl.u32 %v2433, 7
    %v2435 = vsub.s32 %v2432, %v2434
    %v2436 = vrot.slane %v2428, %v2435
    %v2438 = vunpack.c.l.s4 1983009808
    %v2439 = vunpack.c.0.s8 %v2438
    %v2440 = vlaneseq
    %v2441 = vshrl.u32 %v2440, 7
    %v2442 = vsub.s32 %v2439, %v2441
    %v2443 = vrot.slane %v2429, %v2442
    %v2444 = vcombine.low %v2060, %v2352
    %v2445 = vcombine.high %v2060, %v2352
    %v2447 = vunpack.c.l.s4 1983009808
    %v2448 = vunpack.c.0.s8 %v2447
    %v2449 = vlaneseq
    %v2450 = vshrl.u32 %v2449, 7
    %v2451 = vsub.s32 %v2448, %v2450
    %v2452 = vrot.slane %v2444, %v2451
    %v2454 = vunpack.c.l.s4 1983009808
    %v2455 = vunpack.c.0.s8 %v2454
    %v2456 = vlaneseq
    %v2457 = vshrl.u32 %v2456, 7
    %v2458 = vsub.s32 %v2455, %v2457
    %v2459 = vrot.slane %v2445, %v2458
    %v2460 = vcombine.low %v2436, %v2452
    %v2461 = vcombine.high %v2436, %v2452
    %v2463 = vunpack.c.l.s4 1934713408
    %v2464 = vunpack.c.0.s8 %v2463
    %v2465 = vlaneseq
    %v2466 = vshrl.u32 %v2465, 7
    %v2467 = vsub.s32 %v2464, %v2466
    %v2468 = vrot.slane %v2460, %v2467
    %v2470 = vunpack.c.l.s4 1934713408
    %v2471 = vunpack.c.0.s8 %v2470
    %v2472 = vlaneseq
    %v2473 = vshrl.u32 %v2472, 7
    %v2474 = vsub.s32 %v2471, %v2473
    %v2475 = vrot.slane %v2461, %v2474
    %v2476 = vcombine.low %v2443, %v2459
    %v2477 = vcombine.high %v2443, %v2459
    %v2479 = vunpack.c.l.s4 1934713408
    %v2480 = vunpack.c.0.s8 %v2479
    %v2481 = vlaneseq
    %v2482 = vshrl.u32 %v2481, 7
    %v2483 = vsub.s32 %v2480, %v2482
    %v2484 = vrot.slane %v2476, %v2483
    %v2486 = vunpack.c.l.s4 1934713408
    %v2487 = vunpack.c.0.s8 %v2486
    %v2488 = vlaneseq
    %v2489 = vshrl.u32 %v2488, 7
    %v2490 = vsub.s32 %v2487, %v2489
    %v2491 = vrot.slane %v2477, %v2490
    %v2492 = vcombine.high %v2468, 0.0
    %v2493 = vcombine.high %v2475, 0.0
    %v2494 = vcombine.high %v2484, 0.0
    %v2495 = vcombine.high %v2491, 0.0
    %v2496 = vcombine.low %v1987, %v2279
    %v2497 = vcombine.high %v1987, %v2279
    %v2499 = vunpack.c.l.s4 1983009808
    %v2500 = vunpack.c.0.s8 %v2499
    %v2501 = vlaneseq
    %v2502 = vshrl.u32 %v2501, 7
    %v2503 = vsub.s32 %v2500, %v2502
    %v2504 = vrot.slane %v2496, %v2503
    %v2506 = vunpack.c.l.s4 1983009808
    %v2507 = vunpack.c.0.s8 %v2506
    %v2508 = vlaneseq
    %v2509 = vshrl.u32 %v2508, 7
    %v2510 = vsub.s32 %v2507, %v2509
    %v2511 = vrot.slane %v2497, %v2510
    %v2512 = vcombine.low %v2133, %v2425
    %v2513 = vcombine.high %v2133, %v2425
    %v2515 = vunpack.c.l.s4 1983009808
    %v2516 = vunpack.c.0.s8 %v2515
    %v2517 = vlaneseq
    %v2518 = vshrl.u32 %v2517, 7
    %v2519 = vsub.s32 %v2516, %v2518
    %v2520 = vrot.slane %v2512, %v2519
    %v2522 = vunpack.c.l.s4 1983009808
    %v2523 = vunpack.c.0.s8 %v2522
    %v2524 = vlaneseq
    %v2525 = vshrl.u32 %v2524, 7
    %v2526 = vsub.s32 %v2523, %v2525
    %v2527 = vrot.slane %v2513, %v2526
    %v2528 = vcombine.low %v2504, %v2520
    %v2529 = vcombine.high %v2504, %v2520
    %v2531 = vunpack.c.l.s4 1934713408
    %v2532 = vunpack.c.0.s8 %v2531
    %v2533 = vlaneseq
    %v2534 = vshrl.u32 %v2533, 7
    %v2535 = vsub.s32 %v2532, %v2534
    %v2536 = vrot.slane %v2528, %v2535
    %v2538 = vunpack.c.l.s4 1934713408
    %v2539 = vunpack.c.0.s8 %v2538
    %v2540 = vlaneseq
    %v2541 = vshrl.u32 %v2540, 7
    %v2542 = vsub.s32 %v2539, %v2541
    %v2543 = vrot.slane %v2529, %v2542
    %v2544 = vcombine.low %v2511, %v2527
    %v2545 = vcombine.high %v2511, %v2527
    %v2547 = vunpack.c.l.s4 1934713408
    %v2548 = vunpack.c.0.s8 %v2547
    %v2549 = vlaneseq
    %v2550 = vshrl.u32 %v2549, 7
    %v2551 = vsub.s32 %v2548, %v2550
    %v2552 = vrot.slane %v2544, %v2551
    %v2554 = vunpack.c.l.s4 1934713408
    %v2555 = vunpack.c.0.s8 %v2554
    %v2556 = vlaneseq
    %v2557 = vshrl.u32 %v2556, 7
    %v2558 = vsub.s32 %v2555, %v2557
    %v2559 = vrot.slane %v2545, %v2558
    %v2560 = vcombine.high %v2536, 0.0
    %v2561 = vcombine.high %v2543, 0.0
    %v2562 = vcombine.high %v2552, 0.0
    %v2563 = vcombine.high %v2559, 0.0
    %v2564 = vcombine.low %v2468, %v2475
    %v2566 = vunpack.c.l.s4 1983009808
    %v2567 = vunpack.c.0.s8 %v2566
    %v2568 = vlaneseq
    %v2569 = vshrl.u32 %v2568, 7
    %v2570 = vsub.s32 %v2567, %v2569
    %v2571 = vrot.slane %v2564, %v2570
    %v2572 = vcombine.low %v2492, %v2493
    %v2574 = vunpack.c.l.s4 1983009808
    %v2575 = vunpack.c.0.s8 %v2574
    %v2576 = vlaneseq
    %v2577 = vshrl.u32 %v2576, 7
    %v2578 = vsub.s32 %v2575, %v2577
    %v2579 = vrot.slane %v2572, %v2578
    %v2580 = vcombine.low %v2484, %v2491
    %v2582 = vunpack.c.l.s4 1983009808
    %v2583 = vunpack.c.0.s8 %v2582
    %v2584 = vlaneseq
    %v2585 = vshrl.u32 %v2584, 7
    %v2586 = vsub.s32 %v2583, %v2585
    %v2587 = vrot.slane %v2580, %v2586
    %v2588 = vcombine.low %v2494, %v2495
    %v2590 = vunpack.c.l.s4 1983009808
    %v2591 = vunpack.c.0.s8 %v2590
    %v2592 = vlaneseq
    %v2593 = vshrl.u32 %v2592, 7
    %v2594 = vsub.s32 %v2591, %v2593
    %v2595 = vrot.slane %v2588, %v2594
    %v2596 = vcombine.low %v2571, %v2579
    %v2597 = vcombine.high %v2571, %v2579
    %v2599 = vunpack.c.l.s4 1934713408
    %v2600 = vunpack.c.0.s8 %v2599
    %v2601 = vlaneseq
    %v2602 = vshrl.u32 %v2601, 7
    %v2603 = vsub.s32 %v2600, %v2602
    %v2604 = vrot.slane %v2596, %v2603
    %v2606 = vunpack.c.l.s4 1934713408
    %v2607 = vunpack.c.0.s8 %v2606
    %v2608 = vlaneseq
    %v2609 = vshrl.u32 %v2608, 7
    %v2610 = vsub.s32 %v2607, %v2609
    %v2611 = vrot.slane %v2597, %v2610
    %v2612 = vcombine.low %v2587, %v2595
    %v2613 = vcombine.high %v2587, %v2595
    %v2615 = vunpack.c.l.s4 1934713408
    %v2616 = vunpack.c.0.s8 %v2615
    %v2617 = vlaneseq
    %v2618 = vshrl.u32 %v2617, 7
    %v2619 = vsub.s32 %v2616, %v2618
    %v2620 = vrot.slane %v2612, %v2619
    %v2622 = vunpack.c.l.s4 1934713408
    %v2623 = vunpack.c.0.s8 %v2622
    %v2624 = vlaneseq
    %v2625 = vshrl.u32 %v2624, 7
    %v2626 = vsub.s32 %v2623, %v2625
    %v2627 = vrot.slane %v2613, %v2626
    %v2628 = vcombine.low %v2604, %v2620
    %v2629 = vcombine.high %v2604, %v2620
    %v2630 = vcombine.low %v2611, %v2627
    %v2631 = vcombine.high %v2611, %v2627
    %v2632 = vcombine.low %v2536, %v2543
    %v2634 = vunpack.c.l.s4 1983009808
    %v2635 = vunpack.c.0.s8 %v2634
    %v2636 = vlaneseq
    %v2637 = vshrl.u32 %v2636, 7
    %v2638 = vsub.s32 %v2635, %v2637
    %v2639 = vrot.slane %v2632, %v2638
    %v2640 = vcombine.low %v2560, %v2561
    %v2642 = vunpack.c.l.s4 1983009808
    %v2643 = vunpack.c.0.s8 %v2642
    %v2644 = vlaneseq
    %v2645 = vshrl.u32 %v2644, 7
    %v2646 = vsub.s32 %v2643, %v2645
    %v2647 = vrot.slane %v2640, %v2646
    %v2648 = vcombine.low %v2552, %v2559
    %v2650 = vunpack.c.l.s4 1983009808
    %v2651 = vunpack.c.0.s8 %v2650
    %v2652 = vlaneseq
    %v2653 = vshrl.u32 %v2652, 7
    %v2654 = vsub.s32 %v2651, %v2653
    %v2655 = vrot.slane %v2648, %v2654
    %v2656 = vcombine.low %v2562, %v2563
    %v2658 = vunpack.c.l.s4 1983009808
    %v2659 = vunpack.c.0.s8 %v2658
    %v2660 = vlaneseq
    %v2661 = vshrl.u32 %v2660, 7
    %v2662 = vsub.s32 %v2659, %v2661
    %v2663 = vrot.slane %v2656, %v2662
    %v2664 = vcombine.low %v2639, %v2647
    %v2665 = vcombine.high %v2639, %v2647
    %v2667 = vunpack.c.l.s4 1934713408
    %v2668 = vunpack.c.0.s8 %v2667
    %v2669 = vlaneseq
    %v2670 = vshrl.u32 %v2669, 7
    %v2671 = vsub.s32 %v2668, %v2670
    %v2672 = vrot.slane %v2664, %v2671
    %v2674 = vunpack.c.l.s4 1934713408
    %v2675 = vunpack.c.0.s8 %v2674
    %v2676 = vlaneseq
    %v2677 = vshrl.u32 %v2676, 7
    %v2678 = vsub.s32 %v2675, %v2677
    %v2679 = vrot.slane %v2665, %v2678
    %v2680 = vcombine.low %v2655, %v2663
    %v2681 = vcombine.high %v2655, %v2663
    %v2683 = vunpack.c.l.s4 1934713408
    %v2684 = vunpack.c.0.s8 %v2683
    %v2685 = vlaneseq
    %v2686 = vshrl.u32 %v2685, 7
    %v2687 = vsub.s32 %v2684, %v2686
    %v2688 = vrot.slane %v2680, %v2687
    %v2690 = vunpack.c.l.s4 1934713408
    %v2691 = vunpack.c.0.s8 %v2690
    %v2692 = vlaneseq
    %v2693 = vshrl.u32 %v2692, 7
    %v2694 = vsub.s32 %v2691, %v2693
    %v2695 = vrot.slane %v2681, %v2694
    %v2696 = vcombine.low %v2672, %v2688
    %v2697 = vcombine.high %v2672, %v2688
    %v2698 = vcombine.low %v2679, %v2695
    %v2699 = vcombine.high %v2679, %v2695
    %2702 = vrot.lane.b32.xlu0 %v2629, 8
    %v2703 = vpop.permute.xlu0 %2702
    %2704 = vrot.lane.b32.xlu0 %v2697, 8
    %v2705 = vpop.permute.xlu0 %2704
    %2710 = vrot.lane.b32.xlu0 %v2630, 16
    %v2711 = vpop.permute.xlu0 %2710
    %2712 = vrot.lane.b32.xlu0 %v2698, 16
    %v2713 = vpop.permute.xlu0 %2712
    %2718 = vrot.lane.b32.xlu0 %v2631, 24
    %v2719 = vpop.permute.xlu0 %2718
    %2720 = vrot.lane.b32.xlu0 %v2699, 24
    %v2721 = vpop.permute.xlu0 %2720
    %v2724 = vsel %vm1179, %v2628, %v2703
    %v2725 = vsel %vm1179, %v2696, %v2705
    %vm2726 = vcmask 130048
    %v2727 = vsel %vm2726, %v2724, %v2711
    %v2728 = vsel %vm2726, %v2725, %v2713
    %vm2729 = vcmask 195584
    %v2730 = vsel %vm2729, %v2727, %v2719
    %v2731 = vsel %vm2729, %v2728, %v2721
    %v2732 = vld [vmem:[%s5] sm:$0xff]
    %v2733 = vld [vmem:[%s5 + $0x8] sm:$0xff]
    %v2734 = vld [vmem:[%s5 + $0x10] sm:$0xff]
    %v2735 = vld [vmem:[%s5 + $0x18] sm:$0xff]
    %v2737 = vsel %vm150, %v2730, 0
    %v2740 = vsel %vm150, %v2731, 0
    %2742 = vmatprep.subr.mxu0 0.0
    %2743 = vmatpush1.msra.mxu0 0.0
    %2744 = vmatprep.subr.mxu0 0.0
    %2745 = vmatpush1.msra.mxu0 0.0
    %2746 = vmatprep.subr.mxu0 0.0
    %2747 = vmatpush1.msra.mxu0 0.0
    %2748 = vmatprep.subr.mxu0 0.0
    %2749 = vmatpush1.msra.mxu0 0.0
    %2750 = vmatprep.subr.mxu0 0.0
    %2751 = vmatpush1.msra.mxu0 0.0
    %2752 = vmatprep.subr.mxu0 0.0
    %2753 = vmatpush1.msra.mxu0 0.0
    %2754 = vmatprep.subr.mxu0 0.0
    %2755 = vmatpush1.msra.mxu0 0.0
    %2756 = vmatprep.subr.mxu0 0.0
    %2757 = vmatpush1.msra.mxu0 0.0
    %2758 = vmatprep.subr.mxu0 0.0
    %2759 = vmatpush1.msra.mxu0 0.0
    %2760 = vmatprep.subr.mxu0 0.0
    %2761 = vmatpush1.msra.mxu0 0.0
    %2762 = vmatprep.subr.mxu0 0.0
    %2763 = vmatpush1.msra.mxu0 0.0
    %2764 = vmatprep.subr.mxu0 0.0
    %2765 = vmatpush1.msra.mxu0 0.0
    %2766 = vmatprep.subr.mxu0 0.0
    %2767 = vmatpush1.msra.mxu0 %v2735
    %2768 = vmatprep.subr.mxu0 0.0
    %2769 = vmatpush1.msra.mxu0 %v2734
    %2770 = vmatprep.subr.mxu0 0.0
    %2771 = vmatpush1.msra.mxu0 %v2733
    %2772 = vmatprep.subr.mxu0 0.0
    %2773 = vmatpush1.msra.mxu0 %v2732
    %2774 = vmatprep.subr.mxu0 0.0
    %2775 = vmatpush2.msra.mxu0 0.0
    %2776 = vmatprep.subr.mxu0 0.0
    %2777 = vmatpush2.msra.mxu0 0.0
    %2778 = vmatprep.subr.mxu0 0.0
    %2779 = vmatpush2.msra.mxu0 0.0
    %2780 = vmatprep.subr.mxu0 0.0
    %2781 = vmatpush2.msra.mxu0 0.0
    %2782 = vmatprep.subr.mxu0 0.0
    %2783 = vmatpush2.msra.mxu0 0.0
    %2784 = vmatprep.subr.mxu0 0.0
    %2785 = vmatpush2.msra.mxu0 0.0
    %2786 = vmatprep.subr.mxu0 0.0
    %2787 = vmatpush2.msra.mxu0 0.0
    %2788 = vmatprep.subr.mxu0 0.0
    %2789 = vmatpush2.msra.mxu0 0.0
    %2790 = vmatprep.subr.mxu0 0.0
    %2791 = vmatpush2.msra.mxu0 0.0
    %2792 = vmatprep.subr.mxu0 0.0
    %2793 = vmatpush2.msra.mxu0 0.0
    %2794 = vmatprep.subr.mxu0 0.0
    %2795 = vmatpush2.msra.mxu0 0.0
    %2796 = vmatprep.subr.mxu0 0.0
    %2797 = vmatpush2.msra.mxu0 0.0
    %2798 = vmatprep.subr.mxu0 0.0
    %2799 = vmatpush2.msra.mxu0 0.0
    %2800 = vmatprep.subr.mxu0 0.0
    %2801 = vmatpush2.msra.mxu0 0.0
    %2802 = vmatprep.subr.mxu0 0.0
    %2803 = vmatpush2.msra.mxu0 0.0
    %2804 = vmatprep.subr.mxu0 0.0
    %2805 = vmatpush2.msra.mxu0 0.0
    %2806 = vmatprep.mubr.f32.mxu0 0.0
    %2807 = vmatmul.mubr.f32.gmra.mxu0 %v2737
    %v2808 = vpop.f32.mrf.mxu0
    %v2809 = vadd.f32 0.0, %v2808
    %v2810 = vpop.f32.mrf.mxu0
    %2811 = vmatprep.mubr.f32.mxu0 0.0
    %2812 = vmatmul.mubr.f32.gmra.mxu0 %v2740
    %v2813 = vpop.f32.mrf.mxu0
    %v2814 = vadd.f32 0.0, %v2813
    %v2815 = vpop.f32.mrf.mxu0
    %2816 = vdwg.mxu0
    %v2817 = vadd.f32 %v141, %v2809
    %v2818 = vadd.f32 %v146, %v2814
    %v2819 = vlaneseq
    %v2820 = vshrl.u32 %v2819, 7
    %v2821 = vsub.s32 4, %v2820
    %v2822 = vrot.slane %v149, %v2821
    %v2823 = vadd.f32 %v2817, %v2822
    %v2824 = vadd.f32 %v2818, %v2822
    %v2825 = vsel %vm150, %v2823, 0.0
    %2826 = vadd.xlane.f32.xlu0 %v2825
    %v2827 = vpop.xlane.xlu0 %2826
    %v2828 = vsel %vm150, %v2824, 0.0
    %2829 = vadd.xlane.f32.xlu0 %v2828
    %v2830 = vpop.xlane.xlu0 %2829
    %v2831 = vmul.f32 %v2827, %v157
    %v2832 = vmul.f32 %v2830, %v157
    %v2833 = vsub.f32 %v2823, %v2831
    %v2834 = vsub.f32 %v2824, %v2832
    %v2835 = vmul.f32 %v2833, %v2833
    %v2836 = vmul.f32 %v2834, %v2834
    %v2837 = vsel %vm150, %v2835, 0.0
    %2838 = vadd.xlane.f32.xlu0 %v2837
    %v2839 = vpop.xlane.xlu0 %2838
    %v2840 = vsel %vm150, %v2836, 0.0
    %2841 = vadd.xlane.f32.xlu0 %v2840
    %v2842 = vpop.xlane.xlu0 %2841
    %v2843 = vmul.f32 %v2839, %v157
    %v2844 = vmul.f32 %v2842, %v157
    %v2845 = vadd.f32 %v2843, 1e-06
    %v2846 = vadd.f32 %v2844, 1e-06
    %v2847 = vrsqrt.pop %v2845
    %v2848 = vrsqrt.pop %v2846
    %v2849 = vmul.f32 %v2833, %v2847
    %v2850 = vmul.f32 %v2834, %v2848
    %v2851 = vlaneseq
    %v2852 = vshrl.u32 %v2851, 7
    %v2853 = vsub.s32 2, %v2852
    %v2854 = vrot.slane %v149, %v2853
    %v2855 = vmul.f32 %v2849, %v2854
    %v2856 = vmul.f32 %v2850, %v2854
    %v2857 = vlaneseq
    %v2858 = vshrl.u32 %v2857, 7
    %v2859 = vsub.s32 3, %v2858
    %v2860 = vrot.slane %v149, %v2859
    %v2861 = vadd.f32 %v2855, %v2860
    %v2862 = vadd.f32 %v2856, %v2860
    %v2863 = vld [vmem:[%s6] sm:$0xff]
    %v2864 = vld [vmem:[%s6 + $0x8] sm:$0xff]
    %v2865 = vld [vmem:[%s6 + $0x10] sm:$0xff]
    %v2866 = vld [vmem:[%s6 + $0x18] sm:$0xff]
    %v2867 = vlaneseq
    %v2868 = vshrl.u32 %v2867, 7
    %v2869 = vsub.s32 6, %v2868
    %v2870 = vrot.slane %v149, %v2869
    %v2872 = vsel %vm150, %v2861, 0
    %v2875 = vsel %vm150, %v2862, 0
    %2877 = vmatprep.subr.mxu0 0.0
    %2878 = vmatpush1.msra.mxu0 0.0
    %2879 = vmatprep.subr.mxu0 0.0
    %2880 = vmatpush1.msra.mxu0 0.0
    %2881 = vmatprep.subr.mxu0 0.0
    %2882 = vmatpush1.msra.mxu0 0.0
    %2883 = vmatprep.subr.mxu0 0.0
    %2884 = vmatpush1.msra.mxu0 0.0
    %2885 = vmatprep.subr.mxu0 0.0
    %2886 = vmatpush1.msra.mxu0 0.0
    %2887 = vmatprep.subr.mxu0 0.0
    %2888 = vmatpush1.msra.mxu0 0.0
    %2889 = vmatprep.subr.mxu0 0.0
    %2890 = vmatpush1.msra.mxu0 0.0
    %2891 = vmatprep.subr.mxu0 0.0
    %2892 = vmatpush1.msra.mxu0 0.0
    %2893 = vmatprep.subr.mxu0 0.0
    %2894 = vmatpush1.msra.mxu0 0.0
    %2895 = vmatprep.subr.mxu0 0.0
    %2896 = vmatpush1.msra.mxu0 0.0
    %2897 = vmatprep.subr.mxu0 0.0
    %2898 = vmatpush1.msra.mxu0 0.0
    %2899 = vmatprep.subr.mxu0 0.0
    %2900 = vmatpush1.msra.mxu0 0.0
    %2901 = vmatprep.subr.mxu0 0.0
    %2902 = vmatpush1.msra.mxu0 %v2866
    %2903 = vmatprep.subr.mxu0 0.0
    %2904 = vmatpush1.msra.mxu0 %v2865
    %2905 = vmatprep.subr.mxu0 0.0
    %2906 = vmatpush1.msra.mxu0 %v2864
    %2907 = vmatprep.subr.mxu0 0.0
    %2908 = vmatpush1.msra.mxu0 %v2863
    %2909 = vmatprep.subr.mxu0 0.0
    %2910 = vmatpush2.msra.mxu0 0.0
    %2911 = vmatprep.subr.mxu0 0.0
    %2912 = vmatpush2.msra.mxu0 0.0
    %2913 = vmatprep.subr.mxu0 0.0
    %2914 = vmatpush2.msra.mxu0 0.0
    %2915 = vmatprep.subr.mxu0 0.0
    %2916 = vmatpush2.msra.mxu0 0.0
    %2917 = vmatprep.subr.mxu0 0.0
    %2918 = vmatpush2.msra.mxu0 0.0
    %2919 = vmatprep.subr.mxu0 0.0
    %2920 = vmatpush2.msra.mxu0 0.0
    %2921 = vmatprep.subr.mxu0 0.0
    %2922 = vmatpush2.msra.mxu0 0.0
    %2923 = vmatprep.subr.mxu0 0.0
    %2924 = vmatpush2.msra.mxu0 0.0
    %2925 = vmatprep.subr.mxu0 0.0
    %2926 = vmatpush2.msra.mxu0 0.0
    %2927 = vmatprep.subr.mxu0 0.0
    %2928 = vmatpush2.msra.mxu0 0.0
    %2929 = vmatprep.subr.mxu0 0.0
    %2930 = vmatpush2.msra.mxu0 0.0
    %2931 = vmatprep.subr.mxu0 0.0
    %2932 = vmatpush2.msra.mxu0 0.0
    %2933 = vmatprep.subr.mxu0 0.0
    %2934 = vmatpush2.msra.mxu0 0.0
    %2935 = vmatprep.subr.mxu0 0.0
    %2936 = vmatpush2.msra.mxu0 0.0
    %2937 = vmatprep.subr.mxu0 0.0
    %2938 = vmatpush2.msra.mxu0 0.0
    %2939 = vmatprep.subr.mxu0 0.0
    %2940 = vmatpush2.msra.mxu0 0.0
    %2941 = vmatprep.mubr.f32.mxu0 0.0
    %2942 = vmatmul.mubr.f32.gmra.mxu0 %v2872
    %v2943 = vpop.f32.mrf.mxu0
    %v2944 = vadd.f32 %v2870, %v2943
    %v2945 = vpop.f32.mrf.mxu0
    %2946 = vmatprep.mubr.f32.mxu0 0.0
    %2947 = vmatmul.mubr.f32.gmra.mxu0 %v2875
    %v2948 = vpop.f32.mrf.mxu0
    %v2949 = vadd.f32 %v2870, %v2948
    %v2950 = vpop.f32.mrf.mxu0
    %2951 = vdwg.mxu0
    %v2952 = vmul.f32 %v2944, %v2944
    %v2953 = vmul.f32 %v2949, %v2949
    %v2954 = vmul.f32 %v2944, %v2952
    %v2955 = vmul.f32 %v2949, %v2953
    %v2956 = vmul.f32 %v2954, 0.044715
    %v2957 = vmul.f32 %v2955, 0.044715
    %v2958 = vadd.f32 %v2944, %v2956
    %v2959 = vadd.f32 %v2949, %v2957
    %v2960 = vmul.f32 %v2958, 0.7978846
    %v2961 = vmul.f32 %v2959, 0.7978846
    %v2962 = vtanh.pop %v2960
    %v2963 = vtanh.pop %v2961
    %v2964 = vadd.f32 %v2962, 1.0
    %v2965 = vadd.f32 %v2963, 1.0
    %v2966 = vmul.f32 %v2964, 0.5
    %v2967 = vmul.f32 %v2965, 0.5
    %v2968 = vmul.f32 %v2944, %v2966
    %v2969 = vmul.f32 %v2949, %v2967
    %v2970 = vld [vmem:[%s7] sm:$0xff]
    %v2971 = vld [vmem:[%s7 + $0x8] sm:$0xff]
    %v2972 = vld [vmem:[%s7 + $0x10] sm:$0xff]
    %v2973 = vld [vmem:[%s7 + $0x18] sm:$0xff]
    %v2974 = vld [vmem:[%s7 + $0x20] sm:$0xff]
    %v2975 = vld [vmem:[%s7 + $0x28] sm:$0xff]
    %v2976 = vld [vmem:[%s7 + $0x30] sm:$0xff]
    %v2977 = vld [vmem:[%s7 + $0x38] sm:$0xff]
    %v2978 = vld [vmem:[%s7 + $0x40] sm:$0xff]
    %v2979 = vld [vmem:[%s7 + $0x48] sm:$0xff]
    %v2980 = vld [vmem:[%s7 + $0x50] sm:$0xff]
    %v2981 = vld [vmem:[%s7 + $0x58] sm:$0xff]
    %v2982 = vld [vmem:[%s7 + $0x60] sm:$0xff]
    %v2983 = vld [vmem:[%s7 + $0x68] sm:$0xff]
    %v2984 = vld [vmem:[%s7 + $0x70] sm:$0xff]
    %v2985 = vld [vmem:[%s7 + $0x78] sm:$0xff]
    %2986 = vmatprep.subr.mxu0 0.0
    %2987 = vmatpush1.msra.mxu0 %v2985
    %2988 = vmatprep.subr.mxu0 0.0
    %2989 = vmatpush1.msra.mxu0 %v2984
    %2990 = vmatprep.subr.mxu0 0.0
    %2991 = vmatpush1.msra.mxu0 %v2983
    %2992 = vmatprep.subr.mxu0 0.0
    %2993 = vmatpush1.msra.mxu0 %v2982
    %2994 = vmatprep.subr.mxu0 0.0
    %2995 = vmatpush1.msra.mxu0 %v2981
    %2996 = vmatprep.subr.mxu0 0.0
    %2997 = vmatpush1.msra.mxu0 %v2980
    %2998 = vmatprep.subr.mxu0 0.0
    %2999 = vmatpush1.msra.mxu0 %v2979
    %3000 = vmatprep.subr.mxu0 0.0
    %3001 = vmatpush1.msra.mxu0 %v2978
    %3002 = vmatprep.subr.mxu0 0.0
    %3003 = vmatpush1.msra.mxu0 %v2977
    %3004 = vmatprep.subr.mxu0 0.0
    %3005 = vmatpush1.msra.mxu0 %v2976
    %3006 = vmatprep.subr.mxu0 0.0
    %3007 = vmatpush1.msra.mxu0 %v2975
    %3008 = vmatprep.subr.mxu0 0.0
    %3009 = vmatpush1.msra.mxu0 %v2974
    %3010 = vmatprep.subr.mxu0 0.0
    %3011 = vmatpush1.msra.mxu0 %v2973
    %3012 = vmatprep.subr.mxu0 0.0
    %3013 = vmatpush1.msra.mxu0 %v2972
    %3014 = vmatprep.subr.mxu0 0.0
    %3015 = vmatpush1.msra.mxu0 %v2971
    %3016 = vmatprep.subr.mxu0 0.0
    %3017 = vmatpush1.msra.mxu0 %v2970
    %3018 = vmatprep.subr.mxu0 0.0
    %3019 = vmatpush2.msra.mxu0 0.0
    %3020 = vmatprep.subr.mxu0 0.0
    %3021 = vmatpush2.msra.mxu0 0.0
    %3022 = vmatprep.subr.mxu0 0.0
    %3023 = vmatpush2.msra.mxu0 0.0
    %3024 = vmatprep.subr.mxu0 0.0
    %3025 = vmatpush2.msra.mxu0 0.0
    %3026 = vmatprep.subr.mxu0 0.0
    %3027 = vmatpush2.msra.mxu0 0.0
    %3028 = vmatprep.subr.mxu0 0.0
    %3029 = vmatpush2.msra.mxu0 0.0
    %3030 = vmatprep.subr.mxu0 0.0
    %3031 = vmatpush2.msra.mxu0 0.0
    %3032 = vmatprep.subr.mxu0 0.0
    %3033 = vmatpush2.msra.mxu0 0.0
    %3034 = vmatprep.subr.mxu0 0.0
    %3035 = vmatpush2.msra.mxu0 0.0
    %3036 = vmatprep.subr.mxu0 0.0
    %3037 = vmatpush2.msra.mxu0 0.0
    %3038 = vmatprep.subr.mxu0 0.0
    %3039 = vmatpush2.msra.mxu0 0.0
    %3040 = vmatprep.subr.mxu0 0.0
    %3041 = vmatpush2.msra.mxu0 0.0
    %3042 = vmatprep.subr.mxu0 0.0
    %3043 = vmatpush2.msra.mxu0 0.0
    %3044 = vmatprep.subr.mxu0 0.0
    %3045 = vmatpush2.msra.mxu0 0.0
    %3046 = vmatprep.subr.mxu0 0.0
    %3047 = vmatpush2.msra.mxu0 0.0
    %3048 = vmatprep.subr.mxu0 0.0
    %3049 = vmatpush2.msra.mxu0 0.0
    %3050 = vmatprep.mubr.f32.mxu0 0.0
    %3051 = vmatmul.mubr.f32.gmra.mxu0 %v2968
    %v3052 = vpop.f32.mrf.mxu0
    %v3053 = vadd.f32 0.0, %v3052
    %v3054 = vpop.f32.mrf.mxu0
    %3055 = vmatprep.mubr.f32.mxu0 0.0
    %3056 = vmatmul.mubr.f32.gmra.mxu0 %v2969
    %v3057 = vpop.f32.mrf.mxu0
    %v3058 = vadd.f32 0.0, %v3057
    %v3059 = vpop.f32.mrf.mxu0
    %3060 = vdwg.mxu0
    %v3061 = vadd.f32 %v2823, %v3053
    %v3062 = vadd.f32 %v2824, %v3058
    %v3063 = vlaneseq
    %v3064 = vshrl.u32 %v3063, 7
    %v3065 = vsub.s32 5, %v3064
    %v3066 = vrot.slane %v149, %v3065
    %v3067 = vadd.f32 %v3061, %v3066
    %v3068 = vadd.f32 %v3062, %v3066
    %s3069 = scalar_lea.vmem %s8, 8
    %v3070 = vld [vmem:[%s3069] sm:$0xff]
    %v3071 = vsel %vm150, %v3067, 0.0
    %3072 = vadd.xlane.f32.xlu0 %v3071
    %v3073 = vpop.xlane.xlu0 %3072
    %v3074 = vsel %vm150, %v3068, 0.0
    %3075 = vadd.xlane.f32.xlu0 %v3074
    %v3076 = vpop.xlane.xlu0 %3075
    %v3077 = vmul.f32 %v3073, %v157
    %v3078 = vmul.f32 %v3076, %v157
    %v3079 = vsub.f32 %v3067, %v3077
    %v3080 = vsub.f32 %v3068, %v3078
    %v3081 = vmul.f32 %v3079, %v3079
    %v3082 = vmul.f32 %v3080, %v3080
    %v3083 = vsel %vm150, %v3081, 0.0
    %3084 = vadd.xlane.f32.xlu0 %v3083
    %v3085 = vpop.xlane.xlu0 %3084
    %v3086 = vsel %vm150, %v3082, 0.0
    %3087 = vadd.xlane.f32.xlu0 %v3086
    %v3088 = vpop.xlane.xlu0 %3087
    %v3089 = vmul.f32 %v3085, %v157
    %v3090 = vmul.f32 %v3088, %v157
    %v3091 = vadd.f32 %v3089, 1e-06
    %v3092 = vadd.f32 %v3090, 1e-06
    %v3093 = vrsqrt.pop %v3091
    %v3094 = vrsqrt.pop %v3092
    %v3095 = vmul.f32 %v3079, %v3093
    %v3096 = vmul.f32 %v3080, %v3094
    %v3097 = vlaneseq
    %v3098 = vshrl.u32 %v3097, 7
    %v3099 = vsub.s32 0, %v3098
    %v3100 = vrot.slane %v3070, %v3099
    %v3101 = vmul.f32 %v3095, %v3100
    %v3102 = vmul.f32 %v3096, %v3100
    %v3103 = vlaneseq
    %v3104 = vshrl.u32 %v3103, 7
    %v3105 = vsub.s32 1, %v3104
    %v3106 = vrot.slane %v3070, %v3105
    %v3107 = vadd.f32 %v3101, %v3106
    %v3108 = vadd.f32 %v3102, %v3106
    %s3109 = scalar_lea.vmem %s4, 32
    %v3110 = vld [vmem:[%s3109] sm:$0xff]
    %v3111 = vld [vmem:[%s3109 + $0x8] sm:$0xff]
    %v3112 = vld [vmem:[%s3109 + $0x10] sm:$0xff]
    %v3113 = vld [vmem:[%s3109 + $0x18] sm:$0xff]
    %v3114 = vlaneseq
    %v3115 = vshrl.u32 %v3114, 7
    %v3116 = vsub.s32 7, %v3115
    %v3117 = vrot.slane %v3070, %v3116
    %v3119 = vsel %vm150, %v3107, 0
    %v3122 = vsel %vm150, %v3108, 0
    %3124 = vmatprep.subr.mxu0 0.0
    %3125 = vmatpush1.msra.mxu0 0.0
    %3126 = vmatprep.subr.mxu0 0.0
    %3127 = vmatpush1.msra.mxu0 0.0
    %3128 = vmatprep.subr.mxu0 0.0
    %3129 = vmatpush1.msra.mxu0 0.0
    %3130 = vmatprep.subr.mxu0 0.0
    %3131 = vmatpush1.msra.mxu0 0.0
    %3132 = vmatprep.subr.mxu0 0.0
    %3133 = vmatpush1.msra.mxu0 0.0
    %3134 = vmatprep.subr.mxu0 0.0
    %3135 = vmatpush1.msra.mxu0 0.0
    %3136 = vmatprep.subr.mxu0 0.0
    %3137 = vmatpush1.msra.mxu0 0.0
    %3138 = vmatprep.subr.mxu0 0.0
    %3139 = vmatpush1.msra.mxu0 0.0
    %3140 = vmatprep.subr.mxu0 0.0
    %3141 = vmatpush1.msra.mxu0 0.0
    %3142 = vmatprep.subr.mxu0 0.0
    %3143 = vmatpush1.msra.mxu0 0.0
    %3144 = vmatprep.subr.mxu0 0.0
    %3145 = vmatpush1.msra.mxu0 0.0
    %3146 = vmatprep.subr.mxu0 0.0
    %3147 = vmatpush1.msra.mxu0 0.0
    %3148 = vmatprep.subr.mxu0 0.0
    %3149 = vmatpush1.msra.mxu0 %v3113
    %3150 = vmatprep.subr.mxu0 0.0
    %3151 = vmatpush1.msra.mxu0 %v3112
    %3152 = vmatprep.subr.mxu0 0.0
    %3153 = vmatpush1.msra.mxu0 %v3111
    %3154 = vmatprep.subr.mxu0 0.0
    %3155 = vmatpush1.msra.mxu0 %v3110
    %3156 = vmatprep.subr.mxu0 0.0
    %3157 = vmatpush2.msra.mxu0 0.0
    %3158 = vmatprep.subr.mxu0 0.0
    %3159 = vmatpush2.msra.mxu0 0.0
    %3160 = vmatprep.subr.mxu0 0.0
    %3161 = vmatpush2.msra.mxu0 0.0
    %3162 = vmatprep.subr.mxu0 0.0
    %3163 = vmatpush2.msra.mxu0 0.0
    %3164 = vmatprep.subr.mxu0 0.0
    %3165 = vmatpush2.msra.mxu0 0.0
    %3166 = vmatprep.subr.mxu0 0.0
    %3167 = vmatpush2.msra.mxu0 0.0
    %3168 = vmatprep.subr.mxu0 0.0
    %3169 = vmatpush2.msra.mxu0 0.0
    %3170 = vmatprep.subr.mxu0 0.0
    %3171 = vmatpush2.msra.mxu0 0.0
    %3172 = vmatprep.subr.mxu0 0.0
    %3173 = vmatpush2.msra.mxu0 0.0
    %3174 = vmatprep.subr.mxu0 0.0
    %3175 = vmatpush2.msra.mxu0 0.0
    %3176 = vmatprep.subr.mxu0 0.0
    %3177 = vmatpush2.msra.mxu0 0.0
    %3178 = vmatprep.subr.mxu0 0.0
    %3179 = vmatpush2.msra.mxu0 0.0
    %3180 = vmatprep.subr.mxu0 0.0
    %3181 = vmatpush2.msra.mxu0 0.0
    %3182 = vmatprep.subr.mxu0 0.0
    %3183 = vmatpush2.msra.mxu0 0.0
    %3184 = vmatprep.subr.mxu0 0.0
    %3185 = vmatpush2.msra.mxu0 0.0
    %3186 = vmatprep.subr.mxu0 0.0
    %3187 = vmatpush2.msra.mxu0 0.0
    %3188 = vmatprep.mubr.f32.mxu0 0.0
    %3189 = vmatmul.mubr.f32.gmra.mxu0 %v3119
    %v3190 = vpop.f32.mrf.mxu0
    %v3191 = vadd.f32 %v3117, %v3190
    %v3192 = vpop.f32.mrf.mxu0
    %3193 = vmatprep.mubr.f32.mxu0 0.0
    %3194 = vmatmul.mubr.f32.gmra.mxu0 %v3122
    %v3195 = vpop.f32.mrf.mxu0
    %v3196 = vadd.f32 %v3117, %v3195
    %v3197 = vpop.f32.mrf.mxu0
    %3198 = vdwg.mxu0
    %v3199 = vmul.f32 %v3191, 0.35355338
    %v3200 = vmul.f32 %v3196, 0.35355338
    %3203 = vrot.lane.b32.xlu0 %v3199, 120
    %v3204 = vpop.permute.xlu0 %3203
    %3205 = vrot.lane.b32.xlu0 %v3200, 120
    %v3206 = vpop.permute.xlu0 %3205
    %3209 = vrot.lane.b32.xlu0 %v3199, 112
    %v3210 = vpop.permute.xlu0 %3209
    %3211 = vrot.lane.b32.xlu0 %v3200, 112
    %v3212 = vpop.permute.xlu0 %3211
    %3215 = vrot.lane.b32.xlu0 %v3199, 104
    %v3216 = vpop.permute.xlu0 %3215
    %3217 = vrot.lane.b32.xlu0 %v3200, 104
    %v3218 = vpop.permute.xlu0 %3217
    %v3221 = vcombine.low %v3199, %v3210
    %v3222 = vcombine.high %v3199, %v3210
    %v3224 = vunpack.c.l.s4 1983009808
    %v3225 = vunpack.c.0.s8 %v3224
    %v3226 = vlaneseq
    %v3227 = vshrl.u32 %v3226, 7
    %v3228 = vsub.s32 %v3225, %v3227
    %v3229 = vrot.slane %v3221, %v3228
    %v3231 = vunpack.c.l.s4 1983009808
    %v3232 = vunpack.c.0.s8 %v3231
    %v3233 = vlaneseq
    %v3234 = vshrl.u32 %v3233, 7
    %v3235 = vsub.s32 %v3232, %v3234
    %v3236 = vrot.slane %v3222, %v3235
    %v3237 = vcombine.low %v3204, %v3216
    %v3238 = vcombine.high %v3204, %v3216
    %v3240 = vunpack.c.l.s4 1983009808
    %v3241 = vunpack.c.0.s8 %v3240
    %v3242 = vlaneseq
    %v3243 = vshrl.u32 %v3242, 7
    %v3244 = vsub.s32 %v3241, %v3243
    %v3245 = vrot.slane %v3237, %v3244
    %v3247 = vunpack.c.l.s4 1983009808
    %v3248 = vunpack.c.0.s8 %v3247
    %v3249 = vlaneseq
    %v3250 = vshrl.u32 %v3249, 7
    %v3251 = vsub.s32 %v3248, %v3250
    %v3252 = vrot.slane %v3238, %v3251
    %v3253 = vcombine.low %v3229, %v3245
    %v3254 = vcombine.high %v3229, %v3245
    %v3256 = vunpack.c.l.s4 1934713408
    %v3257 = vunpack.c.0.s8 %v3256
    %v3258 = vlaneseq
    %v3259 = vshrl.u32 %v3258, 7
    %v3260 = vsub.s32 %v3257, %v3259
    %v3261 = vrot.slane %v3253, %v3260
    %v3263 = vunpack.c.l.s4 1934713408
    %v3264 = vunpack.c.0.s8 %v3263
    %v3265 = vlaneseq
    %v3266 = vshrl.u32 %v3265, 7
    %v3267 = vsub.s32 %v3264, %v3266
    %v3268 = vrot.slane %v3254, %v3267
    %v3269 = vcombine.low %v3236, %v3252
    %v3270 = vcombine.high %v3236, %v3252
    %v3272 = vunpack.c.l.s4 1934713408
    %v3273 = vunpack.c.0.s8 %v3272
    %v3274 = vlaneseq
    %v3275 = vshrl.u32 %v3274, 7
    %v3276 = vsub.s32 %v3273, %v3275
    %v3277 = vrot.slane %v3269, %v3276
    %v3279 = vunpack.c.l.s4 1934713408
    %v3280 = vunpack.c.0.s8 %v3279
    %v3281 = vlaneseq
    %v3282 = vshrl.u32 %v3281, 7
    %v3283 = vsub.s32 %v3280, %v3282
    %v3284 = vrot.slane %v3270, %v3283
    %v3285 = vcombine.high %v3261, 0.0
    %v3286 = vcombine.high %v3268, 0.0
    %v3287 = vcombine.high %v3277, 0.0
    %v3288 = vcombine.high %v3284, 0.0
    %v3289 = vcombine.low %v3200, %v3212
    %v3290 = vcombine.high %v3200, %v3212
    %v3292 = vunpack.c.l.s4 1983009808
    %v3293 = vunpack.c.0.s8 %v3292
    %v3294 = vlaneseq
    %v3295 = vshrl.u32 %v3294, 7
    %v3296 = vsub.s32 %v3293, %v3295
    %v3297 = vrot.slane %v3289, %v3296
    %v3299 = vunpack.c.l.s4 1983009808
    %v3300 = vunpack.c.0.s8 %v3299
    %v3301 = vlaneseq
    %v3302 = vshrl.u32 %v3301, 7
    %v3303 = vsub.s32 %v3300, %v3302
    %v3304 = vrot.slane %v3290, %v3303
    %v3305 = vcombine.low %v3206, %v3218
    %v3306 = vcombine.high %v3206, %v3218
    %v3308 = vunpack.c.l.s4 1983009808
    %v3309 = vunpack.c.0.s8 %v3308
    %v3310 = vlaneseq
    %v3311 = vshrl.u32 %v3310, 7
    %v3312 = vsub.s32 %v3309, %v3311
    %v3313 = vrot.slane %v3305, %v3312
    %v3315 = vunpack.c.l.s4 1983009808
    %v3316 = vunpack.c.0.s8 %v3315
    %v3317 = vlaneseq
    %v3318 = vshrl.u32 %v3317, 7
    %v3319 = vsub.s32 %v3316, %v3318
    %v3320 = vrot.slane %v3306, %v3319
    %v3321 = vcombine.low %v3297, %v3313
    %v3322 = vcombine.high %v3297, %v3313
    %v3324 = vunpack.c.l.s4 1934713408
    %v3325 = vunpack.c.0.s8 %v3324
    %v3326 = vlaneseq
    %v3327 = vshrl.u32 %v3326, 7
    %v3328 = vsub.s32 %v3325, %v3327
    %v3329 = vrot.slane %v3321, %v3328
    %v3331 = vunpack.c.l.s4 1934713408
    %v3332 = vunpack.c.0.s8 %v3331
    %v3333 = vlaneseq
    %v3334 = vshrl.u32 %v3333, 7
    %v3335 = vsub.s32 %v3332, %v3334
    %v3336 = vrot.slane %v3322, %v3335
    %v3337 = vcombine.low %v3304, %v3320
    %v3338 = vcombine.high %v3304, %v3320
    %v3340 = vunpack.c.l.s4 1934713408
    %v3341 = vunpack.c.0.s8 %v3340
    %v3342 = vlaneseq
    %v3343 = vshrl.u32 %v3342, 7
    %v3344 = vsub.s32 %v3341, %v3343
    %v3345 = vrot.slane %v3337, %v3344
    %v3347 = vunpack.c.l.s4 1934713408
    %v3348 = vunpack.c.0.s8 %v3347
    %v3349 = vlaneseq
    %v3350 = vshrl.u32 %v3349, 7
    %v3351 = vsub.s32 %v3348, %v3350
    %v3352 = vrot.slane %v3338, %v3351
    %v3353 = vcombine.high %v3329, 0.0
    %v3354 = vcombine.high %v3336, 0.0
    %v3355 = vcombine.high %v3345, 0.0
    %v3356 = vcombine.high %v3352, 0.0
    %v3357 = vcombine.low %v3261, %v3268
    %v3359 = vunpack.c.l.s4 1983009808
    %v3360 = vunpack.c.0.s8 %v3359
    %v3361 = vlaneseq
    %v3362 = vshrl.u32 %v3361, 7
    %v3363 = vsub.s32 %v3360, %v3362
    %v3364 = vrot.slane %v3357, %v3363
    %v3365 = vcombine.low %v3285, %v3286
    %v3367 = vunpack.c.l.s4 1983009808
    %v3368 = vunpack.c.0.s8 %v3367
    %v3369 = vlaneseq
    %v3370 = vshrl.u32 %v3369, 7
    %v3371 = vsub.s32 %v3368, %v3370
    %v3372 = vrot.slane %v3365, %v3371
    %v3373 = vcombine.low %v3277, %v3284
    %v3375 = vunpack.c.l.s4 1983009808
    %v3376 = vunpack.c.0.s8 %v3375
    %v3377 = vlaneseq
    %v3378 = vshrl.u32 %v3377, 7
    %v3379 = vsub.s32 %v3376, %v3378
    %v3380 = vrot.slane %v3373, %v3379
    %v3381 = vcombine.low %v3287, %v3288
    %v3383 = vunpack.c.l.s4 1983009808
    %v3384 = vunpack.c.0.s8 %v3383
    %v3385 = vlaneseq
    %v3386 = vshrl.u32 %v3385, 7
    %v3387 = vsub.s32 %v3384, %v3386
    %v3388 = vrot.slane %v3381, %v3387
    %v3389 = vcombine.low %v3364, %v3372
    %v3390 = vcombine.high %v3364, %v3372
    %v3392 = vunpack.c.l.s4 1934713408
    %v3393 = vunpack.c.0.s8 %v3392
    %v3394 = vlaneseq
    %v3395 = vshrl.u32 %v3394, 7
    %v3396 = vsub.s32 %v3393, %v3395
    %v3397 = vrot.slane %v3389, %v3396
    %v3399 = vunpack.c.l.s4 1934713408
    %v3400 = vunpack.c.0.s8 %v3399
    %v3401 = vlaneseq
    %v3402 = vshrl.u32 %v3401, 7
    %v3403 = vsub.s32 %v3400, %v3402
    %v3404 = vrot.slane %v3390, %v3403
    %v3405 = vcombine.low %v3380, %v3388
    %v3406 = vcombine.high %v3380, %v3388
    %v3408 = vunpack.c.l.s4 1934713408
    %v3409 = vunpack.c.0.s8 %v3408
    %v3410 = vlaneseq
    %v3411 = vshrl.u32 %v3410, 7
    %v3412 = vsub.s32 %v3409, %v3411
    %v3413 = vrot.slane %v3405, %v3412
    %v3415 = vunpack.c.l.s4 1934713408
    %v3416 = vunpack.c.0.s8 %v3415
    %v3417 = vlaneseq
    %v3418 = vshrl.u32 %v3417, 7
    %v3419 = vsub.s32 %v3416, %v3418
    %v3420 = vrot.slane %v3406, %v3419
    %v3421 = vcombine.low %v3397, %v3413
    %v3422 = vcombine.high %v3397, %v3413
    %v3423 = vcombine.low %v3404, %v3420
    %v3424 = vcombine.high %v3404, %v3420
    %v3425 = vcombine.low %v3329, %v3336
    %v3427 = vunpack.c.l.s4 1983009808
    %v3428 = vunpack.c.0.s8 %v3427
    %v3429 = vlaneseq
    %v3430 = vshrl.u32 %v3429, 7
    %v3431 = vsub.s32 %v3428, %v3430
    %v3432 = vrot.slane %v3425, %v3431
    %v3433 = vcombine.low %v3353, %v3354
    %v3435 = vunpack.c.l.s4 1983009808
    %v3436 = vunpack.c.0.s8 %v3435
    %v3437 = vlaneseq
    %v3438 = vshrl.u32 %v3437, 7
    %v3439 = vsub.s32 %v3436, %v3438
    %v3440 = vrot.slane %v3433, %v3439
    %v3441 = vcombine.low %v3345, %v3352
    %v3443 = vunpack.c.l.s4 1983009808
    %v3444 = vunpack.c.0.s8 %v3443
    %v3445 = vlaneseq
    %v3446 = vshrl.u32 %v3445, 7
    %v3447 = vsub.s32 %v3444, %v3446
    %v3448 = vrot.slane %v3441, %v3447
    %v3449 = vcombine.low %v3355, %v3356
    %v3451 = vunpack.c.l.s4 1983009808
    %v3452 = vunpack.c.0.s8 %v3451
    %v3453 = vlaneseq
    %v3454 = vshrl.u32 %v3453, 7
    %v3455 = vsub.s32 %v3452, %v3454
    %v3456 = vrot.slane %v3449, %v3455
    %v3457 = vcombine.low %v3432, %v3440
    %v3458 = vcombine.high %v3432, %v3440
    %v3460 = vunpack.c.l.s4 1934713408
    %v3461 = vunpack.c.0.s8 %v3460
    %v3462 = vlaneseq
    %v3463 = vshrl.u32 %v3462, 7
    %v3464 = vsub.s32 %v3461, %v3463
    %v3465 = vrot.slane %v3457, %v3464
    %v3467 = vunpack.c.l.s4 1934713408
    %v3468 = vunpack.c.0.s8 %v3467
    %v3469 = vlaneseq
    %v3470 = vshrl.u32 %v3469, 7
    %v3471 = vsub.s32 %v3468, %v3470
    %v3472 = vrot.slane %v3458, %v3471
    %v3473 = vcombine.low %v3448, %v3456
    %v3474 = vcombine.high %v3448, %v3456
    %v3476 = vunpack.c.l.s4 1934713408
    %v3477 = vunpack.c.0.s8 %v3476
    %v3478 = vlaneseq
    %v3479 = vshrl.u32 %v3478, 7
    %v3480 = vsub.s32 %v3477, %v3479
    %v3481 = vrot.slane %v3473, %v3480
    %v3483 = vunpack.c.l.s4 1934713408
    %v3484 = vunpack.c.0.s8 %v3483
    %v3485 = vlaneseq
    %v3486 = vshrl.u32 %v3485, 7
    %v3487 = vsub.s32 %v3484, %v3486
    %v3488 = vrot.slane %v3474, %v3487
    %v3489 = vcombine.low %v3465, %v3481
    %v3490 = vcombine.high %v3465, %v3481
    %v3491 = vcombine.low %v3472, %v3488
    %v3492 = vcombine.high %v3472, %v3488
    %3495 = vrot.lane.b32.xlu0 %v3191, 120
    %v3496 = vpop.permute.xlu0 %3495
    %3497 = vrot.lane.b32.xlu0 %v3196, 120
    %v3498 = vpop.permute.xlu0 %3497
    %3499 = vrot.lane.b32.xlu0 %v3191, 112
    %v3500 = vpop.permute.xlu0 %3499
    %3501 = vrot.lane.b32.xlu0 %v3196, 112
    %v3502 = vpop.permute.xlu0 %3501
    %3503 = vrot.lane.b32.xlu0 %v3191, 104
    %v3504 = vpop.permute.xlu0 %3503
    %3505 = vrot.lane.b32.xlu0 %v3196, 104
    %v3506 = vpop.permute.xlu0 %3505
    %3507 = vrot.lane.b32.xlu0 %v3191, 96
    %v3508 = vpop.permute.xlu0 %3507
    %3509 = vrot.lane.b32.xlu0 %v3196, 96
    %v3510 = vpop.permute.xlu0 %3509
    %3511 = vrot.lane.b32.xlu0 %v3496, 96
    %v3512 = vpop.permute.xlu0 %3511
    %3513 = vrot.lane.b32.xlu0 %v3498, 96
    %v3514 = vpop.permute.xlu0 %3513
    %3515 = vrot.lane.b32.xlu0 %v3500, 96
    %v3516 = vpop.permute.xlu0 %3515
    %3517 = vrot.lane.b32.xlu0 %v3502, 96
    %v3518 = vpop.permute.xlu0 %3517
    %3519 = vrot.lane.b32.xlu0 %v3504, 96
    %v3520 = vpop.permute.xlu0 %3519
    %3521 = vrot.lane.b32.xlu0 %v3506, 96
    %v3522 = vpop.permute.xlu0 %3521
    %v3531 = vcombine.low %v3508, %v3516
    %v3532 = vcombine.high %v3508, %v3516
    %v3534 = vunpack.c.l.s4 1983009808
    %v3535 = vunpack.c.0.s8 %v3534
    %v3536 = vlaneseq
    %v3537 = vshrl.u32 %v3536, 7
    %v3538 = vsub.s32 %v3535, %v3537
    %v3539 = vrot.slane %v3531, %v3538
    %v3541 = vunpack.c.l.s4 1983009808
    %v3542 = vunpack.c.0.s8 %v3541
    %v3543 = vlaneseq
    %v3544 = vshrl.u32 %v3543, 7
    %v3545 = vsub.s32 %v3542, %v3544
    %v3546 = vrot.slane %v3532, %v3545
    %v3547 = vcombine.low %v3512, %v3520
    %v3548 = vcombine.high %v3512, %v3520
    %v3550 = vunpack.c.l.s4 1983009808
    %v3551 = vunpack.c.0.s8 %v3550
    %v3552 = vlaneseq
    %v3553 = vshrl.u32 %v3552, 7
    %v3554 = vsub.s32 %v3551, %v3553
    %v3555 = vrot.slane %v3547, %v3554
    %v3557 = vunpack.c.l.s4 1983009808
    %v3558 = vunpack.c.0.s8 %v3557
    %v3559 = vlaneseq
    %v3560 = vshrl.u32 %v3559, 7
    %v3561 = vsub.s32 %v3558, %v3560
    %v3562 = vrot.slane %v3548, %v3561
    %v3563 = vcombine.low %v3539, %v3555
    %v3564 = vcombine.high %v3539, %v3555
    %v3566 = vunpack.c.l.s4 1934713408
    %v3567 = vunpack.c.0.s8 %v3566
    %v3568 = vlaneseq
    %v3569 = vshrl.u32 %v3568, 7
    %v3570 = vsub.s32 %v3567, %v3569
    %v3571 = vrot.slane %v3563, %v3570
    %v3573 = vunpack.c.l.s4 1934713408
    %v3574 = vunpack.c.0.s8 %v3573
    %v3575 = vlaneseq
    %v3576 = vshrl.u32 %v3575, 7
    %v3577 = vsub.s32 %v3574, %v3576
    %v3578 = vrot.slane %v3564, %v3577
    %v3579 = vcombine.low %v3546, %v3562
    %v3580 = vcombine.high %v3546, %v3562
    %v3582 = vunpack.c.l.s4 1934713408
    %v3583 = vunpack.c.0.s8 %v3582
    %v3584 = vlaneseq
    %v3585 = vshrl.u32 %v3584, 7
    %v3586 = vsub.s32 %v3583, %v3585
    %v3587 = vrot.slane %v3579, %v3586
    %v3589 = vunpack.c.l.s4 1934713408
    %v3590 = vunpack.c.0.s8 %v3589
    %v3591 = vlaneseq
    %v3592 = vshrl.u32 %v3591, 7
    %v3593 = vsub.s32 %v3590, %v3592
    %v3594 = vrot.slane %v3580, %v3593
    %v3595 = vcombine.high %v3571, 0.0
    %v3596 = vcombine.high %v3578, 0.0
    %v3597 = vcombine.high %v3587, 0.0
    %v3598 = vcombine.high %v3594, 0.0
    %v3599 = vcombine.low %v3510, %v3518
    %v3600 = vcombine.high %v3510, %v3518
    %v3602 = vunpack.c.l.s4 1983009808
    %v3603 = vunpack.c.0.s8 %v3602
    %v3604 = vlaneseq
    %v3605 = vshrl.u32 %v3604, 7
    %v3606 = vsub.s32 %v3603, %v3605
    %v3607 = vrot.slane %v3599, %v3606
    %v3609 = vunpack.c.l.s4 1983009808
    %v3610 = vunpack.c.0.s8 %v3609
    %v3611 = vlaneseq
    %v3612 = vshrl.u32 %v3611, 7
    %v3613 = vsub.s32 %v3610, %v3612
    %v3614 = vrot.slane %v3600, %v3613
    %v3615 = vcombine.low %v3514, %v3522
    %v3616 = vcombine.high %v3514, %v3522
    %v3618 = vunpack.c.l.s4 1983009808
    %v3619 = vunpack.c.0.s8 %v3618
    %v3620 = vlaneseq
    %v3621 = vshrl.u32 %v3620, 7
    %v3622 = vsub.s32 %v3619, %v3621
    %v3623 = vrot.slane %v3615, %v3622
    %v3625 = vunpack.c.l.s4 1983009808
    %v3626 = vunpack.c.0.s8 %v3625
    %v3627 = vlaneseq
    %v3628 = vshrl.u32 %v3627, 7
    %v3629 = vsub.s32 %v3626, %v3628
    %v3630 = vrot.slane %v3616, %v3629
    %v3631 = vcombine.low %v3607, %v3623
    %v3632 = vcombine.high %v3607, %v3623
    %v3634 = vunpack.c.l.s4 1934713408
    %v3635 = vunpack.c.0.s8 %v3634
    %v3636 = vlaneseq
    %v3637 = vshrl.u32 %v3636, 7
    %v3638 = vsub.s32 %v3635, %v3637
    %v3639 = vrot.slane %v3631, %v3638
    %v3641 = vunpack.c.l.s4 1934713408
    %v3642 = vunpack.c.0.s8 %v3641
    %v3643 = vlaneseq
    %v3644 = vshrl.u32 %v3643, 7
    %v3645 = vsub.s32 %v3642, %v3644
    %v3646 = vrot.slane %v3632, %v3645
    %v3647 = vcombine.low %v3614, %v3630
    %v3648 = vcombine.high %v3614, %v3630
    %v3650 = vunpack.c.l.s4 1934713408
    %v3651 = vunpack.c.0.s8 %v3650
    %v3652 = vlaneseq
    %v3653 = vshrl.u32 %v3652, 7
    %v3654 = vsub.s32 %v3651, %v3653
    %v3655 = vrot.slane %v3647, %v3654
    %v3657 = vunpack.c.l.s4 1934713408
    %v3658 = vunpack.c.0.s8 %v3657
    %v3659 = vlaneseq
    %v3660 = vshrl.u32 %v3659, 7
    %v3661 = vsub.s32 %v3658, %v3660
    %v3662 = vrot.slane %v3648, %v3661
    %v3663 = vcombine.high %v3639, 0.0
    %v3664 = vcombine.high %v3646, 0.0
    %v3665 = vcombine.high %v3655, 0.0
    %v3666 = vcombine.high %v3662, 0.0
    %v3667 = vcombine.low %v3571, %v3578
    %v3669 = vunpack.c.l.s4 1983009808
    %v3670 = vunpack.c.0.s8 %v3669
    %v3671 = vlaneseq
    %v3672 = vshrl.u32 %v3671, 7
    %v3673 = vsub.s32 %v3670, %v3672
    %v3674 = vrot.slane %v3667, %v3673
    %v3675 = vcombine.low %v3595, %v3596
    %v3677 = vunpack.c.l.s4 1983009808
    %v3678 = vunpack.c.0.s8 %v3677
    %v3679 = vlaneseq
    %v3680 = vshrl.u32 %v3679, 7
    %v3681 = vsub.s32 %v3678, %v3680
    %v3682 = vrot.slane %v3675, %v3681
    %v3683 = vcombine.low %v3587, %v3594
    %v3685 = vunpack.c.l.s4 1983009808
    %v3686 = vunpack.c.0.s8 %v3685
    %v3687 = vlaneseq
    %v3688 = vshrl.u32 %v3687, 7
    %v3689 = vsub.s32 %v3686, %v3688
    %v3690 = vrot.slane %v3683, %v3689
    %v3691 = vcombine.low %v3597, %v3598
    %v3693 = vunpack.c.l.s4 1983009808
    %v3694 = vunpack.c.0.s8 %v3693
    %v3695 = vlaneseq
    %v3696 = vshrl.u32 %v3695, 7
    %v3697 = vsub.s32 %v3694, %v3696
    %v3698 = vrot.slane %v3691, %v3697
    %v3699 = vcombine.low %v3674, %v3682
    %v3700 = vcombine.high %v3674, %v3682
    %v3702 = vunpack.c.l.s4 1934713408
    %v3703 = vunpack.c.0.s8 %v3702
    %v3704 = vlaneseq
    %v3705 = vshrl.u32 %v3704, 7
    %v3706 = vsub.s32 %v3703, %v3705
    %v3707 = vrot.slane %v3699, %v3706
    %v3709 = vunpack.c.l.s4 1934713408
    %v3710 = vunpack.c.0.s8 %v3709
    %v3711 = vlaneseq
    %v3712 = vshrl.u32 %v3711, 7
    %v3713 = vsub.s32 %v3710, %v3712
    %v3714 = vrot.slane %v3700, %v3713
    %v3715 = vcombine.low %v3690, %v3698
    %v3716 = vcombine.high %v3690, %v3698
    %v3718 = vunpack.c.l.s4 1934713408
    %v3719 = vunpack.c.0.s8 %v3718
    %v3720 = vlaneseq
    %v3721 = vshrl.u32 %v3720, 7
    %v3722 = vsub.s32 %v3719, %v3721
    %v3723 = vrot.slane %v3715, %v3722
    %v3725 = vunpack.c.l.s4 1934713408
    %v3726 = vunpack.c.0.s8 %v3725
    %v3727 = vlaneseq
    %v3728 = vshrl.u32 %v3727, 7
    %v3729 = vsub.s32 %v3726, %v3728
    %v3730 = vrot.slane %v3716, %v3729
    %v3731 = vcombine.low %v3707, %v3723
    %v3732 = vcombine.high %v3707, %v3723
    %v3733 = vcombine.low %v3714, %v3730
    %v3734 = vcombine.high %v3714, %v3730
    %v3735 = vcombine.low %v3639, %v3646
    %v3737 = vunpack.c.l.s4 1983009808
    %v3738 = vunpack.c.0.s8 %v3737
    %v3739 = vlaneseq
    %v3740 = vshrl.u32 %v3739, 7
    %v3741 = vsub.s32 %v3738, %v3740
    %v3742 = vrot.slane %v3735, %v3741
    %v3743 = vcombine.low %v3663, %v3664
    %v3745 = vunpack.c.l.s4 1983009808
    %v3746 = vunpack.c.0.s8 %v3745
    %v3747 = vlaneseq
    %v3748 = vshrl.u32 %v3747, 7
    %v3749 = vsub.s32 %v3746, %v3748
    %v3750 = vrot.slane %v3743, %v3749
    %v3751 = vcombine.low %v3655, %v3662
    %v3753 = vunpack.c.l.s4 1983009808
    %v3754 = vunpack.c.0.s8 %v3753
    %v3755 = vlaneseq
    %v3756 = vshrl.u32 %v3755, 7
    %v3757 = vsub.s32 %v3754, %v3756
    %v3758 = vrot.slane %v3751, %v3757
    %v3759 = vcombine.low %v3665, %v3666
    %v3761 = vunpack.c.l.s4 1983009808
    %v3762 = vunpack.c.0.s8 %v3761
    %v3763 = vlaneseq
    %v3764 = vshrl.u32 %v3763, 7
    %v3765 = vsub.s32 %v3762, %v3764
    %v3766 = vrot.slane %v3759, %v3765
    %v3767 = vcombine.low %v3742, %v3750
    %v3768 = vcombine.high %v3742, %v3750
    %v3770 = vunpack.c.l.s4 1934713408
    %v3771 = vunpack.c.0.s8 %v3770
    %v3772 = vlaneseq
    %v3773 = vshrl.u32 %v3772, 7
    %v3774 = vsub.s32 %v3771, %v3773
    %v3775 = vrot.slane %v3767, %v3774
    %v3777 = vunpack.c.l.s4 1934713408
    %v3778 = vunpack.c.0.s8 %v3777
    %v3779 = vlaneseq
    %v3780 = vshrl.u32 %v3779, 7
    %v3781 = vsub.s32 %v3778, %v3780
    %v3782 = vrot.slane %v3768, %v3781
    %v3783 = vcombine.low %v3758, %v3766
    %v3784 = vcombine.high %v3758, %v3766
    %v3786 = vunpack.c.l.s4 1934713408
    %v3787 = vunpack.c.0.s8 %v3786
    %v3788 = vlaneseq
    %v3789 = vshrl.u32 %v3788, 7
    %v3790 = vsub.s32 %v3787, %v3789
    %v3791 = vrot.slane %v3783, %v3790
    %v3793 = vunpack.c.l.s4 1934713408
    %v3794 = vunpack.c.0.s8 %v3793
    %v3795 = vlaneseq
    %v3796 = vshrl.u32 %v3795, 7
    %v3797 = vsub.s32 %v3794, %v3796
    %v3798 = vrot.slane %v3784, %v3797
    %v3799 = vcombine.low %v3775, %v3791
    %v3800 = vcombine.high %v3775, %v3791
    %v3801 = vcombine.low %v3782, %v3798
    %v3802 = vcombine.high %v3782, %v3798
    %3803 = vrot.lane.b32.xlu0 %v3191, 64
    %v3804 = vpop.permute.xlu0 %3803
    %3805 = vrot.lane.b32.xlu0 %v3196, 64
    %v3806 = vpop.permute.xlu0 %3805
    %3807 = vrot.lane.b32.xlu0 %v3496, 64
    %v3808 = vpop.permute.xlu0 %3807
    %3809 = vrot.lane.b32.xlu0 %v3498, 64
    %v3810 = vpop.permute.xlu0 %3809
    %3811 = vrot.lane.b32.xlu0 %v3500, 64
    %v3812 = vpop.permute.xlu0 %3811
    %3813 = vrot.lane.b32.xlu0 %v3502, 64
    %v3814 = vpop.permute.xlu0 %3813
    %3815 = vrot.lane.b32.xlu0 %v3504, 64
    %v3816 = vpop.permute.xlu0 %3815
    %3817 = vrot.lane.b32.xlu0 %v3506, 64
    %v3818 = vpop.permute.xlu0 %3817
    %v3827 = vcombine.low %v3804, %v3812
    %v3828 = vcombine.high %v3804, %v3812
    %v3830 = vunpack.c.l.s4 1983009808
    %v3831 = vunpack.c.0.s8 %v3830
    %v3832 = vlaneseq
    %v3833 = vshrl.u32 %v3832, 7
    %v3834 = vsub.s32 %v3831, %v3833
    %v3835 = vrot.slane %v3827, %v3834
    %v3837 = vunpack.c.l.s4 1983009808
    %v3838 = vunpack.c.0.s8 %v3837
    %v3839 = vlaneseq
    %v3840 = vshrl.u32 %v3839, 7
    %v3841 = vsub.s32 %v3838, %v3840
    %v3842 = vrot.slane %v3828, %v3841
    %v3843 = vcombine.low %v3808, %v3816
    %v3844 = vcombine.high %v3808, %v3816
    %v3846 = vunpack.c.l.s4 1983009808
    %v3847 = vunpack.c.0.s8 %v3846
    %v3848 = vlaneseq
    %v3849 = vshrl.u32 %v3848, 7
    %v3850 = vsub.s32 %v3847, %v3849
    %v3851 = vrot.slane %v3843, %v3850
    %v3853 = vunpack.c.l.s4 1983009808
    %v3854 = vunpack.c.0.s8 %v3853
    %v3855 = vlaneseq
    %v3856 = vshrl.u32 %v3855, 7
    %v3857 = vsub.s32 %v3854, %v3856
    %v3858 = vrot.slane %v3844, %v3857
    %v3859 = vcombine.low %v3835, %v3851
    %v3860 = vcombine.high %v3835, %v3851
    %v3862 = vunpack.c.l.s4 1934713408
    %v3863 = vunpack.c.0.s8 %v3862
    %v3864 = vlaneseq
    %v3865 = vshrl.u32 %v3864, 7
    %v3866 = vsub.s32 %v3863, %v3865
    %v3867 = vrot.slane %v3859, %v3866
    %v3869 = vunpack.c.l.s4 1934713408
    %v3870 = vunpack.c.0.s8 %v3869
    %v3871 = vlaneseq
    %v3872 = vshrl.u32 %v3871, 7
    %v3873 = vsub.s32 %v3870, %v3872
    %v3874 = vrot.slane %v3860, %v3873
    %v3875 = vcombine.low %v3842, %v3858
    %v3876 = vcombine.high %v3842, %v3858
    %v3878 = vunpack.c.l.s4 1934713408
    %v3879 = vunpack.c.0.s8 %v3878
    %v3880 = vlaneseq
    %v3881 = vshrl.u32 %v3880, 7
    %v3882 = vsub.s32 %v3879, %v3881
    %v3883 = vrot.slane %v3875, %v3882
    %v3885 = vunpack.c.l.s4 1934713408
    %v3886 = vunpack.c.0.s8 %v3885
    %v3887 = vlaneseq
    %v3888 = vshrl.u32 %v3887, 7
    %v3889 = vsub.s32 %v3886, %v3888
    %v3890 = vrot.slane %v3876, %v3889
    %v3891 = vcombine.high %v3867, 0.0
    %v3892 = vcombine.high %v3874, 0.0
    %v3893 = vcombine.high %v3883, 0.0
    %v3894 = vcombine.high %v3890, 0.0
    %v3895 = vcombine.low %v3806, %v3814
    %v3896 = vcombine.high %v3806, %v3814
    %v3898 = vunpack.c.l.s4 1983009808
    %v3899 = vunpack.c.0.s8 %v3898
    %v3900 = vlaneseq
    %v3901 = vshrl.u32 %v3900, 7
    %v3902 = vsub.s32 %v3899, %v3901
    %v3903 = vrot.slane %v3895, %v3902
    %v3905 = vunpack.c.l.s4 1983009808
    %v3906 = vunpack.c.0.s8 %v3905
    %v3907 = vlaneseq
    %v3908 = vshrl.u32 %v3907, 7
    %v3909 = vsub.s32 %v3906, %v3908
    %v3910 = vrot.slane %v3896, %v3909
    %v3911 = vcombine.low %v3810, %v3818
    %v3912 = vcombine.high %v3810, %v3818
    %v3914 = vunpack.c.l.s4 1983009808
    %v3915 = vunpack.c.0.s8 %v3914
    %v3916 = vlaneseq
    %v3917 = vshrl.u32 %v3916, 7
    %v3918 = vsub.s32 %v3915, %v3917
    %v3919 = vrot.slane %v3911, %v3918
    %v3921 = vunpack.c.l.s4 1983009808
    %v3922 = vunpack.c.0.s8 %v3921
    %v3923 = vlaneseq
    %v3924 = vshrl.u32 %v3923, 7
    %v3925 = vsub.s32 %v3922, %v3924
    %v3926 = vrot.slane %v3912, %v3925
    %v3927 = vcombine.low %v3903, %v3919
    %v3928 = vcombine.high %v3903, %v3919
    %v3930 = vunpack.c.l.s4 1934713408
    %v3931 = vunpack.c.0.s8 %v3930
    %v3932 = vlaneseq
    %v3933 = vshrl.u32 %v3932, 7
    %v3934 = vsub.s32 %v3931, %v3933
    %v3935 = vrot.slane %v3927, %v3934
    %v3937 = vunpack.c.l.s4 1934713408
    %v3938 = vunpack.c.0.s8 %v3937
    %v3939 = vlaneseq
    %v3940 = vshrl.u32 %v3939, 7
    %v3941 = vsub.s32 %v3938, %v3940
    %v3942 = vrot.slane %v3928, %v3941
    %v3943 = vcombine.low %v3910, %v3926
    %v3944 = vcombine.high %v3910, %v3926
    %v3946 = vunpack.c.l.s4 1934713408
    %v3947 = vunpack.c.0.s8 %v3946
    %v3948 = vlaneseq
    %v3949 = vshrl.u32 %v3948, 7
    %v3950 = vsub.s32 %v3947, %v3949
    %v3951 = vrot.slane %v3943, %v3950
    %v3953 = vunpack.c.l.s4 1934713408
    %v3954 = vunpack.c.0.s8 %v3953
    %v3955 = vlaneseq
    %v3956 = vshrl.u32 %v3955, 7
    %v3957 = vsub.s32 %v3954, %v3956
    %v3958 = vrot.slane %v3944, %v3957
    %v3959 = vcombine.high %v3935, 0.0
    %v3960 = vcombine.high %v3942, 0.0
    %v3961 = vcombine.high %v3951, 0.0
    %v3962 = vcombine.high %v3958, 0.0
    %v3963 = vcombine.low %v3867, %v3874
    %v3965 = vunpack.c.l.s4 1983009808
    %v3966 = vunpack.c.0.s8 %v3965
    %v3967 = vlaneseq
    %v3968 = vshrl.u32 %v3967, 7
    %v3969 = vsub.s32 %v3966, %v3968
    %v3970 = vrot.slane %v3963, %v3969
    %v3971 = vcombine.low %v3891, %v3892
    %v3973 = vunpack.c.l.s4 1983009808
    %v3974 = vunpack.c.0.s8 %v3973
    %v3975 = vlaneseq
    %v3976 = vshrl.u32 %v3975, 7
    %v3977 = vsub.s32 %v3974, %v3976
    %v3978 = vrot.slane %v3971, %v3977
    %v3979 = vcombine.low %v3883, %v3890
    %v3981 = vunpack.c.l.s4 1983009808
    %v3982 = vunpack.c.0.s8 %v3981
    %v3983 = vlaneseq
    %v3984 = vshrl.u32 %v3983, 7
    %v3985 = vsub.s32 %v3982, %v3984
    %v3986 = vrot.slane %v3979, %v3985
    %v3987 = vcombine.low %v3893, %v3894
    %v3989 = vunpack.c.l.s4 1983009808
    %v3990 = vunpack.c.0.s8 %v3989
    %v3991 = vlaneseq
    %v3992 = vshrl.u32 %v3991, 7
    %v3993 = vsub.s32 %v3990, %v3992
    %v3994 = vrot.slane %v3987, %v3993
    %v3995 = vcombine.low %v3970, %v3978
    %v3996 = vcombine.high %v3970, %v3978
    %v3998 = vunpack.c.l.s4 1934713408
    %v3999 = vunpack.c.0.s8 %v3998
    %v4000 = vlaneseq
    %v4001 = vshrl.u32 %v4000, 7
    %v4002 = vsub.s32 %v3999, %v4001
    %v4003 = vrot.slane %v3995, %v4002
    %v4005 = vunpack.c.l.s4 1934713408
    %v4006 = vunpack.c.0.s8 %v4005
    %v4007 = vlaneseq
    %v4008 = vshrl.u32 %v4007, 7
    %v4009 = vsub.s32 %v4006, %v4008
    %v4010 = vrot.slane %v3996, %v4009
    %v4011 = vcombine.low %v3986, %v3994
    %v4012 = vcombine.high %v3986, %v3994
    %v4014 = vunpack.c.l.s4 1934713408
    %v4015 = vunpack.c.0.s8 %v4014
    %v4016 = vlaneseq
    %v4017 = vshrl.u32 %v4016, 7
    %v4018 = vsub.s32 %v4015, %v4017
    %v4019 = vrot.slane %v4011, %v4018
    %v4021 = vunpack.c.l.s4 1934713408
    %v4022 = vunpack.c.0.s8 %v4021
    %v4023 = vlaneseq
    %v4024 = vshrl.u32 %v4023, 7
    %v4025 = vsub.s32 %v4022, %v4024
    %v4026 = vrot.slane %v4012, %v4025
    %v4027 = vcombine.low %v4003, %v4019
    %v4028 = vcombine.high %v4003, %v4019
    %v4029 = vcombine.low %v4010, %v4026
    %v4030 = vcombine.high %v4010, %v4026
    %v4031 = vcombine.low %v3935, %v3942
    %v4033 = vunpack.c.l.s4 1983009808
    %v4034 = vunpack.c.0.s8 %v4033
    %v4035 = vlaneseq
    %v4036 = vshrl.u32 %v4035, 7
    %v4037 = vsub.s32 %v4034, %v4036
    %v4038 = vrot.slane %v4031, %v4037
    %v4039 = vcombine.low %v3959, %v3960
    %v4041 = vunpack.c.l.s4 1983009808
    %v4042 = vunpack.c.0.s8 %v4041
    %v4043 = vlaneseq
    %v4044 = vshrl.u32 %v4043, 7
    %v4045 = vsub.s32 %v4042, %v4044
    %v4046 = vrot.slane %v4039, %v4045
    %v4047 = vcombine.low %v3951, %v3958
    %v4049 = vunpack.c.l.s4 1983009808
    %v4050 = vunpack.c.0.s8 %v4049
    %v4051 = vlaneseq
    %v4052 = vshrl.u32 %v4051, 7
    %v4053 = vsub.s32 %v4050, %v4052
    %v4054 = vrot.slane %v4047, %v4053
    %v4055 = vcombine.low %v3961, %v3962
    %v4057 = vunpack.c.l.s4 1983009808
    %v4058 = vunpack.c.0.s8 %v4057
    %v4059 = vlaneseq
    %v4060 = vshrl.u32 %v4059, 7
    %v4061 = vsub.s32 %v4058, %v4060
    %v4062 = vrot.slane %v4055, %v4061
    %v4063 = vcombine.low %v4038, %v4046
    %v4064 = vcombine.high %v4038, %v4046
    %v4066 = vunpack.c.l.s4 1934713408
    %v4067 = vunpack.c.0.s8 %v4066
    %v4068 = vlaneseq
    %v4069 = vshrl.u32 %v4068, 7
    %v4070 = vsub.s32 %v4067, %v4069
    %v4071 = vrot.slane %v4063, %v4070
    %v4073 = vunpack.c.l.s4 1934713408
    %v4074 = vunpack.c.0.s8 %v4073
    %v4075 = vlaneseq
    %v4076 = vshrl.u32 %v4075, 7
    %v4077 = vsub.s32 %v4074, %v4076
    %v4078 = vrot.slane %v4064, %v4077
    %v4079 = vcombine.low %v4054, %v4062
    %v4080 = vcombine.high %v4054, %v4062
    %v4082 = vunpack.c.l.s4 1934713408
    %v4083 = vunpack.c.0.s8 %v4082
    %v4084 = vlaneseq
    %v4085 = vshrl.u32 %v4084, 7
    %v4086 = vsub.s32 %v4083, %v4085
    %v4087 = vrot.slane %v4079, %v4086
    %v4089 = vunpack.c.l.s4 1934713408
    %v4090 = vunpack.c.0.s8 %v4089
    %v4091 = vlaneseq
    %v4092 = vshrl.u32 %v4091, 7
    %v4093 = vsub.s32 %v4090, %v4092
    %v4094 = vrot.slane %v4080, %v4093
    %v4095 = vcombine.low %v4071, %v4087
    %v4096 = vcombine.high %v4071, %v4087
    %v4097 = vcombine.low %v4078, %v4094
    %v4098 = vcombine.high %v4078, %v4094
    %v4100 = vsel %vm1179, %v3421, 0
    %v4103 = vsel %vm1179, %v3731, 0
    %4105 = vmatprep.subr.mxu0 0.0
    %4106 = vmatpush1.xpose.msra.mxu0 0.0
    %4107 = vmatprep.subr.mxu0 0.0
    %4108 = vmatpush1.xpose.msra.mxu0 0.0
    %4109 = vmatprep.subr.mxu0 0.0
    %4110 = vmatpush1.xpose.msra.mxu0 0.0
    %4111 = vmatprep.subr.mxu0 0.0
    %4112 = vmatpush1.xpose.msra.mxu0 0.0
    %4113 = vmatprep.subr.mxu0 0.0
    %4114 = vmatpush1.xpose.msra.mxu0 0.0
    %4115 = vmatprep.subr.mxu0 0.0
    %4116 = vmatpush1.xpose.msra.mxu0 0.0
    %4117 = vmatprep.subr.mxu0 0.0
    %4118 = vmatpush1.xpose.msra.mxu0 0.0
    %4119 = vmatprep.subr.mxu0 0.0
    %4120 = vmatpush1.xpose.msra.mxu0 0.0
    %4121 = vmatprep.subr.mxu0 0.0
    %4122 = vmatpush1.xpose.msra.mxu0 0.0
    %4123 = vmatprep.subr.mxu0 0.0
    %4124 = vmatpush1.xpose.msra.mxu0 0.0
    %4125 = vmatprep.subr.mxu0 0.0
    %4126 = vmatpush1.xpose.msra.mxu0 0.0
    %4127 = vmatprep.subr.mxu0 0.0
    %4128 = vmatpush1.xpose.msra.mxu0 0.0
    %4129 = vmatprep.subr.mxu0 0.0
    %4130 = vmatpush1.xpose.msra.mxu0 0.0
    %4131 = vmatprep.subr.mxu0 0.0
    %4132 = vmatpush1.xpose.msra.mxu0 0.0
    %4133 = vmatprep.subr.mxu0 0.0
    %4134 = vmatpush1.xpose.msra.mxu0 0.0
    %4135 = vmatprep.subr.mxu0 0.0
    %4136 = vmatpush1.xpose.msra.mxu0 %v4103
    %4137 = vmatprep.subr.mxu0 0.0
    %4138 = vmatpush2.xpose.msra.mxu0 0.0
    %4139 = vmatprep.subr.mxu0 0.0
    %4140 = vmatpush2.xpose.msra.mxu0 0.0
    %4141 = vmatprep.subr.mxu0 0.0
    %4142 = vmatpush2.xpose.msra.mxu0 0.0
    %4143 = vmatprep.subr.mxu0 0.0
    %4144 = vmatpush2.xpose.msra.mxu0 0.0
    %4145 = vmatprep.subr.mxu0 0.0
    %4146 = vmatpush2.xpose.msra.mxu0 0.0
    %4147 = vmatprep.subr.mxu0 0.0
    %4148 = vmatpush2.xpose.msra.mxu0 0.0
    %4149 = vmatprep.subr.mxu0 0.0
    %4150 = vmatpush2.xpose.msra.mxu0 0.0
    %4151 = vmatprep.subr.mxu0 0.0
    %4152 = vmatpush2.xpose.msra.mxu0 0.0
    %4153 = vmatprep.subr.mxu0 0.0
    %4154 = vmatpush2.xpose.msra.mxu0 0.0
    %4155 = vmatprep.subr.mxu0 0.0
    %4156 = vmatpush2.xpose.msra.mxu0 0.0
    %4157 = vmatprep.subr.mxu0 0.0
    %4158 = vmatpush2.xpose.msra.mxu0 0.0
    %4159 = vmatprep.subr.mxu0 0.0
    %4160 = vmatpush2.xpose.msra.mxu0 0.0
    %4161 = vmatprep.subr.mxu0 0.0
    %4162 = vmatpush2.xpose.msra.mxu0 0.0
    %4163 = vmatprep.subr.mxu0 0.0
    %4164 = vmatpush2.xpose.msra.mxu0 0.0
    %4165 = vmatprep.subr.mxu0 0.0
    %4166 = vmatpush2.xpose.msra.mxu0 0.0
    %4167 = vmatprep.subr.mxu0 0.0
    %4168 = vmatpush2.xpose.msra.mxu0 0.0
    %4169 = vmatprep.mubr.f32.mxu0 0.0
    %4170 = vmatmul.mubr.f32.gmra.mxu0 %v4100
    %v4171 = vpop.f32.mrf.mxu0
    %v4172 = vadd.f32 %v36, %v4171
    %v4173 = vpop.f32.mrf.mxu0
    %4174 = vdwg.mxu0
    %v4176 = vsel %vm1179, %v3489, 0
    %v4179 = vsel %vm1179, %v3799, 0
    %4181 = vmatprep.subr.mxu0 0.0
    %4182 = vmatpush1.xpose.msra.mxu0 0.0
    %4183 = vmatprep.subr.mxu0 0.0
    %4184 = vmatpush1.xpose.msra.mxu0 0.0
    %4185 = vmatprep.subr.mxu0 0.0
    %4186 = vmatpush1.xpose.msra.mxu0 0.0
    %4187 = vmatprep.subr.mxu0 0.0
    %4188 = vmatpush1.xpose.msra.mxu0 0.0
    %4189 = vmatprep.subr.mxu0 0.0
    %4190 = vmatpush1.xpose.msra.mxu0 0.0
    %4191 = vmatprep.subr.mxu0 0.0
    %4192 = vmatpush1.xpose.msra.mxu0 0.0
    %4193 = vmatprep.subr.mxu0 0.0
    %4194 = vmatpush1.xpose.msra.mxu0 0.0
    %4195 = vmatprep.subr.mxu0 0.0
    %4196 = vmatpush1.xpose.msra.mxu0 0.0
    %4197 = vmatprep.subr.mxu0 0.0
    %4198 = vmatpush1.xpose.msra.mxu0 0.0
    %4199 = vmatprep.subr.mxu0 0.0
    %4200 = vmatpush1.xpose.msra.mxu0 0.0
    %4201 = vmatprep.subr.mxu0 0.0
    %4202 = vmatpush1.xpose.msra.mxu0 0.0
    %4203 = vmatprep.subr.mxu0 0.0
    %4204 = vmatpush1.xpose.msra.mxu0 0.0
    %4205 = vmatprep.subr.mxu0 0.0
    %4206 = vmatpush1.xpose.msra.mxu0 0.0
    %4207 = vmatprep.subr.mxu0 0.0
    %4208 = vmatpush1.xpose.msra.mxu0 0.0
    %4209 = vmatprep.subr.mxu0 0.0
    %4210 = vmatpush1.xpose.msra.mxu0 0.0
    %4211 = vmatprep.subr.mxu0 0.0
    %4212 = vmatpush1.xpose.msra.mxu0 %v4179
    %4213 = vmatprep.subr.mxu0 0.0
    %4214 = vmatpush2.xpose.msra.mxu0 0.0
    %4215 = vmatprep.subr.mxu0 0.0
    %4216 = vmatpush2.xpose.msra.mxu0 0.0
    %4217 = vmatprep.subr.mxu0 0.0
    %4218 = vmatpush2.xpose.msra.mxu0 0.0
    %4219 = vmatprep.subr.mxu0 0.0
    %4220 = vmatpush2.xpose.msra.mxu0 0.0
    %4221 = vmatprep.subr.mxu0 0.0
    %4222 = vmatpush2.xpose.msra.mxu0 0.0
    %4223 = vmatprep.subr.mxu0 0.0
    %4224 = vmatpush2.xpose.msra.mxu0 0.0
    %4225 = vmatprep.subr.mxu0 0.0
    %4226 = vmatpush2.xpose.msra.mxu0 0.0
    %4227 = vmatprep.subr.mxu0 0.0
    %4228 = vmatpush2.xpose.msra.mxu0 0.0
    %4229 = vmatprep.subr.mxu0 0.0
    %4230 = vmatpush2.xpose.msra.mxu0 0.0
    %4231 = vmatprep.subr.mxu0 0.0
    %4232 = vmatpush2.xpose.msra.mxu0 0.0
    %4233 = vmatprep.subr.mxu0 0.0
    %4234 = vmatpush2.xpose.msra.mxu0 0.0
    %4235 = vmatprep.subr.mxu0 0.0
    %4236 = vmatpush2.xpose.msra.mxu0 0.0
    %4237 = vmatprep.subr.mxu0 0.0
    %4238 = vmatpush2.xpose.msra.mxu0 0.0
    %4239 = vmatprep.subr.mxu0 0.0
    %4240 = vmatpush2.xpose.msra.mxu0 0.0
    %4241 = vmatprep.subr.mxu0 0.0
    %4242 = vmatpush2.xpose.msra.mxu0 0.0
    %4243 = vmatprep.subr.mxu0 0.0
    %4244 = vmatpush2.xpose.msra.mxu0 0.0
    %4245 = vmatprep.mubr.f32.mxu0 0.0
    %4246 = vmatmul.mubr.f32.gmra.mxu0 %v4176
    %v4247 = vpop.f32.mrf.mxu0
    %v4248 = vadd.f32 %v36, %v4247
    %v4249 = vpop.f32.mrf.mxu0
    %4250 = vdwg.mxu0
    %v4252 = vsel %vm1179, %v3422, 0
    %v4255 = vsel %vm1179, %v3732, 0
    %4257 = vmatprep.subr.mxu0 0.0
    %4258 = vmatpush1.xpose.msra.mxu0 0.0
    %4259 = vmatprep.subr.mxu0 0.0
    %4260 = vmatpush1.xpose.msra.mxu0 0.0
    %4261 = vmatprep.subr.mxu0 0.0
    %4262 = vmatpush1.xpose.msra.mxu0 0.0
    %4263 = vmatprep.subr.mxu0 0.0
    %4264 = vmatpush1.xpose.msra.mxu0 0.0
    %4265 = vmatprep.subr.mxu0 0.0
    %4266 = vmatpush1.xpose.msra.mxu0 0.0
    %4267 = vmatprep.subr.mxu0 0.0
    %4268 = vmatpush1.xpose.msra.mxu0 0.0
    %4269 = vmatprep.subr.mxu0 0.0
    %4270 = vmatpush1.xpose.msra.mxu0 0.0
    %4271 = vmatprep.subr.mxu0 0.0
    %4272 = vmatpush1.xpose.msra.mxu0 0.0
    %4273 = vmatprep.subr.mxu0 0.0
    %4274 = vmatpush1.xpose.msra.mxu0 0.0
    %4275 = vmatprep.subr.mxu0 0.0
    %4276 = vmatpush1.xpose.msra.mxu0 0.0
    %4277 = vmatprep.subr.mxu0 0.0
    %4278 = vmatpush1.xpose.msra.mxu0 0.0
    %4279 = vmatprep.subr.mxu0 0.0
    %4280 = vmatpush1.xpose.msra.mxu0 0.0
    %4281 = vmatprep.subr.mxu0 0.0
    %4282 = vmatpush1.xpose.msra.mxu0 0.0
    %4283 = vmatprep.subr.mxu0 0.0
    %4284 = vmatpush1.xpose.msra.mxu0 0.0
    %4285 = vmatprep.subr.mxu0 0.0
    %4286 = vmatpush1.xpose.msra.mxu0 0.0
    %4287 = vmatprep.subr.mxu0 0.0
    %4288 = vmatpush1.xpose.msra.mxu0 %v4255
    %4289 = vmatprep.subr.mxu0 0.0
    %4290 = vmatpush2.xpose.msra.mxu0 0.0
    %4291 = vmatprep.subr.mxu0 0.0
    %4292 = vmatpush2.xpose.msra.mxu0 0.0
    %4293 = vmatprep.subr.mxu0 0.0
    %4294 = vmatpush2.xpose.msra.mxu0 0.0
    %4295 = vmatprep.subr.mxu0 0.0
    %4296 = vmatpush2.xpose.msra.mxu0 0.0
    %4297 = vmatprep.subr.mxu0 0.0
    %4298 = vmatpush2.xpose.msra.mxu0 0.0
    %4299 = vmatprep.subr.mxu0 0.0
    %4300 = vmatpush2.xpose.msra.mxu0 0.0
    %4301 = vmatprep.subr.mxu0 0.0
    %4302 = vmatpush2.xpose.msra.mxu0 0.0
    %4303 = vmatprep.subr.mxu0 0.0
    %4304 = vmatpush2.xpose.msra.mxu0 0.0
    %4305 = vmatprep.subr.mxu0 0.0
    %4306 = vmatpush2.xpose.msra.mxu0 0.0
    %4307 = vmatprep.subr.mxu0 0.0
    %4308 = vmatpush2.xpose.msra.mxu0 0.0
    %4309 = vmatprep.subr.mxu0 0.0
    %4310 = vmatpush2.xpose.msra.mxu0 0.0
    %4311 = vmatprep.subr.mxu0 0.0
    %4312 = vmatpush2.xpose.msra.mxu0 0.0
    %4313 = vmatprep.subr.mxu0 0.0
    %4314 = vmatpush2.xpose.msra.mxu0 0.0
    %4315 = vmatprep.subr.mxu0 0.0
    %4316 = vmatpush2.xpose.msra.mxu0 0.0
    %4317 = vmatprep.subr.mxu0 0.0
    %4318 = vmatpush2.xpose.msra.mxu0 0.0
    %4319 = vmatprep.subr.mxu0 0.0
    %4320 = vmatpush2.xpose.msra.mxu0 0.0
    %4321 = vmatprep.mubr.f32.mxu0 0.0
    %4322 = vmatmul.mubr.f32.gmra.mxu0 %v4252
    %v4323 = vpop.f32.mrf.mxu0
    %v4324 = vadd.f32 %v36, %v4323
    %v4325 = vpop.f32.mrf.mxu0
    %4326 = vdwg.mxu0
    %v4328 = vsel %vm1179, %v3490, 0
    %v4331 = vsel %vm1179, %v3800, 0
    %4333 = vmatprep.subr.mxu0 0.0
    %4334 = vmatpush1.xpose.msra.mxu0 0.0
    %4335 = vmatprep.subr.mxu0 0.0
    %4336 = vmatpush1.xpose.msra.mxu0 0.0
    %4337 = vmatprep.subr.mxu0 0.0
    %4338 = vmatpush1.xpose.msra.mxu0 0.0
    %4339 = vmatprep.subr.mxu0 0.0
    %4340 = vmatpush1.xpose.msra.mxu0 0.0
    %4341 = vmatprep.subr.mxu0 0.0
    %4342 = vmatpush1.xpose.msra.mxu0 0.0
    %4343 = vmatprep.subr.mxu0 0.0
    %4344 = vmatpush1.xpose.msra.mxu0 0.0
    %4345 = vmatprep.subr.mxu0 0.0
    %4346 = vmatpush1.xpose.msra.mxu0 0.0
    %4347 = vmatprep.subr.mxu0 0.0
    %4348 = vmatpush1.xpose.msra.mxu0 0.0
    %4349 = vmatprep.subr.mxu0 0.0
    %4350 = vmatpush1.xpose.msra.mxu0 0.0
    %4351 = vmatprep.subr.mxu0 0.0
    %4352 = vmatpush1.xpose.msra.mxu0 0.0
    %4353 = vmatprep.subr.mxu0 0.0
    %4354 = vmatpush1.xpose.msra.mxu0 0.0
    %4355 = vmatprep.subr.mxu0 0.0
    %4356 = vmatpush1.xpose.msra.mxu0 0.0
    %4357 = vmatprep.subr.mxu0 0.0
    %4358 = vmatpush1.xpose.msra.mxu0 0.0
    %4359 = vmatprep.subr.mxu0 0.0
    %4360 = vmatpush1.xpose.msra.mxu0 0.0
    %4361 = vmatprep.subr.mxu0 0.0
    %4362 = vmatpush1.xpose.msra.mxu0 0.0
    %4363 = vmatprep.subr.mxu0 0.0
    %4364 = vmatpush1.xpose.msra.mxu0 %v4331
    %4365 = vmatprep.subr.mxu0 0.0
    %4366 = vmatpush2.xpose.msra.mxu0 0.0
    %4367 = vmatprep.subr.mxu0 0.0
    %4368 = vmatpush2.xpose.msra.mxu0 0.0
    %4369 = vmatprep.subr.mxu0 0.0
    %4370 = vmatpush2.xpose.msra.mxu0 0.0
    %4371 = vmatprep.subr.mxu0 0.0
    %4372 = vmatpush2.xpose.msra.mxu0 0.0
    %4373 = vmatprep.subr.mxu0 0.0
    %4374 = vmatpush2.xpose.msra.mxu0 0.0
    %4375 = vmatprep.subr.mxu0 0.0
    %4376 = vmatpush2.xpose.msra.mxu0 0.0
    %4377 = vmatprep.subr.mxu0 0.0
    %4378 = vmatpush2.xpose.msra.mxu0 0.0
    %4379 = vmatprep.subr.mxu0 0.0
    %4380 = vmatpush2.xpose.msra.mxu0 0.0
    %4381 = vmatprep.subr.mxu0 0.0
    %4382 = vmatpush2.xpose.msra.mxu0 0.0
    %4383 = vmatprep.subr.mxu0 0.0
    %4384 = vmatpush2.xpose.msra.mxu0 0.0
    %4385 = vmatprep.subr.mxu0 0.0
    %4386 = vmatpush2.xpose.msra.mxu0 0.0
    %4387 = vmatprep.subr.mxu0 0.0
    %4388 = vmatpush2.xpose.msra.mxu0 0.0
    %4389 = vmatprep.subr.mxu0 0.0
    %4390 = vmatpush2.xpose.msra.mxu0 0.0
    %4391 = vmatprep.subr.mxu0 0.0
    %4392 = vmatpush2.xpose.msra.mxu0 0.0
    %4393 = vmatprep.subr.mxu0 0.0
    %4394 = vmatpush2.xpose.msra.mxu0 0.0
    %4395 = vmatprep.subr.mxu0 0.0
    %4396 = vmatpush2.xpose.msra.mxu0 0.0
    %4397 = vmatprep.mubr.f32.mxu0 0.0
    %4398 = vmatmul.mubr.f32.gmra.mxu0 %v4328
    %v4399 = vpop.f32.mrf.mxu0
    %v4400 = vadd.f32 %v36, %v4399
    %v4401 = vpop.f32.mrf.mxu0
    %4402 = vdwg.mxu0
    %v4404 = vsel %vm1179, %v3423, 0
    %v4407 = vsel %vm1179, %v3733, 0
    %4409 = vmatprep.subr.mxu0 0.0
    %4410 = vmatpush1.xpose.msra.mxu0 0.0
    %4411 = vmatprep.subr.mxu0 0.0
    %4412 = vmatpush1.xpose.msra.mxu0 0.0
    %4413 = vmatprep.subr.mxu0 0.0
    %4414 = vmatpush1.xpose.msra.mxu0 0.0
    %4415 = vmatprep.subr.mxu0 0.0
    %4416 = vmatpush1.xpose.msra.mxu0 0.0
    %4417 = vmatprep.subr.mxu0 0.0
    %4418 = vmatpush1.xpose.msra.mxu0 0.0
    %4419 = vmatprep.subr.mxu0 0.0
    %4420 = vmatpush1.xpose.msra.mxu0 0.0
    %4421 = vmatprep.subr.mxu0 0.0
    %4422 = vmatpush1.xpose.msra.mxu0 0.0
    %4423 = vmatprep.subr.mxu0 0.0
    %4424 = vmatpush1.xpose.msra.mxu0 0.0
    %4425 = vmatprep.subr.mxu0 0.0
    %4426 = vmatpush1.xpose.msra.mxu0 0.0
    %4427 = vmatprep.subr.mxu0 0.0
    %4428 = vmatpush1.xpose.msra.mxu0 0.0
    %4429 = vmatprep.subr.mxu0 0.0
    %4430 = vmatpush1.xpose.msra.mxu0 0.0
    %4431 = vmatprep.subr.mxu0 0.0
    %4432 = vmatpush1.xpose.msra.mxu0 0.0
    %4433 = vmatprep.subr.mxu0 0.0
    %4434 = vmatpush1.xpose.msra.mxu0 0.0
    %4435 = vmatprep.subr.mxu0 0.0
    %4436 = vmatpush1.xpose.msra.mxu0 0.0
    %4437 = vmatprep.subr.mxu0 0.0
    %4438 = vmatpush1.xpose.msra.mxu0 0.0
    %4439 = vmatprep.subr.mxu0 0.0
    %4440 = vmatpush1.xpose.msra.mxu0 %v4407
    %4441 = vmatprep.subr.mxu0 0.0
    %4442 = vmatpush2.xpose.msra.mxu0 0.0
    %4443 = vmatprep.subr.mxu0 0.0
    %4444 = vmatpush2.xpose.msra.mxu0 0.0
    %4445 = vmatprep.subr.mxu0 0.0
    %4446 = vmatpush2.xpose.msra.mxu0 0.0
    %4447 = vmatprep.subr.mxu0 0.0
    %4448 = vmatpush2.xpose.msra.mxu0 0.0
    %4449 = vmatprep.subr.mxu0 0.0
    %4450 = vmatpush2.xpose.msra.mxu0 0.0
    %4451 = vmatprep.subr.mxu0 0.0
    %4452 = vmatpush2.xpose.msra.mxu0 0.0
    %4453 = vmatprep.subr.mxu0 0.0
    %4454 = vmatpush2.xpose.msra.mxu0 0.0
    %4455 = vmatprep.subr.mxu0 0.0
    %4456 = vmatpush2.xpose.msra.mxu0 0.0
    %4457 = vmatprep.subr.mxu0 0.0
    %4458 = vmatpush2.xpose.msra.mxu0 0.0
    %4459 = vmatprep.subr.mxu0 0.0
    %4460 = vmatpush2.xpose.msra.mxu0 0.0
    %4461 = vmatprep.subr.mxu0 0.0
    %4462 = vmatpush2.xpose.msra.mxu0 0.0
    %4463 = vmatprep.subr.mxu0 0.0
    %4464 = vmatpush2.xpose.msra.mxu0 0.0
    %4465 = vmatprep.subr.mxu0 0.0
    %4466 = vmatpush2.xpose.msra.mxu0 0.0
    %4467 = vmatprep.subr.mxu0 0.0
    %4468 = vmatpush2.xpose.msra.mxu0 0.0
    %4469 = vmatprep.subr.mxu0 0.0
    %4470 = vmatpush2.xpose.msra.mxu0 0.0
    %4471 = vmatprep.subr.mxu0 0.0
    %4472 = vmatpush2.xpose.msra.mxu0 0.0
    %4473 = vmatprep.mubr.f32.mxu0 0.0
    %4474 = vmatmul.mubr.f32.gmra.mxu0 %v4404
    %v4475 = vpop.f32.mrf.mxu0
    %v4476 = vadd.f32 %v36, %v4475
    %v4477 = vpop.f32.mrf.mxu0
    %4478 = vdwg.mxu0
    %v4480 = vsel %vm1179, %v3491, 0
    %v4483 = vsel %vm1179, %v3801, 0
    %4485 = vmatprep.subr.mxu0 0.0
    %4486 = vmatpush1.xpose.msra.mxu0 0.0
    %4487 = vmatprep.subr.mxu0 0.0
    %4488 = vmatpush1.xpose.msra.mxu0 0.0
    %4489 = vmatprep.subr.mxu0 0.0
    %4490 = vmatpush1.xpose.msra.mxu0 0.0
    %4491 = vmatprep.subr.mxu0 0.0
    %4492 = vmatpush1.xpose.msra.mxu0 0.0
    %4493 = vmatprep.subr.mxu0 0.0
    %4494 = vmatpush1.xpose.msra.mxu0 0.0
    %4495 = vmatprep.subr.mxu0 0.0
    %4496 = vmatpush1.xpose.msra.mxu0 0.0
    %4497 = vmatprep.subr.mxu0 0.0
    %4498 = vmatpush1.xpose.msra.mxu0 0.0
    %4499 = vmatprep.subr.mxu0 0.0
    %4500 = vmatpush1.xpose.msra.mxu0 0.0
    %4501 = vmatprep.subr.mxu0 0.0
    %4502 = vmatpush1.xpose.msra.mxu0 0.0
    %4503 = vmatprep.subr.mxu0 0.0
    %4504 = vmatpush1.xpose.msra.mxu0 0.0
    %4505 = vmatprep.subr.mxu0 0.0
    %4506 = vmatpush1.xpose.msra.mxu0 0.0
    %4507 = vmatprep.subr.mxu0 0.0
    %4508 = vmatpush1.xpose.msra.mxu0 0.0
    %4509 = vmatprep.subr.mxu0 0.0
    %4510 = vmatpush1.xpose.msra.mxu0 0.0
    %4511 = vmatprep.subr.mxu0 0.0
    %4512 = vmatpush1.xpose.msra.mxu0 0.0
    %4513 = vmatprep.subr.mxu0 0.0
    %4514 = vmatpush1.xpose.msra.mxu0 0.0
    %4515 = vmatprep.subr.mxu0 0.0
    %4516 = vmatpush1.xpose.msra.mxu0 %v4483
    %4517 = vmatprep.subr.mxu0 0.0
    %4518 = vmatpush2.xpose.msra.mxu0 0.0
    %4519 = vmatprep.subr.mxu0 0.0
    %4520 = vmatpush2.xpose.msra.mxu0 0.0
    %4521 = vmatprep.subr.mxu0 0.0
    %4522 = vmatpush2.xpose.msra.mxu0 0.0
    %4523 = vmatprep.subr.mxu0 0.0
    %4524 = vmatpush2.xpose.msra.mxu0 0.0
    %4525 = vmatprep.subr.mxu0 0.0
    %4526 = vmatpush2.xpose.msra.mxu0 0.0
    %4527 = vmatprep.subr.mxu0 0.0
    %4528 = vmatpush2.xpose.msra.mxu0 0.0
    %4529 = vmatprep.subr.mxu0 0.0
    %4530 = vmatpush2.xpose.msra.mxu0 0.0
    %4531 = vmatprep.subr.mxu0 0.0
    %4532 = vmatpush2.xpose.msra.mxu0 0.0
    %4533 = vmatprep.subr.mxu0 0.0
    %4534 = vmatpush2.xpose.msra.mxu0 0.0
    %4535 = vmatprep.subr.mxu0 0.0
    %4536 = vmatpush2.xpose.msra.mxu0 0.0
    %4537 = vmatprep.subr.mxu0 0.0
    %4538 = vmatpush2.xpose.msra.mxu0 0.0
    %4539 = vmatprep.subr.mxu0 0.0
    %4540 = vmatpush2.xpose.msra.mxu0 0.0
    %4541 = vmatprep.subr.mxu0 0.0
    %4542 = vmatpush2.xpose.msra.mxu0 0.0
    %4543 = vmatprep.subr.mxu0 0.0
    %4544 = vmatpush2.xpose.msra.mxu0 0.0
    %4545 = vmatprep.subr.mxu0 0.0
    %4546 = vmatpush2.xpose.msra.mxu0 0.0
    %4547 = vmatprep.subr.mxu0 0.0
    %4548 = vmatpush2.xpose.msra.mxu0 0.0
    %4549 = vmatprep.mubr.f32.mxu0 0.0
    %4550 = vmatmul.mubr.f32.gmra.mxu0 %v4480
    %v4551 = vpop.f32.mrf.mxu0
    %v4552 = vadd.f32 %v36, %v4551
    %v4553 = vpop.f32.mrf.mxu0
    %4554 = vdwg.mxu0
    %v4556 = vsel %vm1179, %v3424, 0
    %v4559 = vsel %vm1179, %v3734, 0
    %4561 = vmatprep.subr.mxu0 0.0
    %4562 = vmatpush1.xpose.msra.mxu0 0.0
    %4563 = vmatprep.subr.mxu0 0.0
    %4564 = vmatpush1.xpose.msra.mxu0 0.0
    %4565 = vmatprep.subr.mxu0 0.0
    %4566 = vmatpush1.xpose.msra.mxu0 0.0
    %4567 = vmatprep.subr.mxu0 0.0
    %4568 = vmatpush1.xpose.msra.mxu0 0.0
    %4569 = vmatprep.subr.mxu0 0.0
    %4570 = vmatpush1.xpose.msra.mxu0 0.0
    %4571 = vmatprep.subr.mxu0 0.0
    %4572 = vmatpush1.xpose.msra.mxu0 0.0
    %4573 = vmatprep.subr.mxu0 0.0
    %4574 = vmatpush1.xpose.msra.mxu0 0.0
    %4575 = vmatprep.subr.mxu0 0.0
    %4576 = vmatpush1.xpose.msra.mxu0 0.0
    %4577 = vmatprep.subr.mxu0 0.0
    %4578 = vmatpush1.xpose.msra.mxu0 0.0
    %4579 = vmatprep.subr.mxu0 0.0
    %4580 = vmatpush1.xpose.msra.mxu0 0.0
    %4581 = vmatprep.subr.mxu0 0.0
    %4582 = vmatpush1.xpose.msra.mxu0 0.0
    %4583 = vmatprep.subr.mxu0 0.0
    %4584 = vmatpush1.xpose.msra.mxu0 0.0
    %4585 = vmatprep.subr.mxu0 0.0
    %4586 = vmatpush1.xpose.msra.mxu0 0.0
    %4587 = vmatprep.subr.mxu0 0.0
    %4588 = vmatpush1.xpose.msra.mxu0 0.0
    %4589 = vmatprep.subr.mxu0 0.0
    %4590 = vmatpush1.xpose.msra.mxu0 0.0
    %4591 = vmatprep.subr.mxu0 0.0
    %4592 = vmatpush1.xpose.msra.mxu0 %v4559
    %4593 = vmatprep.subr.mxu0 0.0
    %4594 = vmatpush2.xpose.msra.mxu0 0.0
    %4595 = vmatprep.subr.mxu0 0.0
    %4596 = vmatpush2.xpose.msra.mxu0 0.0
    %4597 = vmatprep.subr.mxu0 0.0
    %4598 = vmatpush2.xpose.msra.mxu0 0.0
    %4599 = vmatprep.subr.mxu0 0.0
    %4600 = vmatpush2.xpose.msra.mxu0 0.0
    %4601 = vmatprep.subr.mxu0 0.0
    %4602 = vmatpush2.xpose.msra.mxu0 0.0
    %4603 = vmatprep.subr.mxu0 0.0
    %4604 = vmatpush2.xpose.msra.mxu0 0.0
    %4605 = vmatprep.subr.mxu0 0.0
    %4606 = vmatpush2.xpose.msra.mxu0 0.0
    %4607 = vmatprep.subr.mxu0 0.0
    %4608 = vmatpush2.xpose.msra.mxu0 0.0
    %4609 = vmatprep.subr.mxu0 0.0
    %4610 = vmatpush2.xpose.msra.mxu0 0.0
    %4611 = vmatprep.subr.mxu0 0.0
    %4612 = vmatpush2.xpose.msra.mxu0 0.0
    %4613 = vmatprep.subr.mxu0 0.0
    %4614 = vmatpush2.xpose.msra.mxu0 0.0
    %4615 = vmatprep.subr.mxu0 0.0
    %4616 = vmatpush2.xpose.msra.mxu0 0.0
    %4617 = vmatprep.subr.mxu0 0.0
    %4618 = vmatpush2.xpose.msra.mxu0 0.0
    %4619 = vmatprep.subr.mxu0 0.0
    %4620 = vmatpush2.xpose.msra.mxu0 0.0
    %4621 = vmatprep.subr.mxu0 0.0
    %4622 = vmatpush2.xpose.msra.mxu0 0.0
    %4623 = vmatprep.subr.mxu0 0.0
    %4624 = vmatpush2.xpose.msra.mxu0 0.0
    %4625 = vmatprep.mubr.f32.mxu0 0.0
    %4626 = vmatmul.mubr.f32.gmra.mxu0 %v4556
    %v4627 = vpop.f32.mrf.mxu0
    %v4628 = vadd.f32 %v36, %v4627
    %v4629 = vpop.f32.mrf.mxu0
    %4630 = vdwg.mxu0
    %v4632 = vsel %vm1179, %v3492, 0
    %v4635 = vsel %vm1179, %v3802, 0
    %4637 = vmatprep.subr.mxu0 0.0
    %4638 = vmatpush1.xpose.msra.mxu0 0.0
    %4639 = vmatprep.subr.mxu0 0.0
    %4640 = vmatpush1.xpose.msra.mxu0 0.0
    %4641 = vmatprep.subr.mxu0 0.0
    %4642 = vmatpush1.xpose.msra.mxu0 0.0
    %4643 = vmatprep.subr.mxu0 0.0
    %4644 = vmatpush1.xpose.msra.mxu0 0.0
    %4645 = vmatprep.subr.mxu0 0.0
    %4646 = vmatpush1.xpose.msra.mxu0 0.0
    %4647 = vmatprep.subr.mxu0 0.0
    %4648 = vmatpush1.xpose.msra.mxu0 0.0
    %4649 = vmatprep.subr.mxu0 0.0
    %4650 = vmatpush1.xpose.msra.mxu0 0.0
    %4651 = vmatprep.subr.mxu0 0.0
    %4652 = vmatpush1.xpose.msra.mxu0 0.0
    %4653 = vmatprep.subr.mxu0 0.0
    %4654 = vmatpush1.xpose.msra.mxu0 0.0
    %4655 = vmatprep.subr.mxu0 0.0
    %4656 = vmatpush1.xpose.msra.mxu0 0.0
    %4657 = vmatprep.subr.mxu0 0.0
    %4658 = vmatpush1.xpose.msra.mxu0 0.0
    %4659 = vmatprep.subr.mxu0 0.0
    %4660 = vmatpush1.xpose.msra.mxu0 0.0
    %4661 = vmatprep.subr.mxu0 0.0
    %4662 = vmatpush1.xpose.msra.mxu0 0.0
    %4663 = vmatprep.subr.mxu0 0.0
    %4664 = vmatpush1.xpose.msra.mxu0 0.0
    %4665 = vmatprep.subr.mxu0 0.0
    %4666 = vmatpush1.xpose.msra.mxu0 0.0
    %4667 = vmatprep.subr.mxu0 0.0
    %4668 = vmatpush1.xpose.msra.mxu0 %v4635
    %4669 = vmatprep.subr.mxu0 0.0
    %4670 = vmatpush2.xpose.msra.mxu0 0.0
    %4671 = vmatprep.subr.mxu0 0.0
    %4672 = vmatpush2.xpose.msra.mxu0 0.0
    %4673 = vmatprep.subr.mxu0 0.0
    %4674 = vmatpush2.xpose.msra.mxu0 0.0
    %4675 = vmatprep.subr.mxu0 0.0
    %4676 = vmatpush2.xpose.msra.mxu0 0.0
    %4677 = vmatprep.subr.mxu0 0.0
    %4678 = vmatpush2.xpose.msra.mxu0 0.0
    %4679 = vmatprep.subr.mxu0 0.0
    %4680 = vmatpush2.xpose.msra.mxu0 0.0
    %4681 = vmatprep.subr.mxu0 0.0
    %4682 = vmatpush2.xpose.msra.mxu0 0.0
    %4683 = vmatprep.subr.mxu0 0.0
    %4684 = vmatpush2.xpose.msra.mxu0 0.0
    %4685 = vmatprep.subr.mxu0 0.0
    %4686 = vmatpush2.xpose.msra.mxu0 0.0
    %4687 = vmatprep.subr.mxu0 0.0
    %4688 = vmatpush2.xpose.msra.mxu0 0.0
    %4689 = vmatprep.subr.mxu0 0.0
    %4690 = vmatpush2.xpose.msra.mxu0 0.0
    %4691 = vmatprep.subr.mxu0 0.0
    %4692 = vmatpush2.xpose.msra.mxu0 0.0
    %4693 = vmatprep.subr.mxu0 0.0
    %4694 = vmatpush2.xpose.msra.mxu0 0.0
    %4695 = vmatprep.subr.mxu0 0.0
    %4696 = vmatpush2.xpose.msra.mxu0 0.0
    %4697 = vmatprep.subr.mxu0 0.0
    %4698 = vmatpush2.xpose.msra.mxu0 0.0
    %4699 = vmatprep.subr.mxu0 0.0
    %4700 = vmatpush2.xpose.msra.mxu0 0.0
    %4701 = vmatprep.mubr.f32.mxu0 0.0
    %4702 = vmatmul.mubr.f32.gmra.mxu0 %v4632
    %v4703 = vpop.f32.mrf.mxu0
    %v4704 = vadd.f32 %v36, %v4703
    %v4705 = vpop.f32.mrf.mxu0
    %4706 = vdwg.mxu0
    %v4707 = vmul.f32 %v4172, 1.442695
    %v4708 = vpow.pop %v4707
    %v4709 = vmul.f32 %v4248, 1.442695
    %v4710 = vpow.pop %v4709
    %v4711 = vmul.f32 %v4324, 1.442695
    %v4712 = vpow.pop %v4711
    %v4713 = vmul.f32 %v4400, 1.442695
    %v4714 = vpow.pop %v4713
    %v4715 = vmul.f32 %v4476, 1.442695
    %v4716 = vpow.pop %v4715
    %v4717 = vmul.f32 %v4552, 1.442695
    %v4718 = vpow.pop %v4717
    %v4719 = vmul.f32 %v4628, 1.442695
    %v4720 = vpow.pop %v4719
    %v4721 = vmul.f32 %v4704, 1.442695
    %v4722 = vpow.pop %v4721
    %v4723 = vsel %vm1179, %v4708, 0.0
    %4724 = vadd.xlane.f32.xlu0 %v4723
    %v4725 = vpop.xlane.xlu0 %4724
    %v4726 = vsel %vm1179, %v4710, 0.0
    %4727 = vadd.xlane.f32.xlu0 %v4726
    %v4728 = vpop.xlane.xlu0 %4727
    %v4729 = vsel %vm1179, %v4712, 0.0
    %4730 = vadd.xlane.f32.xlu0 %v4729
    %v4731 = vpop.xlane.xlu0 %4730
    %v4732 = vsel %vm1179, %v4714, 0.0
    %4733 = vadd.xlane.f32.xlu0 %v4732
    %v4734 = vpop.xlane.xlu0 %4733
    %v4735 = vsel %vm1179, %v4716, 0.0
    %4736 = vadd.xlane.f32.xlu0 %v4735
    %v4737 = vpop.xlane.xlu0 %4736
    %v4738 = vsel %vm1179, %v4718, 0.0
    %4739 = vadd.xlane.f32.xlu0 %v4738
    %v4740 = vpop.xlane.xlu0 %4739
    %v4741 = vsel %vm1179, %v4720, 0.0
    %4742 = vadd.xlane.f32.xlu0 %v4741
    %v4743 = vpop.xlane.xlu0 %4742
    %v4744 = vsel %vm1179, %v4722, 0.0
    %4745 = vadd.xlane.f32.xlu0 %v4744
    %v4746 = vpop.xlane.xlu0 %4745
    %v4747 = vrcp.pop %v4725
    %v4748 = vrcp.pop %v4728
    %v4749 = vrcp.pop %v4731
    %v4750 = vrcp.pop %v4734
    %v4751 = vrcp.pop %v4737
    %v4752 = vrcp.pop %v4740
    %v4753 = vrcp.pop %v4743
    %v4754 = vrcp.pop %v4746
    %v4755 = vmul.f32 %v4708, %v4747
    %v4756 = vmul.f32 %v4710, %v4748
    %v4757 = vmul.f32 %v4712, %v4749
    %v4758 = vmul.f32 %v4714, %v4750
    %v4759 = vmul.f32 %v4716, %v4751
    %v4760 = vmul.f32 %v4718, %v4752
    %v4761 = vmul.f32 %v4720, %v4753
    %v4762 = vmul.f32 %v4722, %v4754
    %v4764 = vsel %vm1179, %v4755, 0
    %4766 = vmatprep.subr.mxu0 0.0
    %4767 = vmatpush1.msra.mxu0 0.0
    %4768 = vmatprep.subr.mxu0 0.0
    %4769 = vmatpush1.msra.mxu0 0.0
    %4770 = vmatprep.subr.mxu0 0.0
    %4771 = vmatpush1.msra.mxu0 0.0
    %4772 = vmatprep.subr.mxu0 0.0
    %4773 = vmatpush1.msra.mxu0 0.0
    %4774 = vmatprep.subr.mxu0 0.0
    %4775 = vmatpush1.msra.mxu0 0.0
    %4776 = vmatprep.subr.mxu0 0.0
    %4777 = vmatpush1.msra.mxu0 0.0
    %4778 = vmatprep.subr.mxu0 0.0
    %4779 = vmatpush1.msra.mxu0 0.0
    %4780 = vmatprep.subr.mxu0 0.0
    %4781 = vmatpush1.msra.mxu0 0.0
    %4782 = vmatprep.subr.mxu0 0.0
    %4783 = vmatpush1.msra.mxu0 0.0
    %4784 = vmatprep.subr.mxu0 0.0
    %4785 = vmatpush1.msra.mxu0 0.0
    %4786 = vmatprep.subr.mxu0 0.0
    %4787 = vmatpush1.msra.mxu0 0.0
    %4788 = vmatprep.subr.mxu0 0.0
    %4789 = vmatpush1.msra.mxu0 0.0
    %4790 = vmatprep.subr.mxu0 0.0
    %4791 = vmatpush1.msra.mxu0 0.0
    %4792 = vmatprep.subr.mxu0 0.0
    %4793 = vmatpush1.msra.mxu0 0.0
    %4794 = vmatprep.subr.mxu0 0.0
    %4795 = vmatpush1.msra.mxu0 0.0
    %4796 = vmatprep.subr.mxu0 0.0
    %4797 = vmatpush1.msra.mxu0 %v4027
    %4798 = vmatprep.subr.mxu0 0.0
    %4799 = vmatpush2.msra.mxu0 0.0
    %4800 = vmatprep.subr.mxu0 0.0
    %4801 = vmatpush2.msra.mxu0 0.0
    %4802 = vmatprep.subr.mxu0 0.0
    %4803 = vmatpush2.msra.mxu0 0.0
    %4804 = vmatprep.subr.mxu0 0.0
    %4805 = vmatpush2.msra.mxu0 0.0
    %4806 = vmatprep.subr.mxu0 0.0
    %4807 = vmatpush2.msra.mxu0 0.0
    %4808 = vmatprep.subr.mxu0 0.0
    %4809 = vmatpush2.msra.mxu0 0.0
    %4810 = vmatprep.subr.mxu0 0.0
    %4811 = vmatpush2.msra.mxu0 0.0
    %4812 = vmatprep.subr.mxu0 0.0
    %4813 = vmatpush2.msra.mxu0 0.0
    %4814 = vmatprep.subr.mxu0 0.0
    %4815 = vmatpush2.msra.mxu0 0.0
    %4816 = vmatprep.subr.mxu0 0.0
    %4817 = vmatpush2.msra.mxu0 0.0
    %4818 = vmatprep.subr.mxu0 0.0
    %4819 = vmatpush2.msra.mxu0 0.0
    %4820 = vmatprep.subr.mxu0 0.0
    %4821 = vmatpush2.msra.mxu0 0.0
    %4822 = vmatprep.subr.mxu0 0.0
    %4823 = vmatpush2.msra.mxu0 0.0
    %4824 = vmatprep.subr.mxu0 0.0
    %4825 = vmatpush2.msra.mxu0 0.0
    %4826 = vmatprep.subr.mxu0 0.0
    %4827 = vmatpush2.msra.mxu0 0.0
    %4828 = vmatprep.subr.mxu0 0.0
    %4829 = vmatpush2.msra.mxu0 0.0
    %4830 = vmatprep.mubr.f32.mxu0 0.0
    %4831 = vmatmul.mubr.f32.gmra.mxu0 %v4764
    %v4832 = vpop.f32.mrf.mxu0
    %v4833 = vadd.f32 0.0, %v4832
    %v4834 = vpop.f32.mrf.mxu0
    %4835 = vdwg.mxu0
    %v4837 = vsel %vm1179, %v4756, 0
    %4839 = vmatprep.subr.mxu0 0.0
    %4840 = vmatpush1.msra.mxu0 0.0
    %4841 = vmatprep.subr.mxu0 0.0
    %4842 = vmatpush1.msra.mxu0 0.0
    %4843 = vmatprep.subr.mxu0 0.0
    %4844 = vmatpush1.msra.mxu0 0.0
    %4845 = vmatprep.subr.mxu0 0.0
    %4846 = vmatpush1.msra.mxu0 0.0
    %4847 = vmatprep.subr.mxu0 0.0
    %4848 = vmatpush1.msra.mxu0 0.0
    %4849 = vmatprep.subr.mxu0 0.0
    %4850 = vmatpush1.msra.mxu0 0.0
    %4851 = vmatprep.subr.mxu0 0.0
    %4852 = vmatpush1.msra.mxu0 0.0
    %4853 = vmatprep.subr.mxu0 0.0
    %4854 = vmatpush1.msra.mxu0 0.0
    %4855 = vmatprep.subr.mxu0 0.0
    %4856 = vmatpush1.msra.mxu0 0.0
    %4857 = vmatprep.subr.mxu0 0.0
    %4858 = vmatpush1.msra.mxu0 0.0
    %4859 = vmatprep.subr.mxu0 0.0
    %4860 = vmatpush1.msra.mxu0 0.0
    %4861 = vmatprep.subr.mxu0 0.0
    %4862 = vmatpush1.msra.mxu0 0.0
    %4863 = vmatprep.subr.mxu0 0.0
    %4864 = vmatpush1.msra.mxu0 0.0
    %4865 = vmatprep.subr.mxu0 0.0
    %4866 = vmatpush1.msra.mxu0 0.0
    %4867 = vmatprep.subr.mxu0 0.0
    %4868 = vmatpush1.msra.mxu0 0.0
    %4869 = vmatprep.subr.mxu0 0.0
    %4870 = vmatpush1.msra.mxu0 %v4095
    %4871 = vmatprep.subr.mxu0 0.0
    %4872 = vmatpush2.msra.mxu0 0.0
    %4873 = vmatprep.subr.mxu0 0.0
    %4874 = vmatpush2.msra.mxu0 0.0
    %4875 = vmatprep.subr.mxu0 0.0
    %4876 = vmatpush2.msra.mxu0 0.0
    %4877 = vmatprep.subr.mxu0 0.0
    %4878 = vmatpush2.msra.mxu0 0.0
    %4879 = vmatprep.subr.mxu0 0.0
    %4880 = vmatpush2.msra.mxu0 0.0
    %4881 = vmatprep.subr.mxu0 0.0
    %4882 = vmatpush2.msra.mxu0 0.0
    %4883 = vmatprep.subr.mxu0 0.0
    %4884 = vmatpush2.msra.mxu0 0.0
    %4885 = vmatprep.subr.mxu0 0.0
    %4886 = vmatpush2.msra.mxu0 0.0
    %4887 = vmatprep.subr.mxu0 0.0
    %4888 = vmatpush2.msra.mxu0 0.0
    %4889 = vmatprep.subr.mxu0 0.0
    %4890 = vmatpush2.msra.mxu0 0.0
    %4891 = vmatprep.subr.mxu0 0.0
    %4892 = vmatpush2.msra.mxu0 0.0
    %4893 = vmatprep.subr.mxu0 0.0
    %4894 = vmatpush2.msra.mxu0 0.0
    %4895 = vmatprep.subr.mxu0 0.0
    %4896 = vmatpush2.msra.mxu0 0.0
    %4897 = vmatprep.subr.mxu0 0.0
    %4898 = vmatpush2.msra.mxu0 0.0
    %4899 = vmatprep.subr.mxu0 0.0
    %4900 = vmatpush2.msra.mxu0 0.0
    %4901 = vmatprep.subr.mxu0 0.0
    %4902 = vmatpush2.msra.mxu0 0.0
    %4903 = vmatprep.mubr.f32.mxu0 0.0
    %4904 = vmatmul.mubr.f32.gmra.mxu0 %v4837
    %v4905 = vpop.f32.mrf.mxu0
    %v4906 = vadd.f32 0.0, %v4905
    %v4907 = vpop.f32.mrf.mxu0
    %4908 = vdwg.mxu0
    %v4910 = vsel %vm1179, %v4757, 0
    %4912 = vmatprep.subr.mxu0 0.0
    %4913 = vmatpush1.msra.mxu0 0.0
    %4914 = vmatprep.subr.mxu0 0.0
    %4915 = vmatpush1.msra.mxu0 0.0
    %4916 = vmatprep.subr.mxu0 0.0
    %4917 = vmatpush1.msra.mxu0 0.0
    %4918 = vmatprep.subr.mxu0 0.0
    %4919 = vmatpush1.msra.mxu0 0.0
    %4920 = vmatprep.subr.mxu0 0.0
    %4921 = vmatpush1.msra.mxu0 0.0
    %4922 = vmatprep.subr.mxu0 0.0
    %4923 = vmatpush1.msra.mxu0 0.0
    %4924 = vmatprep.subr.mxu0 0.0
    %4925 = vmatpush1.msra.mxu0 0.0
    %4926 = vmatprep.subr.mxu0 0.0
    %4927 = vmatpush1.msra.mxu0 0.0
    %4928 = vmatprep.subr.mxu0 0.0
    %4929 = vmatpush1.msra.mxu0 0.0
    %4930 = vmatprep.subr.mxu0 0.0
    %4931 = vmatpush1.msra.mxu0 0.0
    %4932 = vmatprep.subr.mxu0 0.0
    %4933 = vmatpush1.msra.mxu0 0.0
    %4934 = vmatprep.subr.mxu0 0.0
    %4935 = vmatpush1.msra.mxu0 0.0
    %4936 = vmatprep.subr.mxu0 0.0
    %4937 = vmatpush1.msra.mxu0 0.0
    %4938 = vmatprep.subr.mxu0 0.0
    %4939 = vmatpush1.msra.mxu0 0.0
    %4940 = vmatprep.subr.mxu0 0.0
    %4941 = vmatpush1.msra.mxu0 0.0
    %4942 = vmatprep.subr.mxu0 0.0
    %4943 = vmatpush1.msra.mxu0 %v4028
    %4944 = vmatprep.subr.mxu0 0.0
    %4945 = vmatpush2.msra.mxu0 0.0
    %4946 = vmatprep.subr.mxu0 0.0
    %4947 = vmatpush2.msra.mxu0 0.0
    %4948 = vmatprep.subr.mxu0 0.0
    %4949 = vmatpush2.msra.mxu0 0.0
    %4950 = vmatprep.subr.mxu0 0.0
    %4951 = vmatpush2.msra.mxu0 0.0
    %4952 = vmatprep.subr.mxu0 0.0
    %4953 = vmatpush2.msra.mxu0 0.0
    %4954 = vmatprep.subr.mxu0 0.0
    %4955 = vmatpush2.msra.mxu0 0.0
    %4956 = vmatprep.subr.mxu0 0.0
    %4957 = vmatpush2.msra.mxu0 0.0
    %4958 = vmatprep.subr.mxu0 0.0
    %4959 = vmatpush2.msra.mxu0 0.0
    %4960 = vmatprep.subr.mxu0 0.0
    %4961 = vmatpush2.msra.mxu0 0.0
    %4962 = vmatprep.subr.mxu0 0.0
    %4963 = vmatpush2.msra.mxu0 0.0
    %4964 = vmatprep.subr.mxu0 0.0
    %4965 = vmatpush2.msra.mxu0 0.0
    %4966 = vmatprep.subr.mxu0 0.0
    %4967 = vmatpush2.msra.mxu0 0.0
    %4968 = vmatprep.subr.mxu0 0.0
    %4969 = vmatpush2.msra.mxu0 0.0
    %4970 = vmatprep.subr.mxu0 0.0
    %4971 = vmatpush2.msra.mxu0 0.0
    %4972 = vmatprep.subr.mxu0 0.0
    %4973 = vmatpush2.msra.mxu0 0.0
    %4974 = vmatprep.subr.mxu0 0.0
    %4975 = vmatpush2.msra.mxu0 0.0
    %4976 = vmatprep.mubr.f32.mxu0 0.0
    %4977 = vmatmul.mubr.f32.gmra.mxu0 %v4910
    %v4978 = vpop.f32.mrf.mxu0
    %v4979 = vadd.f32 0.0, %v4978
    %v4980 = vpop.f32.mrf.mxu0
    %4981 = vdwg.mxu0
    %v4983 = vsel %vm1179, %v4758, 0
    %4985 = vmatprep.subr.mxu0 0.0
    %4986 = vmatpush1.msra.mxu0 0.0
    %4987 = vmatprep.subr.mxu0 0.0
    %4988 = vmatpush1.msra.mxu0 0.0
    %4989 = vmatprep.subr.mxu0 0.0
    %4990 = vmatpush1.msra.mxu0 0.0
    %4991 = vmatprep.subr.mxu0 0.0
    %4992 = vmatpush1.msra.mxu0 0.0
    %4993 = vmatprep.subr.mxu0 0.0
    %4994 = vmatpush1.msra.mxu0 0.0
    %4995 = vmatprep.subr.mxu0 0.0
    %4996 = vmatpush1.msra.mxu0 0.0
    %4997 = vmatprep.subr.mxu0 0.0
    %4998 = vmatpush1.msra.mxu0 0.0
    %4999 = vmatprep.subr.mxu0 0.0
    %5000 = vmatpush1.msra.mxu0 0.0
    %5001 = vmatprep.subr.mxu0 0.0
    %5002 = vmatpush1.msra.mxu0 0.0
    %5003 = vmatprep.subr.mxu0 0.0
    %5004 = vmatpush1.msra.mxu0 0.0
    %5005 = vmatprep.subr.mxu0 0.0
    %5006 = vmatpush1.msra.mxu0 0.0
    %5007 = vmatprep.subr.mxu0 0.0
    %5008 = vmatpush1.msra.mxu0 0.0
    %5009 = vmatprep.subr.mxu0 0.0
    %5010 = vmatpush1.msra.mxu0 0.0
    %5011 = vmatprep.subr.mxu0 0.0
    %5012 = vmatpush1.msra.mxu0 0.0
    %5013 = vmatprep.subr.mxu0 0.0
    %5014 = vmatpush1.msra.mxu0 0.0
    %5015 = vmatprep.subr.mxu0 0.0
    %5016 = vmatpush1.msra.mxu0 %v4096
    %5017 = vmatprep.subr.mxu0 0.0
    %5018 = vmatpush2.msra.mxu0 0.0
    %5019 = vmatprep.subr.mxu0 0.0
    %5020 = vmatpush2.msra.mxu0 0.0
    %5021 = vmatprep.subr.mxu0 0.0
    %5022 = vmatpush2.msra.mxu0 0.0
    %5023 = vmatprep.subr.mxu0 0.0
    %5024 = vmatpush2.msra.mxu0 0.0
    %5025 = vmatprep.subr.mxu0 0.0
    %5026 = vmatpush2.msra.mxu0 0.0
    %5027 = vmatprep.subr.mxu0 0.0
    %5028 = vmatpush2.msra.mxu0 0.0
    %5029 = vmatprep.subr.mxu0 0.0
    %5030 = vmatpush2.msra.mxu0 0.0
    %5031 = vmatprep.subr.mxu0 0.0
    %5032 = vmatpush2.msra.mxu0 0.0
    %5033 = vmatprep.subr.mxu0 0.0
    %5034 = vmatpush2.msra.mxu0 0.0
    %5035 = vmatprep.subr.mxu0 0.0
    %5036 = vmatpush2.msra.mxu0 0.0
    %5037 = vmatprep.subr.mxu0 0.0
    %5038 = vmatpush2.msra.mxu0 0.0
    %5039 = vmatprep.subr.mxu0 0.0
    %5040 = vmatpush2.msra.mxu0 0.0
    %5041 = vmatprep.subr.mxu0 0.0
    %5042 = vmatpush2.msra.mxu0 0.0
    %5043 = vmatprep.subr.mxu0 0.0
    %5044 = vmatpush2.msra.mxu0 0.0
    %5045 = vmatprep.subr.mxu0 0.0
    %5046 = vmatpush2.msra.mxu0 0.0
    %5047 = vmatprep.subr.mxu0 0.0
    %5048 = vmatpush2.msra.mxu0 0.0
    %5049 = vmatprep.mubr.f32.mxu0 0.0
    %5050 = vmatmul.mubr.f32.gmra.mxu0 %v4983
    %v5051 = vpop.f32.mrf.mxu0
    %v5052 = vadd.f32 0.0, %v5051
    %v5053 = vpop.f32.mrf.mxu0
    %5054 = vdwg.mxu0
    %v5056 = vsel %vm1179, %v4759, 0
    %5058 = vmatprep.subr.mxu0 0.0
    %5059 = vmatpush1.msra.mxu0 0.0
    %5060 = vmatprep.subr.mxu0 0.0
    %5061 = vmatpush1.msra.mxu0 0.0
    %5062 = vmatprep.subr.mxu0 0.0
    %5063 = vmatpush1.msra.mxu0 0.0
    %5064 = vmatprep.subr.mxu0 0.0
    %5065 = vmatpush1.msra.mxu0 0.0
    %5066 = vmatprep.subr.mxu0 0.0
    %5067 = vmatpush1.msra.mxu0 0.0
    %5068 = vmatprep.subr.mxu0 0.0
    %5069 = vmatpush1.msra.mxu0 0.0
    %5070 = vmatprep.subr.mxu0 0.0
    %5071 = vmatpush1.msra.mxu0 0.0
    %5072 = vmatprep.subr.mxu0 0.0
    %5073 = vmatpush1.msra.mxu0 0.0
    %5074 = vmatprep.subr.mxu0 0.0
    %5075 = vmatpush1.msra.mxu0 0.0
    %5076 = vmatprep.subr.mxu0 0.0
    %5077 = vmatpush1.msra.mxu0 0.0
    %5078 = vmatprep.subr.mxu0 0.0
    %5079 = vmatpush1.msra.mxu0 0.0
    %5080 = vmatprep.subr.mxu0 0.0
    %5081 = vmatpush1.msra.mxu0 0.0
    %5082 = vmatprep.subr.mxu0 0.0
    %5083 = vmatpush1.msra.mxu0 0.0
    %5084 = vmatprep.subr.mxu0 0.0
    %5085 = vmatpush1.msra.mxu0 0.0
    %5086 = vmatprep.subr.mxu0 0.0
    %5087 = vmatpush1.msra.mxu0 0.0
    %5088 = vmatprep.subr.mxu0 0.0
    %5089 = vmatpush1.msra.mxu0 %v4029
    %5090 = vmatprep.subr.mxu0 0.0
    %5091 = vmatpush2.msra.mxu0 0.0
    %5092 = vmatprep.subr.mxu0 0.0
    %5093 = vmatpush2.msra.mxu0 0.0
    %5094 = vmatprep.subr.mxu0 0.0
    %5095 = vmatpush2.msra.mxu0 0.0
    %5096 = vmatprep.subr.mxu0 0.0
    %5097 = vmatpush2.msra.mxu0 0.0
    %5098 = vmatprep.subr.mxu0 0.0
    %5099 = vmatpush2.msra.mxu0 0.0
    %5100 = vmatprep.subr.mxu0 0.0
    %5101 = vmatpush2.msra.mxu0 0.0
    %5102 = vmatprep.subr.mxu0 0.0
    %5103 = vmatpush2.msra.mxu0 0.0
    %5104 = vmatprep.subr.mxu0 0.0
    %5105 = vmatpush2.msra.mxu0 0.0
    %5106 = vmatprep.subr.mxu0 0.0
    %5107 = vmatpush2.msra.mxu0 0.0
    %5108 = vmatprep.subr.mxu0 0.0
    %5109 = vmatpush2.msra.mxu0 0.0
    %5110 = vmatprep.subr.mxu0 0.0
    %5111 = vmatpush2.msra.mxu0 0.0
    %5112 = vmatprep.subr.mxu0 0.0
    %5113 = vmatpush2.msra.mxu0 0.0
    %5114 = vmatprep.subr.mxu0 0.0
    %5115 = vmatpush2.msra.mxu0 0.0
    %5116 = vmatprep.subr.mxu0 0.0
    %5117 = vmatpush2.msra.mxu0 0.0
    %5118 = vmatprep.subr.mxu0 0.0
    %5119 = vmatpush2.msra.mxu0 0.0
    %5120 = vmatprep.subr.mxu0 0.0
    %5121 = vmatpush2.msra.mxu0 0.0
    %5122 = vmatprep.mubr.f32.mxu0 0.0
    %5123 = vmatmul.mubr.f32.gmra.mxu0 %v5056
    %v5124 = vpop.f32.mrf.mxu0
    %v5125 = vadd.f32 0.0, %v5124
    %v5126 = vpop.f32.mrf.mxu0
    %5127 = vdwg.mxu0
    %v5129 = vsel %vm1179, %v4760, 0
    %5131 = vmatprep.subr.mxu0 0.0
    %5132 = vmatpush1.msra.mxu0 0.0
    %5133 = vmatprep.subr.mxu0 0.0
    %5134 = vmatpush1.msra.mxu0 0.0
    %5135 = vmatprep.subr.mxu0 0.0
    %5136 = vmatpush1.msra.mxu0 0.0
    %5137 = vmatprep.subr.mxu0 0.0
    %5138 = vmatpush1.msra.mxu0 0.0
    %5139 = vmatprep.subr.mxu0 0.0
    %5140 = vmatpush1.msra.mxu0 0.0
    %5141 = vmatprep.subr.mxu0 0.0
    %5142 = vmatpush1.msra.mxu0 0.0
    %5143 = vmatprep.subr.mxu0 0.0
    %5144 = vmatpush1.msra.mxu0 0.0
    %5145 = vmatprep.subr.mxu0 0.0
    %5146 = vmatpush1.msra.mxu0 0.0
    %5147 = vmatprep.subr.mxu0 0.0
    %5148 = vmatpush1.msra.mxu0 0.0
    %5149 = vmatprep.subr.mxu0 0.0
    %5150 = vmatpush1.msra.mxu0 0.0
    %5151 = vmatprep.subr.mxu0 0.0
    %5152 = vmatpush1.msra.mxu0 0.0
    %5153 = vmatprep.subr.mxu0 0.0
    %5154 = vmatpush1.msra.mxu0 0.0
    %5155 = vmatprep.subr.mxu0 0.0
    %5156 = vmatpush1.msra.mxu0 0.0
    %5157 = vmatprep.subr.mxu0 0.0
    %5158 = vmatpush1.msra.mxu0 0.0
    %5159 = vmatprep.subr.mxu0 0.0
    %5160 = vmatpush1.msra.mxu0 0.0
    %5161 = vmatprep.subr.mxu0 0.0
    %5162 = vmatpush1.msra.mxu0 %v4097
    %5163 = vmatprep.subr.mxu0 0.0
    %5164 = vmatpush2.msra.mxu0 0.0
    %5165 = vmatprep.subr.mxu0 0.0
    %5166 = vmatpush2.msra.mxu0 0.0
    %5167 = vmatprep.subr.mxu0 0.0
    %5168 = vmatpush2.msra.mxu0 0.0
    %5169 = vmatprep.subr.mxu0 0.0
    %5170 = vmatpush2.msra.mxu0 0.0
    %5171 = vmatprep.subr.mxu0 0.0
    %5172 = vmatpush2.msra.mxu0 0.0
    %5173 = vmatprep.subr.mxu0 0.0
    %5174 = vmatpush2.msra.mxu0 0.0
    %5175 = vmatprep.subr.mxu0 0.0
    %5176 = vmatpush2.msra.mxu0 0.0
    %5177 = vmatprep.subr.mxu0 0.0
    %5178 = vmatpush2.msra.mxu0 0.0
    %5179 = vmatprep.subr.mxu0 0.0
    %5180 = vmatpush2.msra.mxu0 0.0
    %5181 = vmatprep.subr.mxu0 0.0
    %5182 = vmatpush2.msra.mxu0 0.0
    %5183 = vmatprep.subr.mxu0 0.0
    %5184 = vmatpush2.msra.mxu0 0.0
    %5185 = vmatprep.subr.mxu0 0.0
    %5186 = vmatpush2.msra.mxu0 0.0
    %5187 = vmatprep.subr.mxu0 0.0
    %5188 = vmatpush2.msra.mxu0 0.0
    %5189 = vmatprep.subr.mxu0 0.0
    %5190 = vmatpush2.msra.mxu0 0.0
    %5191 = vmatprep.subr.mxu0 0.0
    %5192 = vmatpush2.msra.mxu0 0.0
    %5193 = vmatprep.subr.mxu0 0.0
    %5194 = vmatpush2.msra.mxu0 0.0
    %5195 = vmatprep.mubr.f32.mxu0 0.0
    %5196 = vmatmul.mubr.f32.gmra.mxu0 %v5129
    %v5197 = vpop.f32.mrf.mxu0
    %v5198 = vadd.f32 0.0, %v5197
    %v5199 = vpop.f32.mrf.mxu0
    %5200 = vdwg.mxu0
    %v5202 = vsel %vm1179, %v4761, 0
    %5204 = vmatprep.subr.mxu0 0.0
    %5205 = vmatpush1.msra.mxu0 0.0
    %5206 = vmatprep.subr.mxu0 0.0
    %5207 = vmatpush1.msra.mxu0 0.0
    %5208 = vmatprep.subr.mxu0 0.0
    %5209 = vmatpush1.msra.mxu0 0.0
    %5210 = vmatprep.subr.mxu0 0.0
    %5211 = vmatpush1.msra.mxu0 0.0
    %5212 = vmatprep.subr.mxu0 0.0
    %5213 = vmatpush1.msra.mxu0 0.0
    %5214 = vmatprep.subr.mxu0 0.0
    %5215 = vmatpush1.msra.mxu0 0.0
    %5216 = vmatprep.subr.mxu0 0.0
    %5217 = vmatpush1.msra.mxu0 0.0
    %5218 = vmatprep.subr.mxu0 0.0
    %5219 = vmatpush1.msra.mxu0 0.0
    %5220 = vmatprep.subr.mxu0 0.0
    %5221 = vmatpush1.msra.mxu0 0.0
    %5222 = vmatprep.subr.mxu0 0.0
    %5223 = vmatpush1.msra.mxu0 0.0
    %5224 = vmatprep.subr.mxu0 0.0
    %5225 = vmatpush1.msra.mxu0 0.0
    %5226 = vmatprep.subr.mxu0 0.0
    %5227 = vmatpush1.msra.mxu0 0.0
    %5228 = vmatprep.subr.mxu0 0.0
    %5229 = vmatpush1.msra.mxu0 0.0
    %5230 = vmatprep.subr.mxu0 0.0
    %5231 = vmatpush1.msra.mxu0 0.0
    %5232 = vmatprep.subr.mxu0 0.0
    %5233 = vmatpush1.msra.mxu0 0.0
    %5234 = vmatprep.subr.mxu0 0.0
    %5235 = vmatpush1.msra.mxu0 %v4030
    %5236 = vmatprep.subr.mxu0 0.0
    %5237 = vmatpush2.msra.mxu0 0.0
    %5238 = vmatprep.subr.mxu0 0.0
    %5239 = vmatpush2.msra.mxu0 0.0
    %5240 = vmatprep.subr.mxu0 0.0
    %5241 = vmatpush2.msra.mxu0 0.0
    %5242 = vmatprep.subr.mxu0 0.0
    %5243 = vmatpush2.msra.mxu0 0.0
    %5244 = vmatprep.subr.mxu0 0.0
    %5245 = vmatpush2.msra.mxu0 0.0
    %5246 = vmatprep.subr.mxu0 0.0
    %5247 = vmatpush2.msra.mxu0 0.0
    %5248 = vmatprep.subr.mxu0 0.0
    %5249 = vmatpush2.msra.mxu0 0.0
    %5250 = vmatprep.subr.mxu0 0.0
    %5251 = vmatpush2.msra.mxu0 0.0
    %5252 = vmatprep.subr.mxu0 0.0
    %5253 = vmatpush2.msra.mxu0 0.0
    %5254 = vmatprep.subr.mxu0 0.0
    %5255 = vmatpush2.msra.mxu0 0.0
    %5256 = vmatprep.subr.mxu0 0.0
    %5257 = vmatpush2.msra.mxu0 0.0
    %5258 = vmatprep.subr.mxu0 0.0
    %5259 = vmatpush2.msra.mxu0 0.0
    %5260 = vmatprep.subr.mxu0 0.0
    %5261 = vmatpush2.msra.mxu0 0.0
    %5262 = vmatprep.subr.mxu0 0.0
    %5263 = vmatpush2.msra.mxu0 0.0
    %5264 = vmatprep.subr.mxu0 0.0
    %5265 = vmatpush2.msra.mxu0 0.0
    %5266 = vmatprep.subr.mxu0 0.0
    %5267 = vmatpush2.msra.mxu0 0.0
    %5268 = vmatprep.mubr.f32.mxu0 0.0
    %5269 = vmatmul.mubr.f32.gmra.mxu0 %v5202
    %v5270 = vpop.f32.mrf.mxu0
    %v5271 = vadd.f32 0.0, %v5270
    %v5272 = vpop.f32.mrf.mxu0
    %5273 = vdwg.mxu0
    %v5275 = vsel %vm1179, %v4762, 0
    %5277 = vmatprep.subr.mxu0 0.0
    %5278 = vmatpush1.msra.mxu0 0.0
    %5279 = vmatprep.subr.mxu0 0.0
    %5280 = vmatpush1.msra.mxu0 0.0
    %5281 = vmatprep.subr.mxu0 0.0
    %5282 = vmatpush1.msra.mxu0 0.0
    %5283 = vmatprep.subr.mxu0 0.0
    %5284 = vmatpush1.msra.mxu0 0.0
    %5285 = vmatprep.subr.mxu0 0.0
    %5286 = vmatpush1.msra.mxu0 0.0
    %5287 = vmatprep.subr.mxu0 0.0
    %5288 = vmatpush1.msra.mxu0 0.0
    %5289 = vmatprep.subr.mxu0 0.0
    %5290 = vmatpush1.msra.mxu0 0.0
    %5291 = vmatprep.subr.mxu0 0.0
    %5292 = vmatpush1.msra.mxu0 0.0
    %5293 = vmatprep.subr.mxu0 0.0
    %5294 = vmatpush1.msra.mxu0 0.0
    %5295 = vmatprep.subr.mxu0 0.0
    %5296 = vmatpush1.msra.mxu0 0.0
    %5297 = vmatprep.subr.mxu0 0.0
    %5298 = vmatpush1.msra.mxu0 0.0
    %5299 = vmatprep.subr.mxu0 0.0
    %5300 = vmatpush1.msra.mxu0 0.0
    %5301 = vmatprep.subr.mxu0 0.0
    %5302 = vmatpush1.msra.mxu0 0.0
    %5303 = vmatprep.subr.mxu0 0.0
    %5304 = vmatpush1.msra.mxu0 0.0
    %5305 = vmatprep.subr.mxu0 0.0
    %5306 = vmatpush1.msra.mxu0 0.0
    %5307 = vmatprep.subr.mxu0 0.0
    %5308 = vmatpush1.msra.mxu0 %v4098
    %5309 = vmatprep.subr.mxu0 0.0
    %5310 = vmatpush2.msra.mxu0 0.0
    %5311 = vmatprep.subr.mxu0 0.0
    %5312 = vmatpush2.msra.mxu0 0.0
    %5313 = vmatprep.subr.mxu0 0.0
    %5314 = vmatpush2.msra.mxu0 0.0
    %5315 = vmatprep.subr.mxu0 0.0
    %5316 = vmatpush2.msra.mxu0 0.0
    %5317 = vmatprep.subr.mxu0 0.0
    %5318 = vmatpush2.msra.mxu0 0.0
    %5319 = vmatprep.subr.mxu0 0.0
    %5320 = vmatpush2.msra.mxu0 0.0
    %5321 = vmatprep.subr.mxu0 0.0
    %5322 = vmatpush2.msra.mxu0 0.0
    %5323 = vmatprep.subr.mxu0 0.0
    %5324 = vmatpush2.msra.mxu0 0.0
    %5325 = vmatprep.subr.mxu0 0.0
    %5326 = vmatpush2.msra.mxu0 0.0
    %5327 = vmatprep.subr.mxu0 0.0
    %5328 = vmatpush2.msra.mxu0 0.0
    %5329 = vmatprep.subr.mxu0 0.0
    %5330 = vmatpush2.msra.mxu0 0.0
    %5331 = vmatprep.subr.mxu0 0.0
    %5332 = vmatpush2.msra.mxu0 0.0
    %5333 = vmatprep.subr.mxu0 0.0
    %5334 = vmatpush2.msra.mxu0 0.0
    %5335 = vmatprep.subr.mxu0 0.0
    %5336 = vmatpush2.msra.mxu0 0.0
    %5337 = vmatprep.subr.mxu0 0.0
    %5338 = vmatpush2.msra.mxu0 0.0
    %5339 = vmatprep.subr.mxu0 0.0
    %5340 = vmatpush2.msra.mxu0 0.0
    %5341 = vmatprep.mubr.f32.mxu0 0.0
    %5342 = vmatmul.mubr.f32.gmra.mxu0 %v5275
    %v5343 = vpop.f32.mrf.mxu0
    %v5344 = vadd.f32 0.0, %v5343
    %v5345 = vpop.f32.mrf.mxu0
    %5346 = vdwg.mxu0
    %v5347 = vcombine.low %v4833, %v5125
    %v5348 = vcombine.high %v4833, %v5125
    %v5350 = vunpack.c.l.s4 1983009808
    %v5351 = vunpack.c.0.s8 %v5350
    %v5352 = vlaneseq
    %v5353 = vshrl.u32 %v5352, 7
    %v5354 = vsub.s32 %v5351, %v5353
    %v5355 = vrot.slane %v5347, %v5354
    %v5357 = vunpack.c.l.s4 1983009808
    %v5358 = vunpack.c.0.s8 %v5357
    %v5359 = vlaneseq
    %v5360 = vshrl.u32 %v5359, 7
    %v5361 = vsub.s32 %v5358, %v5360
    %v5362 = vrot.slane %v5348, %v5361
    %v5363 = vcombine.low %v4979, %v5271
    %v5364 = vcombine.high %v4979, %v5271
    %v5366 = vunpack.c.l.s4 1983009808
    %v5367 = vunpack.c.0.s8 %v5366
    %v5368 = vlaneseq
    %v5369 = vshrl.u32 %v5368, 7
    %v5370 = vsub.s32 %v5367, %v5369
    %v5371 = vrot.slane %v5363, %v5370
    %v5373 = vunpack.c.l.s4 1983009808
    %v5374 = vunpack.c.0.s8 %v5373
    %v5375 = vlaneseq
    %v5376 = vshrl.u32 %v5375, 7
    %v5377 = vsub.s32 %v5374, %v5376
    %v5378 = vrot.slane %v5364, %v5377
    %v5379 = vcombine.low %v5355, %v5371
    %v5380 = vcombine.high %v5355, %v5371
    %v5382 = vunpack.c.l.s4 1934713408
    %v5383 = vunpack.c.0.s8 %v5382
    %v5384 = vlaneseq
    %v5385 = vshrl.u32 %v5384, 7
    %v5386 = vsub.s32 %v5383, %v5385
    %v5387 = vrot.slane %v5379, %v5386
    %v5389 = vunpack.c.l.s4 1934713408
    %v5390 = vunpack.c.0.s8 %v5389
    %v5391 = vlaneseq
    %v5392 = vshrl.u32 %v5391, 7
    %v5393 = vsub.s32 %v5390, %v5392
    %v5394 = vrot.slane %v5380, %v5393
    %v5395 = vcombine.low %v5362, %v5378
    %v5396 = vcombine.high %v5362, %v5378
    %v5398 = vunpack.c.l.s4 1934713408
    %v5399 = vunpack.c.0.s8 %v5398
    %v5400 = vlaneseq
    %v5401 = vshrl.u32 %v5400, 7
    %v5402 = vsub.s32 %v5399, %v5401
    %v5403 = vrot.slane %v5395, %v5402
    %v5405 = vunpack.c.l.s4 1934713408
    %v5406 = vunpack.c.0.s8 %v5405
    %v5407 = vlaneseq
    %v5408 = vshrl.u32 %v5407, 7
    %v5409 = vsub.s32 %v5406, %v5408
    %v5410 = vrot.slane %v5396, %v5409
    %v5411 = vcombine.high %v5387, 0.0
    %v5412 = vcombine.high %v5394, 0.0
    %v5413 = vcombine.high %v5403, 0.0
    %v5414 = vcombine.high %v5410, 0.0
    %v5415 = vcombine.low %v4906, %v5198
    %v5416 = vcombine.high %v4906, %v5198
    %v5418 = vunpack.c.l.s4 1983009808
    %v5419 = vunpack.c.0.s8 %v5418
    %v5420 = vlaneseq
    %v5421 = vshrl.u32 %v5420, 7
    %v5422 = vsub.s32 %v5419, %v5421
    %v5423 = vrot.slane %v5415, %v5422
    %v5425 = vunpack.c.l.s4 1983009808
    %v5426 = vunpack.c.0.s8 %v5425
    %v5427 = vlaneseq
    %v5428 = vshrl.u32 %v5427, 7
    %v5429 = vsub.s32 %v5426, %v5428
    %v5430 = vrot.slane %v5416, %v5429
    %v5431 = vcombine.low %v5052, %v5344
    %v5432 = vcombine.high %v5052, %v5344
    %v5434 = vunpack.c.l.s4 1983009808
    %v5435 = vunpack.c.0.s8 %v5434
    %v5436 = vlaneseq
    %v5437 = vshrl.u32 %v5436, 7
    %v5438 = vsub.s32 %v5435, %v5437
    %v5439 = vrot.slane %v5431, %v5438
    %v5441 = vunpack.c.l.s4 1983009808
    %v5442 = vunpack.c.0.s8 %v5441
    %v5443 = vlaneseq
    %v5444 = vshrl.u32 %v5443, 7
    %v5445 = vsub.s32 %v5442, %v5444
    %v5446 = vrot.slane %v5432, %v5445
    %v5447 = vcombine.low %v5423, %v5439
    %v5448 = vcombine.high %v5423, %v5439
    %v5450 = vunpack.c.l.s4 1934713408
    %v5451 = vunpack.c.0.s8 %v5450
    %v5452 = vlaneseq
    %v5453 = vshrl.u32 %v5452, 7
    %v5454 = vsub.s32 %v5451, %v5453
    %v5455 = vrot.slane %v5447, %v5454
    %v5457 = vunpack.c.l.s4 1934713408
    %v5458 = vunpack.c.0.s8 %v5457
    %v5459 = vlaneseq
    %v5460 = vshrl.u32 %v5459, 7
    %v5461 = vsub.s32 %v5458, %v5460
    %v5462 = vrot.slane %v5448, %v5461
    %v5463 = vcombine.low %v5430, %v5446
    %v5464 = vcombine.high %v5430, %v5446
    %v5466 = vunpack.c.l.s4 1934713408
    %v5467 = vunpack.c.0.s8 %v5466
    %v5468 = vlaneseq
    %v5469 = vshrl.u32 %v5468, 7
    %v5470 = vsub.s32 %v5467, %v5469
    %v5471 = vrot.slane %v5463, %v5470
    %v5473 = vunpack.c.l.s4 1934713408
    %v5474 = vunpack.c.0.s8 %v5473
    %v5475 = vlaneseq
    %v5476 = vshrl.u32 %v5475, 7
    %v5477 = vsub.s32 %v5474, %v5476
    %v5478 = vrot.slane %v5464, %v5477
    %v5479 = vcombine.high %v5455, 0.0
    %v5480 = vcombine.high %v5462, 0.0
    %v5481 = vcombine.high %v5471, 0.0
    %v5482 = vcombine.high %v5478, 0.0
    %v5483 = vcombine.low %v5387, %v5394
    %v5485 = vunpack.c.l.s4 1983009808
    %v5486 = vunpack.c.0.s8 %v5485
    %v5487 = vlaneseq
    %v5488 = vshrl.u32 %v5487, 7
    %v5489 = vsub.s32 %v5486, %v5488
    %v5490 = vrot.slane %v5483, %v5489
    %v5491 = vcombine.low %v5411, %v5412
    %v5493 = vunpack.c.l.s4 1983009808
    %v5494 = vunpack.c.0.s8 %v5493
    %v5495 = vlaneseq
    %v5496 = vshrl.u32 %v5495, 7
    %v5497 = vsub.s32 %v5494, %v5496
    %v5498 = vrot.slane %v5491, %v5497
    %v5499 = vcombine.low %v5403, %v5410
    %v5501 = vunpack.c.l.s4 1983009808
    %v5502 = vunpack.c.0.s8 %v5501
    %v5503 = vlaneseq
    %v5504 = vshrl.u32 %v5503, 7
    %v5505 = vsub.s32 %v5502, %v5504
    %v5506 = vrot.slane %v5499, %v5505
    %v5507 = vcombine.low %v5413, %v5414
    %v5509 = vunpack.c.l.s4 1983009808
    %v5510 = vunpack.c.0.s8 %v5509
    %v5511 = vlaneseq
    %v5512 = vshrl.u32 %v5511, 7
    %v5513 = vsub.s32 %v5510, %v5512
    %v5514 = vrot.slane %v5507, %v5513
    %v5515 = vcombine.low %v5490, %v5498
    %v5516 = vcombine.high %v5490, %v5498
    %v5518 = vunpack.c.l.s4 1934713408
    %v5519 = vunpack.c.0.s8 %v5518
    %v5520 = vlaneseq
    %v5521 = vshrl.u32 %v5520, 7
    %v5522 = vsub.s32 %v5519, %v5521
    %v5523 = vrot.slane %v5515, %v5522
    %v5525 = vunpack.c.l.s4 1934713408
    %v5526 = vunpack.c.0.s8 %v5525
    %v5527 = vlaneseq
    %v5528 = vshrl.u32 %v5527, 7
    %v5529 = vsub.s32 %v5526, %v5528
    %v5530 = vrot.slane %v5516, %v5529
    %v5531 = vcombine.low %v5506, %v5514
    %v5532 = vcombine.high %v5506, %v5514
    %v5534 = vunpack.c.l.s4 1934713408
    %v5535 = vunpack.c.0.s8 %v5534
    %v5536 = vlaneseq
    %v5537 = vshrl.u32 %v5536, 7
    %v5538 = vsub.s32 %v5535, %v5537
    %v5539 = vrot.slane %v5531, %v5538
    %v5541 = vunpack.c.l.s4 1934713408
    %v5542 = vunpack.c.0.s8 %v5541
    %v5543 = vlaneseq
    %v5544 = vshrl.u32 %v5543, 7
    %v5545 = vsub.s32 %v5542, %v5544
    %v5546 = vrot.slane %v5532, %v5545
    %v5547 = vcombine.low %v5523, %v5539
    %v5548 = vcombine.high %v5523, %v5539
    %v5549 = vcombine.low %v5530, %v5546
    %v5550 = vcombine.high %v5530, %v5546
    %v5551 = vcombine.low %v5455, %v5462
    %v5553 = vunpack.c.l.s4 1983009808
    %v5554 = vunpack.c.0.s8 %v5553
    %v5555 = vlaneseq
    %v5556 = vshrl.u32 %v5555, 7
    %v5557 = vsub.s32 %v5554, %v5556
    %v5558 = vrot.slane %v5551, %v5557
    %v5559 = vcombine.low %v5479, %v5480
    %v5561 = vunpack.c.l.s4 1983009808
    %v5562 = vunpack.c.0.s8 %v5561
    %v5563 = vlaneseq
    %v5564 = vshrl.u32 %v5563, 7
    %v5565 = vsub.s32 %v5562, %v5564
    %v5566 = vrot.slane %v5559, %v5565
    %v5567 = vcombine.low %v5471, %v5478
    %v5569 = vunpack.c.l.s4 1983009808
    %v5570 = vunpack.c.0.s8 %v5569
    %v5571 = vlaneseq
    %v5572 = vshrl.u32 %v5571, 7
    %v5573 = vsub.s32 %v5570, %v5572
    %v5574 = vrot.slane %v5567, %v5573
    %v5575 = vcombine.low %v5481, %v5482
    %v5577 = vunpack.c.l.s4 1983009808
    %v5578 = vunpack.c.0.s8 %v5577
    %v5579 = vlaneseq
    %v5580 = vshrl.u32 %v5579, 7
    %v5581 = vsub.s32 %v5578, %v5580
    %v5582 = vrot.slane %v5575, %v5581
    %v5583 = vcombine.low %v5558, %v5566
    %v5584 = vcombine.high %v5558, %v5566
    %v5586 = vunpack.c.l.s4 1934713408
    %v5587 = vunpack.c.0.s8 %v5586
    %v5588 = vlaneseq
    %v5589 = vshrl.u32 %v5588, 7
    %v5590 = vsub.s32 %v5587, %v5589
    %v5591 = vrot.slane %v5583, %v5590
    %v5593 = vunpack.c.l.s4 1934713408
    %v5594 = vunpack.c.0.s8 %v5593
    %v5595 = vlaneseq
    %v5596 = vshrl.u32 %v5595, 7
    %v5597 = vsub.s32 %v5594, %v5596
    %v5598 = vrot.slane %v5584, %v5597
    %v5599 = vcombine.low %v5574, %v5582
    %v5600 = vcombine.high %v5574, %v5582
    %v5602 = vunpack.c.l.s4 1934713408
    %v5603 = vunpack.c.0.s8 %v5602
    %v5604 = vlaneseq
    %v5605 = vshrl.u32 %v5604, 7
    %v5606 = vsub.s32 %v5603, %v5605
    %v5607 = vrot.slane %v5599, %v5606
    %v5609 = vunpack.c.l.s4 1934713408
    %v5610 = vunpack.c.0.s8 %v5609
    %v5611 = vlaneseq
    %v5612 = vshrl.u32 %v5611, 7
    %v5613 = vsub.s32 %v5610, %v5612
    %v5614 = vrot.slane %v5600, %v5613
    %v5615 = vcombine.low %v5591, %v5607
    %v5616 = vcombine.high %v5591, %v5607
    %v5617 = vcombine.low %v5598, %v5614
    %v5618 = vcombine.high %v5598, %v5614
    %5621 = vrot.lane.b32.xlu0 %v5548, 8
    %v5622 = vpop.permute.xlu0 %5621
    %5623 = vrot.lane.b32.xlu0 %v5616, 8
    %v5624 = vpop.permute.xlu0 %5623
    %5629 = vrot.lane.b32.xlu0 %v5549, 16
    %v5630 = vpop.permute.xlu0 %5629
    %5631 = vrot.lane.b32.xlu0 %v5617, 16
    %v5632 = vpop.permute.xlu0 %5631
    %5637 = vrot.lane.b32.xlu0 %v5550, 24
    %v5638 = vpop.permute.xlu0 %5637
    %5639 = vrot.lane.b32.xlu0 %v5618, 24
    %v5640 = vpop.permute.xlu0 %5639
    %v5643 = vsel %vm1179, %v5547, %v5622
    %v5644 = vsel %vm1179, %v5615, %v5624
    %v5645 = vsel %vm2726, %v5643, %v5630
    %v5646 = vsel %vm2726, %v5644, %v5632
    %v5647 = vsel %vm2729, %v5645, %v5638
    %v5648 = vsel %vm2729, %v5646, %v5640
    %s5649 = scalar_lea.vmem %s5, 32
    %v5650 = vld [vmem:[%s5649] sm:$0xff]
    %v5651 = vld [vmem:[%s5649 + $0x8] sm:$0xff]
    %v5652 = vld [vmem:[%s5649 + $0x10] sm:$0xff]
    %v5653 = vld [vmem:[%s5649 + $0x18] sm:$0xff]
    %v5655 = vsel %vm150, %v5647, 0
    %v5658 = vsel %vm150, %v5648, 0
    %5660 = vmatprep.subr.mxu0 0.0
    %5661 = vmatpush1.msra.mxu0 0.0
    %5662 = vmatprep.subr.mxu0 0.0
    %5663 = vmatpush1.msra.mxu0 0.0
    %5664 = vmatprep.subr.mxu0 0.0
    %5665 = vmatpush1.msra.mxu0 0.0
    %5666 = vmatprep.subr.mxu0 0.0
    %5667 = vmatpush1.msra.mxu0 0.0
    %5668 = vmatprep.subr.mxu0 0.0
    %5669 = vmatpush1.msra.mxu0 0.0
    %5670 = vmatprep.subr.mxu0 0.0
    %5671 = vmatpush1.msra.mxu0 0.0
    %5672 = vmatprep.subr.mxu0 0.0
    %5673 = vmatpush1.msra.mxu0 0.0
    %5674 = vmatprep.subr.mxu0 0.0
    %5675 = vmatpush1.msra.mxu0 0.0
    %5676 = vmatprep.subr.mxu0 0.0
    %5677 = vmatpush1.msra.mxu0 0.0
    %5678 = vmatprep.subr.mxu0 0.0
    %5679 = vmatpush1.msra.mxu0 0.0
    %5680 = vmatprep.subr.mxu0 0.0
    %5681 = vmatpush1.msra.mxu0 0.0
    %5682 = vmatprep.subr.mxu0 0.0
    %5683 = vmatpush1.msra.mxu0 0.0
    %5684 = vmatprep.subr.mxu0 0.0
    %5685 = vmatpush1.msra.mxu0 %v5653
    %5686 = vmatprep.subr.mxu0 0.0
    %5687 = vmatpush1.msra.mxu0 %v5652
    %5688 = vmatprep.subr.mxu0 0.0
    %5689 = vmatpush1.msra.mxu0 %v5651
    %5690 = vmatprep.subr.mxu0 0.0
    %5691 = vmatpush1.msra.mxu0 %v5650
    %5692 = vmatprep.subr.mxu0 0.0
    %5693 = vmatpush2.msra.mxu0 0.0
    %5694 = vmatprep.subr.mxu0 0.0
    %5695 = vmatpush2.msra.mxu0 0.0
    %5696 = vmatprep.subr.mxu0 0.0
    %5697 = vmatpush2.msra.mxu0 0.0
    %5698 = vmatprep.subr.mxu0 0.0
    %5699 = vmatpush2.msra.mxu0 0.0
    %5700 = vmatprep.subr.mxu0 0.0
    %5701 = vmatpush2.msra.mxu0 0.0
    %5702 = vmatprep.subr.mxu0 0.0
    %5703 = vmatpush2.msra.mxu0 0.0
    %5704 = vmatprep.subr.mxu0 0.0
    %5705 = vmatpush2.msra.mxu0 0.0
    %5706 = vmatprep.subr.mxu0 0.0
    %5707 = vmatpush2.msra.mxu0 0.0
    %5708 = vmatprep.subr.mxu0 0.0
    %5709 = vmatpush2.msra.mxu0 0.0
    %5710 = vmatprep.subr.mxu0 0.0
    %5711 = vmatpush2.msra.mxu0 0.0
    %5712 = vmatprep.subr.mxu0 0.0
    %5713 = vmatpush2.msra.mxu0 0.0
    %5714 = vmatprep.subr.mxu0 0.0
    %5715 = vmatpush2.msra.mxu0 0.0
    %5716 = vmatprep.subr.mxu0 0.0
    %5717 = vmatpush2.msra.mxu0 0.0
    %5718 = vmatprep.subr.mxu0 0.0
    %5719 = vmatpush2.msra.mxu0 0.0
    %5720 = vmatprep.subr.mxu0 0.0
    %5721 = vmatpush2.msra.mxu0 0.0
    %5722 = vmatprep.subr.mxu0 0.0
    %5723 = vmatpush2.msra.mxu0 0.0
    %5724 = vmatprep.mubr.f32.mxu0 0.0
    %5725 = vmatmul.mubr.f32.gmra.mxu0 %v5655
    %v5726 = vpop.f32.mrf.mxu0
    %v5727 = vadd.f32 0.0, %v5726
    %v5728 = vpop.f32.mrf.mxu0
    %5729 = vmatprep.mubr.f32.mxu0 0.0
    %5730 = vmatmul.mubr.f32.gmra.mxu0 %v5658
    %v5731 = vpop.f32.mrf.mxu0
    %v5732 = vadd.f32 0.0, %v5731
    %v5733 = vpop.f32.mrf.mxu0
    %5734 = vdwg.mxu0
    %v5735 = vadd.f32 %v3067, %v5727
    %v5736 = vadd.f32 %v3068, %v5732
    %v5737 = vlaneseq
    %v5738 = vshrl.u32 %v5737, 7
    %v5739 = vsub.s32 4, %v5738
    %v5740 = vrot.slane %v3070, %v5739
    %v5741 = vadd.f32 %v5735, %v5740
    %v5742 = vadd.f32 %v5736, %v5740
    %v5743 = vsel %vm150, %v5741, 0.0
    %5744 = vadd.xlane.f32.xlu0 %v5743
    %v5745 = vpop.xlane.xlu0 %5744
    %v5746 = vsel %vm150, %v5742, 0.0
    %5747 = vadd.xlane.f32.xlu0 %v5746
    %v5748 = vpop.xlane.xlu0 %5747
    %v5749 = vmul.f32 %v5745, %v157
    %v5750 = vmul.f32 %v5748, %v157
    %v5751 = vsub.f32 %v5741, %v5749
    %v5752 = vsub.f32 %v5742, %v5750
    %v5753 = vmul.f32 %v5751, %v5751
    %v5754 = vmul.f32 %v5752, %v5752
    %v5755 = vsel %vm150, %v5753, 0.0
    %5756 = vadd.xlane.f32.xlu0 %v5755
    %v5757 = vpop.xlane.xlu0 %5756
    %v5758 = vsel %vm150, %v5754, 0.0
    %5759 = vadd.xlane.f32.xlu0 %v5758
    %v5760 = vpop.xlane.xlu0 %5759
    %v5761 = vmul.f32 %v5757, %v157
    %v5762 = vmul.f32 %v5760, %v157
    %v5763 = vadd.f32 %v5761, 1e-06
    %v5764 = vadd.f32 %v5762, 1e-06
    %v5765 = vrsqrt.pop %v5763
    %v5766 = vrsqrt.pop %v5764
    %v5767 = vmul.f32 %v5751, %v5765
    %v5768 = vmul.f32 %v5752, %v5766
    %v5769 = vlaneseq
    %v5770 = vshrl.u32 %v5769, 7
    %v5771 = vsub.s32 2, %v5770
    %v5772 = vrot.slane %v3070, %v5771
    %v5773 = vmul.f32 %v5767, %v5772
    %v5774 = vmul.f32 %v5768, %v5772
    %v5775 = vlaneseq
    %v5776 = vshrl.u32 %v5775, 7
    %v5777 = vsub.s32 3, %v5776
    %v5778 = vrot.slane %v3070, %v5777
    %v5779 = vadd.f32 %v5773, %v5778
    %v5780 = vadd.f32 %v5774, %v5778
    %s5781 = scalar_lea.vmem %s6, 32
    %v5782 = vld [vmem:[%s5781] sm:$0xff]
    %v5783 = vld [vmem:[%s5781 + $0x8] sm:$0xff]
    %v5784 = vld [vmem:[%s5781 + $0x10] sm:$0xff]
    %v5785 = vld [vmem:[%s5781 + $0x18] sm:$0xff]
    %v5786 = vlaneseq
    %v5787 = vshrl.u32 %v5786, 7
    %v5788 = vsub.s32 6, %v5787
    %v5789 = vrot.slane %v3070, %v5788
    %v5791 = vsel %vm150, %v5779, 0
    %v5794 = vsel %vm150, %v5780, 0
    %5796 = vmatprep.subr.mxu0 0.0
    %5797 = vmatpush1.msra.mxu0 0.0
    %5798 = vmatprep.subr.mxu0 0.0
    %5799 = vmatpush1.msra.mxu0 0.0
    %5800 = vmatprep.subr.mxu0 0.0
    %5801 = vmatpush1.msra.mxu0 0.0
    %5802 = vmatprep.subr.mxu0 0.0
    %5803 = vmatpush1.msra.mxu0 0.0
    %5804 = vmatprep.subr.mxu0 0.0
    %5805 = vmatpush1.msra.mxu0 0.0
    %5806 = vmatprep.subr.mxu0 0.0
    %5807 = vmatpush1.msra.mxu0 0.0
    %5808 = vmatprep.subr.mxu0 0.0
    %5809 = vmatpush1.msra.mxu0 0.0
    %5810 = vmatprep.subr.mxu0 0.0
    %5811 = vmatpush1.msra.mxu0 0.0
    %5812 = vmatprep.subr.mxu0 0.0
    %5813 = vmatpush1.msra.mxu0 0.0
    %5814 = vmatprep.subr.mxu0 0.0
    %5815 = vmatpush1.msra.mxu0 0.0
    %5816 = vmatprep.subr.mxu0 0.0
    %5817 = vmatpush1.msra.mxu0 0.0
    %5818 = vmatprep.subr.mxu0 0.0
    %5819 = vmatpush1.msra.mxu0 0.0
    %5820 = vmatprep.subr.mxu0 0.0
    %5821 = vmatpush1.msra.mxu0 %v5785
    %5822 = vmatprep.subr.mxu0 0.0
    %5823 = vmatpush1.msra.mxu0 %v5784
    %5824 = vmatprep.subr.mxu0 0.0
    %5825 = vmatpush1.msra.mxu0 %v5783
    %5826 = vmatprep.subr.mxu0 0.0
    %5827 = vmatpush1.msra.mxu0 %v5782
    %5828 = vmatprep.subr.mxu0 0.0
    %5829 = vmatpush2.msra.mxu0 0.0
    %5830 = vmatprep.subr.mxu0 0.0
    %5831 = vmatpush2.msra.mxu0 0.0
    %5832 = vmatprep.subr.mxu0 0.0
    %5833 = vmatpush2.msra.mxu0 0.0
    %5834 = vmatprep.subr.mxu0 0.0
    %5835 = vmatpush2.msra.mxu0 0.0
    %5836 = vmatprep.subr.mxu0 0.0
    %5837 = vmatpush2.msra.mxu0 0.0
    %5838 = vmatprep.subr.mxu0 0.0
    %5839 = vmatpush2.msra.mxu0 0.0
    %5840 = vmatprep.subr.mxu0 0.0
    %5841 = vmatpush2.msra.mxu0 0.0
    %5842 = vmatprep.subr.mxu0 0.0
    %5843 = vmatpush2.msra.mxu0 0.0
    %5844 = vmatprep.subr.mxu0 0.0
    %5845 = vmatpush2.msra.mxu0 0.0
    %5846 = vmatprep.subr.mxu0 0.0
    %5847 = vmatpush2.msra.mxu0 0.0
    %5848 = vmatprep.subr.mxu0 0.0
    %5849 = vmatpush2.msra.mxu0 0.0
    %5850 = vmatprep.subr.mxu0 0.0
    %5851 = vmatpush2.msra.mxu0 0.0
    %5852 = vmatprep.subr.mxu0 0.0
    %5853 = vmatpush2.msra.mxu0 0.0
    %5854 = vmatprep.subr.mxu0 0.0
    %5855 = vmatpush2.msra.mxu0 0.0
    %5856 = vmatprep.subr.mxu0 0.0
    %5857 = vmatpush2.msra.mxu0 0.0
    %5858 = vmatprep.subr.mxu0 0.0
    %5859 = vmatpush2.msra.mxu0 0.0
    %5860 = vmatprep.mubr.f32.mxu0 0.0
    %5861 = vmatmul.mubr.f32.gmra.mxu0 %v5791
    %v5862 = vpop.f32.mrf.mxu0
    %v5863 = vadd.f32 %v5789, %v5862
    %v5864 = vpop.f32.mrf.mxu0
    %5865 = vmatprep.mubr.f32.mxu0 0.0
    %5866 = vmatmul.mubr.f32.gmra.mxu0 %v5794
    %v5867 = vpop.f32.mrf.mxu0
    %v5868 = vadd.f32 %v5789, %v5867
    %v5869 = vpop.f32.mrf.mxu0
    %5870 = vdwg.mxu0
    %v5871 = vmul.f32 %v5863, %v5863
    %v5872 = vmul.f32 %v5868, %v5868
    %v5873 = vmul.f32 %v5863, %v5871
    %v5874 = vmul.f32 %v5868, %v5872
    %v5875 = vmul.f32 %v5873, 0.044715
    %v5876 = vmul.f32 %v5874, 0.044715
    %v5877 = vadd.f32 %v5863, %v5875
    %v5878 = vadd.f32 %v5868, %v5876
    %v5879 = vmul.f32 %v5877, 0.7978846
    %v5880 = vmul.f32 %v5878, 0.7978846
    %v5881 = vtanh.pop %v5879
    %v5882 = vtanh.pop %v5880
    %v5883 = vadd.f32 %v5881, 1.0
    %v5884 = vadd.f32 %v5882, 1.0
    %v5885 = vmul.f32 %v5883, 0.5
    %v5886 = vmul.f32 %v5884, 0.5
    %v5887 = vmul.f32 %v5863, %v5885
    %v5888 = vmul.f32 %v5868, %v5886
    %s5889 = scalar_lea.vmem %s7, 128
    %v5890 = vld [vmem:[%s5889] sm:$0xff]
    %v5891 = vld [vmem:[%s5889 + $0x8] sm:$0xff]
    %v5892 = vld [vmem:[%s5889 + $0x10] sm:$0xff]
    %v5893 = vld [vmem:[%s5889 + $0x18] sm:$0xff]
    %v5894 = vld [vmem:[%s5889 + $0x20] sm:$0xff]
    %v5895 = vld [vmem:[%s5889 + $0x28] sm:$0xff]
    %v5896 = vld [vmem:[%s5889 + $0x30] sm:$0xff]
    %v5897 = vld [vmem:[%s5889 + $0x38] sm:$0xff]
    %v5898 = vld [vmem:[%s5889 + $0x40] sm:$0xff]
    %v5899 = vld [vmem:[%s5889 + $0x48] sm:$0xff]
    %v5900 = vld [vmem:[%s5889 + $0x50] sm:$0xff]
    %v5901 = vld [vmem:[%s5889 + $0x58] sm:$0xff]
    %v5902 = vld [vmem:[%s5889 + $0x60] sm:$0xff]
    %v5903 = vld [vmem:[%s5889 + $0x68] sm:$0xff]
    %v5904 = vld [vmem:[%s5889 + $0x70] sm:$0xff]
    %v5905 = vld [vmem:[%s5889 + $0x78] sm:$0xff]
    %5906 = vmatprep.subr.mxu0 0.0
    %5907 = vmatpush1.msra.mxu0 %v5905
    %5908 = vmatprep.subr.mxu0 0.0
    %5909 = vmatpush1.msra.mxu0 %v5904
    %5910 = vmatprep.subr.mxu0 0.0
    %5911 = vmatpush1.msra.mxu0 %v5903
    %5912 = vmatprep.subr.mxu0 0.0
    %5913 = vmatpush1.msra.mxu0 %v5902
    %5914 = vmatprep.subr.mxu0 0.0
    %5915 = vmatpush1.msra.mxu0 %v5901
    %5916 = vmatprep.subr.mxu0 0.0
    %5917 = vmatpush1.msra.mxu0 %v5900
    %5918 = vmatprep.subr.mxu0 0.0
    %5919 = vmatpush1.msra.mxu0 %v5899
    %5920 = vmatprep.subr.mxu0 0.0
    %5921 = vmatpush1.msra.mxu0 %v5898
    %5922 = vmatprep.subr.mxu0 0.0
    %5923 = vmatpush1.msra.mxu0 %v5897
    %5924 = vmatprep.subr.mxu0 0.0
    %5925 = vmatpush1.msra.mxu0 %v5896
    %5926 = vmatprep.subr.mxu0 0.0
    %5927 = vmatpush1.msra.mxu0 %v5895
    %5928 = vmatprep.subr.mxu0 0.0
    %5929 = vmatpush1.msra.mxu0 %v5894
    %5930 = vmatprep.subr.mxu0 0.0
    %5931 = vmatpush1.msra.mxu0 %v5893
    %5932 = vmatprep.subr.mxu0 0.0
    %5933 = vmatpush1.msra.mxu0 %v5892
    %5934 = vmatprep.subr.mxu0 0.0
    %5935 = vmatpush1.msra.mxu0 %v5891
    %5936 = vmatprep.subr.mxu0 0.0
    %5937 = vmatpush1.msra.mxu0 %v5890
    %5938 = vmatprep.subr.mxu0 0.0
    %5939 = vmatpush2.msra.mxu0 0.0
    %5940 = vmatprep.subr.mxu0 0.0
    %5941 = vmatpush2.msra.mxu0 0.0
    %5942 = vmatprep.subr.mxu0 0.0
    %5943 = vmatpush2.msra.mxu0 0.0
    %5944 = vmatprep.subr.mxu0 0.0
    %5945 = vmatpush2.msra.mxu0 0.0
    %5946 = vmatprep.subr.mxu0 0.0
    %5947 = vmatpush2.msra.mxu0 0.0
    %5948 = vmatprep.subr.mxu0 0.0
    %5949 = vmatpush2.msra.mxu0 0.0
    %5950 = vmatprep.subr.mxu0 0.0
    %5951 = vmatpush2.msra.mxu0 0.0
    %5952 = vmatprep.subr.mxu0 0.0
    %5953 = vmatpush2.msra.mxu0 0.0
    %5954 = vmatprep.subr.mxu0 0.0
    %5955 = vmatpush2.msra.mxu0 0.0
    %5956 = vmatprep.subr.mxu0 0.0
    %5957 = vmatpush2.msra.mxu0 0.0
    %5958 = vmatprep.subr.mxu0 0.0
    %5959 = vmatpush2.msra.mxu0 0.0
    %5960 = vmatprep.subr.mxu0 0.0
    %5961 = vmatpush2.msra.mxu0 0.0
    %5962 = vmatprep.subr.mxu0 0.0
    %5963 = vmatpush2.msra.mxu0 0.0
    %5964 = vmatprep.subr.mxu0 0.0
    %5965 = vmatpush2.msra.mxu0 0.0
    %5966 = vmatprep.subr.mxu0 0.0
    %5967 = vmatpush2.msra.mxu0 0.0
    %5968 = vmatprep.subr.mxu0 0.0
    %5969 = vmatpush2.msra.mxu0 0.0
    %5970 = vmatprep.mubr.f32.mxu0 0.0
    %5971 = vmatmul.mubr.f32.gmra.mxu0 %v5887
    %v5972 = vpop.f32.mrf.mxu0
    %v5973 = vadd.f32 0.0, %v5972
    %v5974 = vpop.f32.mrf.mxu0
    %5975 = vmatprep.mubr.f32.mxu0 0.0
    %5976 = vmatmul.mubr.f32.gmra.mxu0 %v5888
    %v5977 = vpop.f32.mrf.mxu0
    %v5978 = vadd.f32 0.0, %v5977
    %v5979 = vpop.f32.mrf.mxu0
    %5980 = vdwg.mxu0
    %v5981 = vadd.f32 %v5741, %v5973
    %v5982 = vadd.f32 %v5742, %v5978
    %v5983 = vlaneseq
    %v5984 = vshrl.u32 %v5983, 7
    %v5985 = vsub.s32 5, %v5984
    %v5986 = vrot.slane %v3070, %v5985
    %v5987 = vadd.f32 %v5981, %v5986
    %v5988 = vadd.f32 %v5982, %v5986
    %v5989 = vld [vmem:[%s2] sm:$0x3]
    %v5992 = vrot.slane %v5988, 7
    %vm5993 = vcmask 1041409
    %v5994 = vsel %vm5993, %v5992, %v5987
    %vm5996 = vcmask 254976
    %v5997 = vsel %vm5996, %v5994, 0.0
    %5998 = vadd.xlane.f32.xlu0 %v5997
    %v5999 = vpop.xlane.xlu0 %5998
    %v6000 = vmul.f32 %v5999, %v157
    %v6002 = vrot.slane %v6000, 1
    %v6005 = vsub.f32 %v5987, %v6000
    %v6006 = vsub.f32 %v5988, %v6002
    %v6007 = vmul.f32 %v6005, %v6005
    %v6008 = vmul.f32 %v6006, %v6006
    %v6011 = vrot.slane %v6008, 7
    %v6012 = vsel %vm5993, %v6011, %v6007
    %v6014 = vsel %vm5996, %v6012, 0.0
    %6015 = vadd.xlane.f32.xlu0 %v6014
    %v6016 = vpop.xlane.xlu0 %6015
    %v6017 = vmul.f32 %v6016, %v157
    %v6018 = vadd.f32 %v6017, 1e-06
    %v6019 = vrsqrt.pop %v6018
    %v6021 = vrot.slane %v6019, 1
    %v6024 = vmul.f32 %v6005, %v6019
    %v6025 = vmul.f32 %v6006, %v6021
    %v6026 = vlaneseq
    %v6027 = vshrl.u32 %v6026, 7
    %v6028 = vsub.s32 0, %v6027
    %v6029 = vrot.slane %v5989, %v6028
    %v6030 = vmul.f32 %v6024, %v6029
    %v6031 = vmul.f32 %v6025, %v6029
    %v6032 = vlaneseq
    %v6033 = vshrl.u32 %v6032, 7
    %v6034 = vsub.s32 1, %v6033
    %v6035 = vrot.slane %v5989, %v6034
    %v6036 = vadd.f32 %v6030, %v6035
    %v6037 = vadd.f32 %v6031, %v6035
    %v6040 = vrot.slane %v6037, 7
    %v6041 = vsel %vm5993, %v6040, %v6036
    %6043 = vst.msk [vmem:[#allocation2] sm:$0x3] %vm5996, %v6041
    // Predicated region
    $region38: #{vit_forward.1} parent=1 // pred_check
      _
    $region39: #{vit_forward.1} parent=1 // pred_check_branch
      %6045 = sbr.rel (0) target = $region41
    $region40: #{vit_forward.1} parent=1 // pred_region
      %s6047 = ssub.s32 32, 32
      %6048 = vsyncadd [#allocation3], %s6047
      %s6050 = sshll.u32 [#allocation2], 4
      %s6051 = int_to_ptr.vmem [resolvable:$true] %s6050
      %6053 = dma.vmem_to_hbm [thread:$0]  %s6051, 32, %s9, [#allocation3]
    $region41: #{vit_forward.1} parent=1 // pred_fallthru
      _
    // Predicated region
    $region42: #{vit_forward.1} parent=1 // pred_check
      _
    $region43: #{vit_forward.1} parent=1 // pred_check_branch
      %6055 = sbr.rel (0) target = $region45
    $region44: #{vit_forward.1} parent=1 // pred_region
      %6056 = dma.done [#allocation3], 32
    $region45: #{vit_forward.1} parent=1 // pred_fallthru
      _
    %6057 = vsyncpa [#allocation3], 1

</llo_original>
